<compile_context>
chip_gen: v7x
topology: tpu7x:2x2x1
jax: 0.10.0
libtpu: 0.0.40
codegen_flags: <defaults>
</compile_context>

<pallas_src>
import numpy as np
import jax
import jax.numpy as jnp
from jax import lax
from jax.experimental import pallas as pl
from jax.experimental.pallas import tpu as pltpu


_LANE_CHUNK = 128  # contraction width of the MXU lane-interleave matmuls


def _sel_mats(cw):
    """0/1 selection matrices: x @ s0 puts x[j] on lane 2j, y @ s1 puts y[j]
    on lane 2j+1, so (x @ s0 + y @ s1) is the lane interleave of (x, y)."""
    row = lax.broadcasted_iota(jnp.int32, (cw, 2 * cw), 0)
    col = lax.broadcasted_iota(jnp.int32, (cw, 2 * cw), 1)
    s0 = (col == 2 * row).astype(jnp.float32)
    s1 = (col == 2 * row + 1).astype(jnp.float32)
    return s0, s1


def _haar_sfb2d_kernel(yl_ref, yh_ref, out_ref):
    """
    yl_ref : (tb, th, W)      LL rows
    yh_ref : (tb, 3, th, W)   LH, HL, HH rows
    out_ref: (tb, th, 4W)     row-pair output: lanes [0, 2W) hold output row
                              2i, lanes [2W, 4W) hold output row 2i+1, so the
                              (N, C, 2H, 2W) view is a free XLA reshape.
    """
    f32 = jnp.float32
    tb, th, W = yl_ref.shape
    dt = out_ref.dtype

    cw_main = min(W, _LANE_CHUNK)
    mats = {cw_main: _sel_mats(cw_main)}   # built once per grid step

    for bi in range(tb):                   # static unroll (tb <= 8)
        ll = yl_ref[bi, :, :].astype(f32)
        lh = yh_ref[bi, 0, :, :].astype(f32)
        hl = yh_ref[bi, 1, :, :].astype(f32)
        hh = yh_ref[bi, 2, :, :].astype(f32)

        # db1 synthesis taps are (1/sqrt(2), +-1/sqrt(2)); two separable
        # passes collapse to a per-pixel butterfly with overall scale 0.5.
        a = ll + lh
        b = ll - lh
        c = hl + hh
        d = hl - hh
        ee = 0.5 * (a + c)   # y[2i  , 2j  ]
        eo = 0.5 * (a - c)   # y[2i  , 2j+1]
        oe = 0.5 * (b + d)   # y[2i+1, 2j  ]
        oo = 0.5 * (b - d)   # y[2i+1, 2j+1]

        # Column (lane) interleave on the otherwise-idle MXU, 128 lanes at a
        # time so flops/elem stay O(128) regardless of W.
        w0 = 0
        while w0 < W:
            cw = min(cw_main, W - w0)
            if cw not in mats:
                mats[cw] = _sel_mats(cw)
            s0, s1 = mats[cw]
            sl = slice(w0, w0 + cw)
            even = (jnp.dot(ee[:, sl], s0, preferred_element_type=f32)
                    + jnp.dot(eo[:, sl], s1, preferred_element_type=f32))
            odd = (jnp.dot(oe[:, sl], s0, preferred_element_type=f32)
                   + jnp.dot(oo[:, sl], s1, preferred_element_type=f32))
            out_ref[bi, :, 2 * w0:2 * (w0 + cw)] = even.astype(dt)
            out_ref[bi, :, 2 * W + 2 * w0:2 * W + 2 * (w0 + cw)] = odd.astype(dt)
            w0 += cw
    # TODO(synk): for bf16 I/O the lane interleave could instead pack even/odd
    # columns into u32 with pltpu.bitcast (plain 32-bit stores, zero MXU work).


_VMEM_LIMIT = None


def _vmem_limit_bytes():
    """Scoped-VMEM limit derived from the actual part (64 MiB on v7x,
    128 MiB on v5e/v6e), with a safe fallback."""
    global _VMEM_LIMIT
    if _VMEM_LIMIT is None:
        try:
            cap = int(pltpu.get_tpu_info().vmem_capacity_bytes)
        except Exception:
            cap = 64 * 1024 * 1024
        _VMEM_LIMIT = max(32 * 1024 * 1024,
                          min(int(cap * 3 // 4), 96 * 1024 * 1024))
    return _VMEM_LIMIT


def _pick_tiles(B, H, W, in_item, out_item):
    """Choose (tb, th): ~3 MiB of I/O per grid step (=> ~6 MiB double-buffered
    VMEM), th a multiple of 8 (or full H), and >=8 grid steps when the problem
    is big enough, so the pipeline overlaps and both v7x cores get work."""
    bytes_per_row = 4 * W * in_item + 4 * W * out_item   # per (b, h) row
    target = 3 * 1024 * 1024
    rows = max(1, target // bytes_per_row)               # (b, h) rows per step
    if rows >= H:
        th = H
        tb = max(1, min(rows // H, B))
        if B >= 16:
            tb = max(1, min(tb, B // 8))                 # keep >=8 B-steps
        tb = min(tb, 8)                                  # bound kernel unroll
    else:
        tb = 1
        th = min(H, max(8, (rows // 8) * 8))
        while th > 8 and B * ((H + th - 1) // th) < 8:
            th = max(8, ((th // 2) // 8) * 8)
    return tb, th
    # TODO(synk): for "huge B, tiny H*W" workloads (beyond tb=8) a flattened
    # (B, HW) layout with larger B-blocks would amortise grid-step overhead
    # better; not needed for realistic image-pyramid shapes.


@jax.jit
def _haar_sfb2d_level(ll, h):
    """One inverse level: SFB2D.apply(ll, h) for the db1/Haar wavelet."""
    N, C, H, W = ll.shape
    B = N * C
    out_dtype = jnp.promote_types(ll.dtype, h.dtype)
    in_item = max(jnp.dtype(ll.dtype).itemsize, jnp.dtype(h.dtype).itemsize)
    out_item = jnp.dtype(out_dtype).itemsize
    tb, th = _pick_tiles(B, H, W, in_item, out_item)

    yl3 = ll.reshape(B, H, W)       # free reshape (contiguous)
    yh4 = h.reshape(B, 3, H, W)     # free reshape (contiguous)

    grid = (pl.cdiv(B, tb), pl.cdiv(H, th))
    flops = 12 * B * H * W + 16 * B * H * W * min(W, _LANE_CHUNK)
    bytes_accessed = 4 * B * H * W * (in_item + out_item)

    out = pl.pallas_call(
        _haar_sfb2d_kernel,
        out_shape=jax.ShapeDtypeStruct((B, H, 4 * W), out_dtype),
        grid=grid,
        in_specs=[
            pl.BlockSpec((tb, th, W), lambda bi, hi: (bi, hi, 0)),
            pl.BlockSpec((tb, 3, th, W), lambda bi, hi: (bi, 0, hi, 0)),
        ],
        out_specs=pl.BlockSpec((tb, th, 4 * W), lambda bi, hi: (bi, hi, 0)),
        compiler_params=pltpu.CompilerParams(
            dimension_semantics=("parallel", "parallel"),
            vmem_limit_bytes=_vmem_limit_bytes(),
        ),
        cost_estimate=pl.CostEstimate(
            flops=int(flops),
            transcendentals=0,
            bytes_accessed=int(bytes_accessed)),
    )(yl3, yh4)

    # (B, H, 4W) -> (N, C, 2H, 2W): each 4W row already holds the interleaved
    # pair [row 2i | row 2i+1], so this is a pure row-major reinterpretation
    # (free reshape, no copy).
    return out.reshape(N, C, 2 * H, 2 * W)


class DWT2DInversePallas:
    """JAX/Pallas port of DWT2DInverse(wave='db1') (inverse 2-D DWT, Haar)."""

    def __init__(self, wave="db1"):
        if wave not in ("db1", "haar"):
            # TODO(synk): only the 2-tap db1/Haar synthesis filters are baked
            # into the fused kernel; longer pywt wavelets need the general
            # periodized conv_transpose path.
            raise NotImplementedError("DWT2DInversePallas only supports wave='db1'")

    def __call__(self, coeffs):
        yl, yh = coeffs
        ll = yl
        for h in yh[::-1]:
            if h is None:
                h = jnp.zeros(
                    (ll.shape[0], ll.shape[1], 3, ll.shape[-2], ll.shape[-1]),
                    dtype=ll.dtype)
            # match the torch module: trim ll if one larger than h
            if ll.shape[-2] > h.shape[-2]:
                ll = ll[..., :-1, :]
            if ll.shape[-1] > h.shape[-1]:
                ll = ll[..., :-1]
            ll = _haar_sfb2d_level(ll, h)
        return ll


# ----------------------------------------------------------------------------
# Pure-numpy reference reproducing the PyTorch sfb1d / SFB2D / forward-loop
# semantics (general L code path; exercised here at L=2).
# ----------------------------------------------------------------------------
def _ref_sfb1d(lo, hi, g0, g1, axis):
    lo = np.moveaxis(np.asarray(lo, np.float64), axis, -1)
    hi = np.moveaxis(np.asarray(hi, np.float64), axis, -1)
    g0 = np.asarray(g0, np.float64).ravel()
    g1 = np.asarray(g1, np.float64).ravel()
    L = g0.size
    n_in = lo.shape[-1]
    N = 2 * n_in
    y = np.zeros(lo.shape[:-1] + (N + L - 2,))
    for n in range(n_in):
        for k in range(L):
            y[..., 2 * n + k] += g0[k] * lo[..., n] + g1[k] * hi[..., n]
    if L > 2:
        y[..., :L - 2] += y[..., N:N + L - 2]
    y = y[..., :N]
    y = np.roll(y, 1 - L // 2, axis=-1)
    return np.moveaxis(y, -1, axis)


def _ref_sfb2d(ll, highs, g0, g1):
    lh, hl, hh = highs[:, :, 0], highs[:, :, 1], highs[:, :, 2]
    lo = _ref_sfb1d(ll, lh, g0, g1, axis=2)
    hi = _ref_sfb1d(hl, hh, g0, g1, axis=2)
    return _ref_sfb1d(lo, hi, g0, g1, axis=3)


def _ref_inverse(yl, yh, g0, g1):
    ll = np.asarray(yl, np.float64)
    for h in yh[::-1]:
        if h is None:
            h = np.zeros((ll.shape[0], ll.shape[1], 3, ll.shape[-2], ll.shape[-1]))
        if ll.shape[-2] > h.shape[-2]:
            ll = ll[..., :-1, :]
        if ll.shape[-1] > h.shape[-1]:
            ll = ll[..., :-1]
        ll = _ref_sfb2d(ll, np.asarray(h, np.float64), g0, g1)
    return ll


if __name__ == "__main__":
    key = jax.random.PRNGKey(0)
    k1, k2, k3 = jax.random.split(key, 3)
    N, C = 2, 4
    # Two-level coefficient pyramid: yl is the coarsest LL, yh[0] the finest.
    yl = jax.random.normal(k1, (N, C, 4, 4), dtype=jnp.float32)
    yh = [
        jax.random.normal(k2, (N, C, 3, 8, 8), dtype=jnp.float32),
        jax.random.normal(k3, (N, C, 3, 4, 4), dtype=jnp.float32),
    ]

    model = DWT2DInversePallas(wave="db1")
    y = model((yl, yh))
    y = jax.block_until_ready(y)
    assert y.shape == (N, C, 16, 16), y.shape

    # Validate against a numpy reference of the torch module's math.
    inv_sqrt2 = 1.0 / np.sqrt(2.0)
    g0 = np.array([inv_sqrt2, inv_sqrt2])    # pywt db1 rec_lo
    g1 = np.array([inv_sqrt2, -inv_sqrt2])   # pywt db1 rec_hi
    y_ref = _ref_inverse(np.asarray(yl), [np.asarray(h) for h in yh], g0, g1)
    np.testing.assert_allclose(np.asarray(y), y_ref, rtol=1e-5, atol=1e-5)

    print("KERNEL_OK")
</pallas_src>

<mosaic_0001>
module attributes {stable_mosaic.version = 11 : i64} {
  func.func @_haar_sfb2d_kernel(%arg0: i32, %arg1: i32, %arg2: memref<8x4x4xf32, #tpu.memory_space<vmem>>, %arg3: memref<8x3x4x4xf32, #tpu.memory_space<vmem>>, %arg4: memref<8x4x16xf32, #tpu.memory_space<vmem>>) attributes {dimension_semantics = [#tpu.dimension_semantics<parallel>, #tpu.dimension_semantics<parallel>], iteration_bounds = array<i64: 1, 1>, scalar_prefetch = 0 : i64, scratch_operands = 0 : i64, tpu.core_type = #tpu.core_type<tc>, window_params = [{transform_indices = @transform_0, window_bounds = array<i64: 8, 4, 4>}, {transform_indices = @transform_1, window_bounds = array<i64: 8, 3, 4, 4>}, {transform_indices = @transform_2, window_bounds = array<i64: 8, 4, 16>}]} {
    %0 = tpu.iota {dimensions = array<i32: 0>} : vector<4x8xi32>
    %1 = tpu.iota {dimensions = array<i32: 1>} : vector<4x8xi32>
    %c2_i32 = arith.constant 2 : i32
    %2 = vector.broadcast %c2_i32 : i32 to vector<4x8xi32>
    %3 = arith.muli %2, %0 : vector<4x8xi32>
    %4 = arith.cmpi eq, %1, %3 : vector<4x8xi32>
    %5 = arith.extui %4 : vector<4x8xi1> to vector<4x8xi32>
    %6 = arith.sitofp %5 : vector<4x8xi32> to vector<4x8xf32>
    %c2_i32_0 = arith.constant 2 : i32
    %7 = vector.broadcast %c2_i32_0 : i32 to vector<4x8xi32>
    %8 = arith.muli %7, %0 : vector<4x8xi32>
    %c1_i32 = arith.constant 1 : i32
    %9 = vector.broadcast %c1_i32 : i32 to vector<4x8xi32>
    %10 = arith.addi %8, %9 : vector<4x8xi32>
    %11 = arith.cmpi eq, %1, %10 : vector<4x8xi32>
    %12 = arith.extui %11 : vector<4x8xi1> to vector<4x8xi32>
    %13 = arith.sitofp %12 : vector<4x8xi32> to vector<4x8xf32>
    %c0 = arith.constant 0 : index
    %c0_1 = arith.constant 0 : index
    %c0_2 = arith.constant 0 : index
    %14 = vector.load %arg2[%c0, %c0_1, %c0_2] : memref<8x4x4xf32, #tpu.memory_space<vmem>>, vector<1x4x4xf32>
    %15 = vector.shape_cast %14 : vector<1x4x4xf32> to vector<4x4xf32>
    %c0_3 = arith.constant 0 : index
    %c0_4 = arith.constant 0 : index
    %c0_5 = arith.constant 0 : index
    %c0_6 = arith.constant 0 : index
    %16 = vector.load %arg3[%c0_3, %c0_4, %c0_5, %c0_6] : memref<8x3x4x4xf32, #tpu.memory_space<vmem>>, vector<1x1x4x4xf32>
    %17 = vector.shape_cast %16 : vector<1x1x4x4xf32> to vector<4x4xf32>
    %c0_7 = arith.constant 0 : index
    %c1 = arith.constant 1 : index
    %c0_8 = arith.constant 0 : index
    %c0_9 = arith.constant 0 : index
    %18 = vector.load %arg3[%c0_7, %c1, %c0_8, %c0_9] : memref<8x3x4x4xf32, #tpu.memory_space<vmem>>, vector<1x1x4x4xf32>
    %19 = vector.shape_cast %18 : vector<1x1x4x4xf32> to vector<4x4xf32>
    %c0_10 = arith.constant 0 : index
    %c2 = arith.constant 2 : index
    %c0_11 = arith.constant 0 : index
    %c0_12 = arith.constant 0 : index
    %20 = vector.load %arg3[%c0_10, %c2, %c0_11, %c0_12] : memref<8x3x4x4xf32, #tpu.memory_space<vmem>>, vector<1x1x4x4xf32>
    %21 = vector.shape_cast %20 : vector<1x1x4x4xf32> to vector<4x4xf32>
    %22 = arith.addf %15, %17 : vector<4x4xf32>
    %23 = arith.subf %15, %17 : vector<4x4xf32>
    %24 = arith.addf %19, %21 : vector<4x4xf32>
    %25 = arith.subf %19, %21 : vector<4x4xf32>
    %26 = arith.addf %22, %24 : vector<4x4xf32>
    %cst = arith.constant 5.000000e-01 : f32
    %27 = vector.broadcast %cst : f32 to vector<4x4xf32>
    %28 = arith.mulf %27, %26 : vector<4x4xf32>
    %29 = arith.subf %22, %24 : vector<4x4xf32>
    %cst_13 = arith.constant 5.000000e-01 : f32
    %30 = vector.broadcast %cst_13 : f32 to vector<4x4xf32>
    %31 = arith.mulf %30, %29 : vector<4x4xf32>
    %32 = arith.addf %23, %25 : vector<4x4xf32>
    %cst_14 = arith.constant 5.000000e-01 : f32
    %33 = vector.broadcast %cst_14 : f32 to vector<4x4xf32>
    %34 = arith.mulf %33, %32 : vector<4x4xf32>
    %35 = arith.subf %23, %25 : vector<4x4xf32>
    %cst_15 = arith.constant 5.000000e-01 : f32
    %36 = vector.broadcast %cst_15 : f32 to vector<4x4xf32>
    %37 = arith.mulf %36, %35 : vector<4x4xf32>
    %cst_16 = arith.constant dense<0.000000e+00> : vector<4x8xf32>
    %38 = tpu.matmul %28, %6, %cst_16 {dimension_numbers = #tpu.dot_dimension_numbers<[1], [0], [0], [1], [0, 0, 1, 1], [], []>} : vector<4x4xf32>, vector<4x8xf32>, vector<4x8xf32> -> vector<4x8xf32>
    %cst_17 = arith.constant dense<0.000000e+00> : vector<4x8xf32>
    %39 = tpu.matmul %31, %13, %cst_17 {dimension_numbers = #tpu.dot_dimension_numbers<[1], [0], [0], [1], [0, 0, 1, 1], [], []>} : vector<4x4xf32>, vector<4x8xf32>, vector<4x8xf32> -> vector<4x8xf32>
    %40 = arith.addf %38, %39 : vector<4x8xf32>
    %cst_18 = arith.constant dense<0.000000e+00> : vector<4x8xf32>
    %41 = tpu.matmul %34, %6, %cst_18 {dimension_numbers = #tpu.dot_dimension_numbers<[1], [0], [0], [1], [0, 0, 1, 1], [], []>} : vector<4x4xf32>, vector<4x8xf32>, vector<4x8xf32> -> vector<4x8xf32>
    %cst_19 = arith.constant dense<0.000000e+00> : vector<4x8xf32>
    %42 = tpu.matmul %37, %13, %cst_19 {dimension_numbers = #tpu.dot_dimension_numbers<[1], [0], [0], [1], [0, 0, 1, 1], [], []>} : vector<4x4xf32>, vector<4x8xf32>, vector<4x8xf32> -> vector<4x8xf32>
    %43 = arith.addf %41, %42 : vector<4x8xf32>
    %c0_20 = arith.constant 0 : index
    %c0_21 = arith.constant 0 : index
    %c0_22 = arith.constant 0 : index
    %44 = vector.load %arg4[%c0_20, %c0_21, %c0_22] : memref<8x4x16xf32, #tpu.memory_space<vmem>>, vector<1x4x8xf32>
    %45 = vector.shape_cast %44 : vector<1x4x8xf32> to vector<4x8xf32>
    %46 = vector.shape_cast %40 : vector<4x8xf32> to vector<1x4x8xf32>
    tpu.vector_store %arg4[%c0_20, %c0_21, %c0_22], %46 {strides = array<i32>} : memref<8x4x16xf32, #tpu.memory_space<vmem>>, vector<1x4x8xf32>,
    %c0_23 = arith.constant 0 : index
    %c0_24 = arith.constant 0 : index
    %c8 = arith.constant 8 : index
    %47 = vector.load %arg4[%c0_23, %c0_24, %c8] : memref<8x4x16xf32, #tpu.memory_space<vmem>>, vector<1x4x8xf32>
    %48 = vector.shape_cast %47 : vector<1x4x8xf32> to vector<4x8xf32>
    %49 = vector.shape_cast %43 : vector<4x8xf32> to vector<1x4x8xf32>
    tpu.vector_store %arg4[%c0_23, %c0_24, %c8], %49 {strides = array<i32>} : memref<8x4x16xf32, #tpu.memory_space<vmem>>, vector<1x4x8xf32>,
    %c1_25 = arith.constant 1 : index
    %c0_26 = arith.constant 0 : index
    %c0_27 = arith.constant 0 : index
    %50 = vector.load %arg2[%c1_25, %c0_26, %c0_27] : memref<8x4x4xf32, #tpu.memory_space<vmem>>, vector<1x4x4xf32>
    %51 = vector.shape_cast %50 : vector<1x4x4xf32> to vector<4x4xf32>
    %c1_28 = arith.constant 1 : index
    %c0_29 = arith.constant 0 : index
    %c0_30 = arith.constant 0 : index
    %c0_31 = arith.constant 0 : index
    %52 = vector.load %arg3[%c1_28, %c0_29, %c0_30, %c0_31] : memref<8x3x4x4xf32, #tpu.memory_space<vmem>>, vector<1x1x4x4xf32>
    %53 = vector.shape_cast %52 : vector<1x1x4x4xf32> to vector<4x4xf32>
    %c1_32 = arith.constant 1 : index
    %c1_33 = arith.constant 1 : index
    %c0_34 = arith.constant 0 : index
    %c0_35 = arith.constant 0 : index
    %54 = vector.load %arg3[%c1_32, %c1_33, %c0_34, %c0_35] : memref<8x3x4x4xf32, #tpu.memory_space<vmem>>, vector<1x1x4x4xf32>
    %55 = vector.shape_cast %54 : vector<1x1x4x4xf32> to vector<4x4xf32>
    %c1_36 = arith.constant 1 : index
    %c2_37 = arith.constant 2 : index
    %c0_38 = arith.constant 0 : index
    %c0_39 = arith.constant 0 : index
    %56 = vector.load %arg3[%c1_36, %c2_37, %c0_38, %c0_39] : memref<8x3x4x4xf32, #tpu.memory_space<vmem>>, vector<1x1x4x4xf32>
    %57 = vector.shape_cast %56 : vector<1x1x4x4xf32> to vector<4x4xf32>
    %58 = arith.addf %51, %53 : vector<4x4xf32>
    %59 = arith.subf %51, %53 : vector<4x4xf32>
    %60 = arith.addf %55, %57 : vector<4x4xf32>
    %61 = arith.subf %55, %57 : vector<4x4xf32>
    %62 = arith.addf %58, %60 : vector<4x4xf32>
    %cst_40 = arith.constant 5.000000e-01 : f32
    %63 = vector.broadcast %cst_40 : f32 to vector<4x4xf32>
    %64 = arith.mulf %63, %62 : vector<4x4xf32>
    %65 = arith.subf %58, %60 : vector<4x4xf32>
    %cst_41 = arith.constant 5.000000e-01 : f32
    %66 = vector.broadcast %cst_41 : f32 to vector<4x4xf32>
    %67 = arith.mulf %66, %65 : vector<4x4xf32>
    %68 = arith.addf %59, %61 : vector<4x4xf32>
    %cst_42 = arith.constant 5.000000e-01 : f32
    %69 = vector.broadcast %cst_42 : f32 to vector<4x4xf32>
    %70 = arith.mulf %69, %68 : vector<4x4xf32>
    %71 = arith.subf %59, %61 : vector<4x4xf32>
    %cst_43 = arith.constant 5.000000e-01 : f32
    %72 = vector.broadcast %cst_43 : f32 to vector<4x4xf32>
    %73 = arith.mulf %72, %71 : vector<4x4xf32>
    %cst_44 = arith.constant dense<0.000000e+00> : vector<4x8xf32>
    %74 = tpu.matmul %64, %6, %cst_44 {dimension_numbers = #tpu.dot_dimension_numbers<[1], [0], [0], [1], [0, 0, 1, 1], [], []>} : vector<4x4xf32>, vector<4x8xf32>, vector<4x8xf32> -> vector<4x8xf32>
    %cst_45 = arith.constant dense<0.000000e+00> : vector<4x8xf32>
    %75 = tpu.matmul %67, %13, %cst_45 {dimension_numbers = #tpu.dot_dimension_numbers<[1], [0], [0], [1], [0, 0, 1, 1], [], []>} : vector<4x4xf32>, vector<4x8xf32>, vector<4x8xf32> -> vector<4x8xf32>
    %76 = arith.addf %74, %75 : vector<4x8xf32>
    %cst_46 = arith.constant dense<0.000000e+00> : vector<4x8xf32>
    %77 = tpu.matmul %70, %6, %cst_46 {dimension_numbers = #tpu.dot_dimension_numbers<[1], [0], [0], [1], [0, 0, 1, 1], [], []>} : vector<4x4xf32>, vector<4x8xf32>, vector<4x8xf32> -> vector<4x8xf32>
    %cst_47 = arith.constant dense<0.000000e+00> : vector<4x8xf32>
    %78 = tpu.matmul %73, %13, %cst_47 {dimension_numbers = #tpu.dot_dimension_numbers<[1], [0], [0], [1], [0, 0, 1, 1], [], []>} : vector<4x4xf32>, vector<4x8xf32>, vector<4x8xf32> -> vector<4x8xf32>
    %79 = arith.addf %77, %78 : vector<4x8xf32>
    %c1_48 = arith.constant 1 : index
    %c0_49 = arith.constant 0 : index
    %c0_50 = arith.constant 0 : index
    %80 = vector.load %arg4[%c1_48, %c0_49, %c0_50] : memref<8x4x16xf32, #tpu.memory_space<vmem>>, vector<1x4x8xf32>
    %81 = vector.shape_cast %80 : vector<1x4x8xf32> to vector<4x8xf32>
    %82 = vector.shape_cast %76 : vector<4x8xf32> to vector<1x4x8xf32>
    tpu.vector_store %arg4[%c1_48, %c0_49, %c0_50], %82 {strides = array<i32>} : memref<8x4x16xf32, #tpu.memory_space<vmem>>, vector<1x4x8xf32>,
    %c1_51 = arith.constant 1 : index
    %c0_52 = arith.constant 0 : index
    %c8_53 = arith.constant 8 : index
    %83 = vector.load %arg4[%c1_51, %c0_52, %c8_53] : memref<8x4x16xf32, #tpu.memory_space<vmem>>, vector<1x4x8xf32>
    %84 = vector.shape_cast %83 : vector<1x4x8xf32> to vector<4x8xf32>
    %85 = vector.shape_cast %79 : vector<4x8xf32> to vector<1x4x8xf32>
    tpu.vector_store %arg4[%c1_51, %c0_52, %c8_53], %85 {strides = array<i32>} : memref<8x4x16xf32, #tpu.memory_space<vmem>>, vector<1x4x8xf32>,
    %c2_54 = arith.constant 2 : index
    %c0_55 = arith.constant 0 : index
    %c0_56 = arith.constant 0 : index
    %86 = vector.load %arg2[%c2_54, %c0_55, %c0_56] : memref<8x4x4xf32, #tpu.memory_space<vmem>>, vector<1x4x4xf32>
    %87 = vector.shape_cast %86 : vector<1x4x4xf32> to vector<4x4xf32>
    %c2_57 = arith.constant 2 : index
    %c0_58 = arith.constant 0 : index
    %c0_59 = arith.constant 0 : index
    %c0_60 = arith.constant 0 : index
    %88 = vector.load %arg3[%c2_57, %c0_58, %c0_59, %c0_60] : memref<8x3x4x4xf32, #tpu.memory_space<vmem>>, vector<1x1x4x4xf32>
    %89 = vector.shape_cast %88 : vector<1x1x4x4xf32> to vector<4x4xf32>
    %c2_61 = arith.constant 2 : index
    %c1_62 = arith.constant 1 : index
    %c0_63 = arith.constant 0 : index
    %c0_64 = arith.constant 0 : index
    %90 = vector.load %arg3[%c2_61, %c1_62, %c0_63, %c0_64] : memref<8x3x4x4xf32, #tpu.memory_space<vmem>>, vector<1x1x4x4xf32>
    %91 = vector.shape_cast %90 : vector<1x1x4x4xf32> to vector<4x4xf32>
    %c2_65 = arith.constant 2 : index
    %c2_66 = arith.constant 2 : index
    %c0_67 = arith.constant 0 : index
    %c0_68 = arith.constant 0 : index
    %92 = vector.load %arg3[%c2_65, %c2_66, %c0_67, %c0_68] : memref<8x3x4x4xf32, #tpu.memory_space<vmem>>, vector<1x1x4x4xf32>
    %93 = vector.shape_cast %92 : vector<1x1x4x4xf32> to vector<4x4xf32>
    %94 = arith.addf %87, %89 : vector<4x4xf32>
    %95 = arith.subf %87, %89 : vector<4x4xf32>
    %96 = arith.addf %91, %93 : vector<4x4xf32>
    %97 = arith.subf %91, %93 : vector<4x4xf32>
    %98 = arith.addf %94, %96 : vector<4x4xf32>
    %cst_69 = arith.constant 5.000000e-01 : f32
    %99 = vector.broadcast %cst_69 : f32 to vector<4x4xf32>
    %100 = arith.mulf %99, %98 : vector<4x4xf32>
    %101 = arith.subf %94, %96 : vector<4x4xf32>
    %cst_70 = arith.constant 5.000000e-01 : f32
    %102 = vector.broadcast %cst_70 : f32 to vector<4x4xf32>
    %103 = arith.mulf %102, %101 : vector<4x4xf32>
    %104 = arith.addf %95, %97 : vector<4x4xf32>
    %cst_71 = arith.constant 5.000000e-01 : f32
    %105 = vector.broadcast %cst_71 : f32 to vector<4x4xf32>
    %106 = arith.mulf %105, %104 : vector<4x4xf32>
    %107 = arith.subf %95, %97 : vector<4x4xf32>
    %cst_72 = arith.constant 5.000000e-01 : f32
    %108 = vector.broadcast %cst_72 : f32 to vector<4x4xf32>
    %109 = arith.mulf %108, %107 : vector<4x4xf32>
    %cst_73 = arith.constant dense<0.000000e+00> : vector<4x8xf32>
    %110 = tpu.matmul %100, %6, %cst_73 {dimension_numbers = #tpu.dot_dimension_numbers<[1], [0], [0], [1], [0, 0, 1, 1], [], []>} : vector<4x4xf32>, vector<4x8xf32>, vector<4x8xf32> -> vector<4x8xf32>
    %cst_74 = arith.constant dense<0.000000e+00> : vector<4x8xf32>
    %111 = tpu.matmul %103, %13, %cst_74 {dimension_numbers = #tpu.dot_dimension_numbers<[1], [0], [0], [1], [0, 0, 1, 1], [], []>} : vector<4x4xf32>, vector<4x8xf32>, vector<4x8xf32> -> vector<4x8xf32>
    %112 = arith.addf %110, %111 : vector<4x8xf32>
    %cst_75 = arith.constant dense<0.000000e+00> : vector<4x8xf32>
    %113 = tpu.matmul %106, %6, %cst_75 {dimension_numbers = #tpu.dot_dimension_numbers<[1], [0], [0], [1], [0, 0, 1, 1], [], []>} : vector<4x4xf32>, vector<4x8xf32>, vector<4x8xf32> -> vector<4x8xf32>
    %cst_76 = arith.constant dense<0.000000e+00> : vector<4x8xf32>
    %114 = tpu.matmul %109, %13, %cst_76 {dimension_numbers = #tpu.dot_dimension_numbers<[1], [0], [0], [1], [0, 0, 1, 1], [], []>} : vector<4x4xf32>, vector<4x8xf32>, vector<4x8xf32> -> vector<4x8xf32>
    %115 = arith.addf %113, %114 : vector<4x8xf32>
    %c2_77 = arith.constant 2 : index
    %c0_78 = arith.constant 0 : index
    %c0_79 = arith.constant 0 : index
    %116 = vector.load %arg4[%c2_77, %c0_78, %c0_79] : memref<8x4x16xf32, #tpu.memory_space<vmem>>, vector<1x4x8xf32>
    %117 = vector.shape_cast %116 : vector<1x4x8xf32> to vector<4x8xf32>
    %118 = vector.shape_cast %112 : vector<4x8xf32> to vector<1x4x8xf32>
    tpu.vector_store %arg4[%c2_77, %c0_78, %c0_79], %118 {strides = array<i32>} : memref<8x4x16xf32, #tpu.memory_space<vmem>>, vector<1x4x8xf32>,
    %c2_80 = arith.constant 2 : index
    %c0_81 = arith.constant 0 : index
    %c8_82 = arith.constant 8 : index
    %119 = vector.load %arg4[%c2_80, %c0_81, %c8_82] : memref<8x4x16xf32, #tpu.memory_space<vmem>>, vector<1x4x8xf32>
    %120 = vector.shape_cast %119 : vector<1x4x8xf32> to vector<4x8xf32>
    %121 = vector.shape_cast %115 : vector<4x8xf32> to vector<1x4x8xf32>
    tpu.vector_store %arg4[%c2_80, %c0_81, %c8_82], %121 {strides = array<i32>} : memref<8x4x16xf32, #tpu.memory_space<vmem>>, vector<1x4x8xf32>,
    %c3 = arith.constant 3 : index
    %c0_83 = arith.constant 0 : index
    %c0_84 = arith.constant 0 : index
    %122 = vector.load %arg2[%c3, %c0_83, %c0_84] : memref<8x4x4xf32, #tpu.memory_space<vmem>>, vector<1x4x4xf32>
    %123 = vector.shape_cast %122 : vector<1x4x4xf32> to vector<4x4xf32>
    %c3_85 = arith.constant 3 : index
    %c0_86 = arith.constant 0 : index
    %c0_87 = arith.constant 0 : index
    %c0_88 = arith.constant 0 : index
    %124 = vector.load %arg3[%c3_85, %c0_86, %c0_87, %c0_88] : memref<8x3x4x4xf32, #tpu.memory_space<vmem>>, vector<1x1x4x4xf32>
    %125 = vector.shape_cast %124 : vector<1x1x4x4xf32> to vector<4x4xf32>
    %c3_89 = arith.constant 3 : index
    %c1_90 = arith.constant 1 : index
    %c0_91 = arith.constant 0 : index
    %c0_92 = arith.constant 0 : index
    %126 = vector.load %arg3[%c3_89, %c1_90, %c0_91, %c0_92] : memref<8x3x4x4xf32, #tpu.memory_space<vmem>>, vector<1x1x4x4xf32>
    %127 = vector.shape_cast %126 : vector<1x1x4x4xf32> to vector<4x4xf32>
    %c3_93 = arith.constant 3 : index
    %c2_94 = arith.constant 2 : index
    %c0_95 = arith.constant 0 : index
    %c0_96 = arith.constant 0 : index
    %128 = vector.load %arg3[%c3_93, %c2_94, %c0_95, %c0_96] : memref<8x3x4x4xf32, #tpu.memory_space<vmem>>, vector<1x1x4x4xf32>
    %129 = vector.shape_cast %128 : vector<1x1x4x4xf32> to vector<4x4xf32>
    %130 = arith.addf %123, %125 : vector<4x4xf32>
    %131 = arith.subf %123, %125 : vector<4x4xf32>
    %132 = arith.addf %127, %129 : vector<4x4xf32>
    %133 = arith.subf %127, %129 : vector<4x4xf32>
    %134 = arith.addf %130, %132 : vector<4x4xf32>
    %cst_97 = arith.constant 5.000000e-01 : f32
    %135 = vector.broadcast %cst_97 : f32 to vector<4x4xf32>
    %136 = arith.mulf %135, %134 : vector<4x4xf32>
    %137 = arith.subf %130, %132 : vector<4x4xf32>
    %cst_98 = arith.constant 5.000000e-01 : f32
    %138 = vector.broadcast %cst_98 : f32 to vector<4x4xf32>
    %139 = arith.mulf %138, %137 : vector<4x4xf32>
    %140 = arith.addf %131, %133 : vector<4x4xf32>
    %cst_99 = arith.constant 5.000000e-01 : f32
    %141 = vector.broadcast %cst_99 : f32 to vector<4x4xf32>
    %142 = arith.mulf %141, %140 : vector<4x4xf32>
    %143 = arith.subf %131, %133 : vector<4x4xf32>
    %cst_100 = arith.constant 5.000000e-01 : f32
    %144 = vector.broadcast %cst_100 : f32 to vector<4x4xf32>
    %145 = arith.mulf %144, %143 : vector<4x4xf32>
    %cst_101 = arith.constant dense<0.000000e+00> : vector<4x8xf32>
    %146 = tpu.matmul %136, %6, %cst_101 {dimension_numbers = #tpu.dot_dimension_numbers<[1], [0], [0], [1], [0, 0, 1, 1], [], []>} : vector<4x4xf32>, vector<4x8xf32>, vector<4x8xf32> -> vector<4x8xf32>
    %cst_102 = arith.constant dense<0.000000e+00> : vector<4x8xf32>
    %147 = tpu.matmul %139, %13, %cst_102 {dimension_numbers = #tpu.dot_dimension_numbers<[1], [0], [0], [1], [0, 0, 1, 1], [], []>} : vector<4x4xf32>, vector<4x8xf32>, vector<4x8xf32> -> vector<4x8xf32>
    %148 = arith.addf %146, %147 : vector<4x8xf32>
    %cst_103 = arith.constant dense<0.000000e+00> : vector<4x8xf32>
    %149 = tpu.matmul %142, %6, %cst_103 {dimension_numbers = #tpu.dot_dimension_numbers<[1], [0], [0], [1], [0, 0, 1, 1], [], []>} : vector<4x4xf32>, vector<4x8xf32>, vector<4x8xf32> -> vector<4x8xf32>
    %cst_104 = arith.constant dense<0.000000e+00> : vector<4x8xf32>
    %150 = tpu.matmul %145, %13, %cst_104 {dimension_numbers = #tpu.dot_dimension_numbers<[1], [0], [0], [1], [0, 0, 1, 1], [], []>} : vector<4x4xf32>, vector<4x8xf32>, vector<4x8xf32> -> vector<4x8xf32>
    %151 = arith.addf %149, %150 : vector<4x8xf32>
    %c3_105 = arith.constant 3 : index
    %c0_106 = arith.constant 0 : index
    %c0_107 = arith.constant 0 : index
    %152 = vector.load %arg4[%c3_105, %c0_106, %c0_107] : memref<8x4x16xf32, #tpu.memory_space<vmem>>, vector<1x4x8xf32>
    %153 = vector.shape_cast %152 : vector<1x4x8xf32> to vector<4x8xf32>
    %154 = vector.shape_cast %148 : vector<4x8xf32> to vector<1x4x8xf32>
    tpu.vector_store %arg4[%c3_105, %c0_106, %c0_107], %154 {strides = array<i32>} : memref<8x4x16xf32, #tpu.memory_space<vmem>>, vector<1x4x8xf32>,
    %c3_108 = arith.constant 3 : index
    %c0_109 = arith.constant 0 : index
    %c8_110 = arith.constant 8 : index
    %155 = vector.load %arg4[%c3_108, %c0_109, %c8_110] : memref<8x4x16xf32, #tpu.memory_space<vmem>>, vector<1x4x8xf32>
    %156 = vector.shape_cast %155 : vector<1x4x8xf32> to vector<4x8xf32>
    %157 = vector.shape_cast %151 : vector<4x8xf32> to vector<1x4x8xf32>
    tpu.vector_store %arg4[%c3_108, %c0_109, %c8_110], %157 {strides = array<i32>} : memref<8x4x16xf32, #tpu.memory_space<vmem>>, vector<1x4x8xf32>,
    %c4 = arith.constant 4 : index
    %c0_111 = arith.constant 0 : index
    %c0_112 = arith.constant 0 : index
    %158 = vector.load %arg2[%c4, %c0_111, %c0_112] : memref<8x4x4xf32, #tpu.memory_space<vmem>>, vector<1x4x4xf32>
    %159 = vector.shape_cast %158 : vector<1x4x4xf32> to vector<4x4xf32>
    %c4_113 = arith.constant 4 : index
    %c0_114 = arith.constant 0 : index
    %c0_115 = arith.constant 0 : index
    %c0_116 = arith.constant 0 : index
    %160 = vector.load %arg3[%c4_113, %c0_114, %c0_115, %c0_116] : memref<8x3x4x4xf32, #tpu.memory_space<vmem>>, vector<1x1x4x4xf32>
    %161 = vector.shape_cast %160 : vector<1x1x4x4xf32> to vector<4x4xf32>
    %c4_117 = arith.constant 4 : index
    %c1_118 = arith.constant 1 : index
    %c0_119 = arith.constant 0 : index
    %c0_120 = arith.constant 0 : index
    %162 = vector.load %arg3[%c4_117, %c1_118, %c0_119, %c0_120] : memref<8x3x4x4xf32, #tpu.memory_space<vmem>>, vector<1x1x4x4xf32>
    %163 = vector.shape_cast %162 : vector<1x1x4x4xf32> to vector<4x4xf32>
    %c4_121 = arith.constant 4 : index
    %c2_122 = arith.constant 2 : index
    %c0_123 = arith.constant 0 : index
    %c0_124 = arith.constant 0 : index
    %164 = vector.load %arg3[%c4_121, %c2_122, %c0_123, %c0_124] : memref<8x3x4x4xf32, #tpu.memory_space<vmem>>, vector<1x1x4x4xf32>
    %165 = vector.shape_cast %164 : vector<1x1x4x4xf32> to vector<4x4xf32>
    %166 = arith.addf %159, %161 : vector<4x4xf32>
    %167 = arith.subf %159, %161 : vector<4x4xf32>
    %168 = arith.addf %163, %165 : vector<4x4xf32>
    %169 = arith.subf %163, %165 : vector<4x4xf32>
    %170 = arith.addf %166, %168 : vector<4x4xf32>
    %cst_125 = arith.constant 5.000000e-01 : f32
    %171 = vector.broadcast %cst_125 : f32 to vector<4x4xf32>
    %172 = arith.mulf %171, %170 : vector<4x4xf32>
    %173 = arith.subf %166, %168 : vector<4x4xf32>
    %cst_126 = arith.constant 5.000000e-01 : f32
    %174 = vector.broadcast %cst_126 : f32 to vector<4x4xf32>
    %175 = arith.mulf %174, %173 : vector<4x4xf32>
    %176 = arith.addf %167, %169 : vector<4x4xf32>
    %cst_127 = arith.constant 5.000000e-01 : f32
    %177 = vector.broadcast %cst_127 : f32 to vector<4x4xf32>
    %178 = arith.mulf %177, %176 : vector<4x4xf32>
    %179 = arith.subf %167, %169 : vector<4x4xf32>
    %cst_128 = arith.constant 5.000000e-01 : f32
    %180 = vector.broadcast %cst_128 : f32 to vector<4x4xf32>
    %181 = arith.mulf %180, %179 : vector<4x4xf32>
    %cst_129 = arith.constant dense<0.000000e+00> : vector<4x8xf32>
    %182 = tpu.matmul %172, %6, %cst_129 {dimension_numbers = #tpu.dot_dimension_numbers<[1], [0], [0], [1], [0, 0, 1, 1], [], []>} : vector<4x4xf32>, vector<4x8xf32>, vector<4x8xf32> -> vector<4x8xf32>
    %cst_130 = arith.constant dense<0.000000e+00> : vector<4x8xf32>
    %183 = tpu.matmul %175, %13, %cst_130 {dimension_numbers = #tpu.dot_dimension_numbers<[1], [0], [0], [1], [0, 0, 1, 1], [], []>} : vector<4x4xf32>, vector<4x8xf32>, vector<4x8xf32> -> vector<4x8xf32>
    %184 = arith.addf %182, %183 : vector<4x8xf32>
    %cst_131 = arith.constant dense<0.000000e+00> : vector<4x8xf32>
    %185 = tpu.matmul %178, %6, %cst_131 {dimension_numbers = #tpu.dot_dimension_numbers<[1], [0], [0], [1], [0, 0, 1, 1], [], []>} : vector<4x4xf32>, vector<4x8xf32>, vector<4x8xf32> -> vector<4x8xf32>
    %cst_132 = arith.constant dense<0.000000e+00> : vector<4x8xf32>
    %186 = tpu.matmul %181, %13, %cst_132 {dimension_numbers = #tpu.dot_dimension_numbers<[1], [0], [0], [1], [0, 0, 1, 1], [], []>} : vector<4x4xf32>, vector<4x8xf32>, vector<4x8xf32> -> vector<4x8xf32>
    %187 = arith.addf %185, %186 : vector<4x8xf32>
    %c4_133 = arith.constant 4 : index
    %c0_134 = arith.constant 0 : index
    %c0_135 = arith.constant 0 : index
    %188 = vector.load %arg4[%c4_133, %c0_134, %c0_135] : memref<8x4x16xf32, #tpu.memory_space<vmem>>, vector<1x4x8xf32>
    %189 = vector.shape_cast %188 : vector<1x4x8xf32> to vector<4x8xf32>
    %190 = vector.shape_cast %184 : vector<4x8xf32> to vector<1x4x8xf32>
    tpu.vector_store %arg4[%c4_133, %c0_134, %c0_135], %190 {strides = array<i32>} : memref<8x4x16xf32, #tpu.memory_space<vmem>>, vector<1x4x8xf32>,
    %c4_136 = arith.constant 4 : index
    %c0_137 = arith.constant 0 : index
    %c8_138 = arith.constant 8 : index
    %191 = vector.load %arg4[%c4_136, %c0_137, %c8_138] : memref<8x4x16xf32, #tpu.memory_space<vmem>>, vector<1x4x8xf32>
    %192 = vector.shape_cast %191 : vector<1x4x8xf32> to vector<4x8xf32>
    %193 = vector.shape_cast %187 : vector<4x8xf32> to vector<1x4x8xf32>
    tpu.vector_store %arg4[%c4_136, %c0_137, %c8_138], %193 {strides = array<i32>} : memref<8x4x16xf32, #tpu.memory_space<vmem>>, vector<1x4x8xf32>,
    %c5 = arith.constant 5 : index
    %c0_139 = arith.constant 0 : index
    %c0_140 = arith.constant 0 : index
    %194 = vector.load %arg2[%c5, %c0_139, %c0_140] : memref<8x4x4xf32, #tpu.memory_space<vmem>>, vector<1x4x4xf32>
    %195 = vector.shape_cast %194 : vector<1x4x4xf32> to vector<4x4xf32>
    %c5_141 = arith.constant 5 : index
    %c0_142 = arith.constant 0 : index
    %c0_143 = arith.constant 0 : index
    %c0_144 = arith.constant 0 : index
    %196 = vector.load %arg3[%c5_141, %c0_142, %c0_143, %c0_144] : memref<8x3x4x4xf32, #tpu.memory_space<vmem>>, vector<1x1x4x4xf32>
    %197 = vector.shape_cast %196 : vector<1x1x4x4xf32> to vector<4x4xf32>
    %c5_145 = arith.constant 5 : index
    %c1_146 = arith.constant 1 : index
    %c0_147 = arith.constant 0 : index
    %c0_148 = arith.constant 0 : index
    %198 = vector.load %arg3[%c5_145, %c1_146, %c0_147, %c0_148] : memref<8x3x4x4xf32, #tpu.memory_space<vmem>>, vector<1x1x4x4xf32>
    %199 = vector.shape_cast %198 : vector<1x1x4x4xf32> to vector<4x4xf32>
    %c5_149 = arith.constant 5 : index
    %c2_150 = arith.constant 2 : index
    %c0_151 = arith.constant 0 : index
    %c0_152 = arith.constant 0 : index
    %200 = vector.load %arg3[%c5_149, %c2_150, %c0_151, %c0_152] : memref<8x3x4x4xf32, #tpu.memory_space<vmem>>, vector<1x1x4x4xf32>
    %201 = vector.shape_cast %200 : vector<1x1x4x4xf32> to vector<4x4xf32>
    %202 = arith.addf %195, %197 : vector<4x4xf32>
    %203 = arith.subf %195, %197 : vector<4x4xf32>
    %204 = arith.addf %199, %201 : vector<4x4xf32>
    %205 = arith.subf %199, %201 : vector<4x4xf32>
    %206 = arith.addf %202, %204 : vector<4x4xf32>
    %cst_153 = arith.constant 5.000000e-01 : f32
    %207 = vector.broadcast %cst_153 : f32 to vector<4x4xf32>
    %208 = arith.mulf %207, %206 : vector<4x4xf32>
    %209 = arith.subf %202, %204 : vector<4x4xf32>
    %cst_154 = arith.constant 5.000000e-01 : f32
    %210 = vector.broadcast %cst_154 : f32 to vector<4x4xf32>
    %211 = arith.mulf %210, %209 : vector<4x4xf32>
    %212 = arith.addf %203, %205 : vector<4x4xf32>
    %cst_155 = arith.constant 5.000000e-01 : f32
    %213 = vector.broadcast %cst_155 : f32 to vector<4x4xf32>
    %214 = arith.mulf %213, %212 : vector<4x4xf32>
    %215 = arith.subf %203, %205 : vector<4x4xf32>
    %cst_156 = arith.constant 5.000000e-01 : f32
    %216 = vector.broadcast %cst_156 : f32 to vector<4x4xf32>
    %217 = arith.mulf %216, %215 : vector<4x4xf32>
    %cst_157 = arith.constant dense<0.000000e+00> : vector<4x8xf32>
    %218 = tpu.matmul %208, %6, %cst_157 {dimension_numbers = #tpu.dot_dimension_numbers<[1], [0], [0], [1], [0, 0, 1, 1], [], []>} : vector<4x4xf32>, vector<4x8xf32>, vector<4x8xf32> -> vector<4x8xf32>
    %cst_158 = arith.constant dense<0.000000e+00> : vector<4x8xf32>
    %219 = tpu.matmul %211, %13, %cst_158 {dimension_numbers = #tpu.dot_dimension_numbers<[1], [0], [0], [1], [0, 0, 1, 1], [], []>} : vector<4x4xf32>, vector<4x8xf32>, vector<4x8xf32> -> vector<4x8xf32>
    %220 = arith.addf %218, %219 : vector<4x8xf32>
    %cst_159 = arith.constant dense<0.000000e+00> : vector<4x8xf32>
    %221 = tpu.matmul %214, %6, %cst_159 {dimension_numbers = #tpu.dot_dimension_numbers<[1], [0], [0], [1], [0, 0, 1, 1], [], []>} : vector<4x4xf32>, vector<4x8xf32>, vector<4x8xf32> -> vector<4x8xf32>
    %cst_160 = arith.constant dense<0.000000e+00> : vector<4x8xf32>
    %222 = tpu.matmul %217, %13, %cst_160 {dimension_numbers = #tpu.dot_dimension_numbers<[1], [0], [0], [1], [0, 0, 1, 1], [], []>} : vector<4x4xf32>, vector<4x8xf32>, vector<4x8xf32> -> vector<4x8xf32>
    %223 = arith.addf %221, %222 : vector<4x8xf32>
    %c5_161 = arith.constant 5 : index
    %c0_162 = arith.constant 0 : index
    %c0_163 = arith.constant 0 : index
    %224 = vector.load %arg4[%c5_161, %c0_162, %c0_163] : memref<8x4x16xf32, #tpu.memory_space<vmem>>, vector<1x4x8xf32>
    %225 = vector.shape_cast %224 : vector<1x4x8xf32> to vector<4x8xf32>
    %226 = vector.shape_cast %220 : vector<4x8xf32> to vector<1x4x8xf32>
    tpu.vector_store %arg4[%c5_161, %c0_162, %c0_163], %226 {strides = array<i32>} : memref<8x4x16xf32, #tpu.memory_space<vmem>>, vector<1x4x8xf32>,
    %c5_164 = arith.constant 5 : index
    %c0_165 = arith.constant 0 : index
    %c8_166 = arith.constant 8 : index
    %227 = vector.load %arg4[%c5_164, %c0_165, %c8_166] : memref<8x4x16xf32, #tpu.memory_space<vmem>>, vector<1x4x8xf32>
    %228 = vector.shape_cast %227 : vector<1x4x8xf32> to vector<4x8xf32>
    %229 = vector.shape_cast %223 : vector<4x8xf32> to vector<1x4x8xf32>
    tpu.vector_store %arg4[%c5_164, %c0_165, %c8_166], %229 {strides = array<i32>} : memref<8x4x16xf32, #tpu.memory_space<vmem>>, vector<1x4x8xf32>,
    %c6 = arith.constant 6 : index
    %c0_167 = arith.constant 0 : index
    %c0_168 = arith.constant 0 : index
    %230 = vector.load %arg2[%c6, %c0_167, %c0_168] : memref<8x4x4xf32, #tpu.memory_space<vmem>>, vector<1x4x4xf32>
    %231 = vector.shape_cast %230 : vector<1x4x4xf32> to vector<4x4xf32>
    %c6_169 = arith.constant 6 : index
    %c0_170 = arith.constant 0 : index
    %c0_171 = arith.constant 0 : index
    %c0_172 = arith.constant 0 : index
    %232 = vector.load %arg3[%c6_169, %c0_170, %c0_171, %c0_172] : memref<8x3x4x4xf32, #tpu.memory_space<vmem>>, vector<1x1x4x4xf32>
    %233 = vector.shape_cast %232 : vector<1x1x4x4xf32> to vector<4x4xf32>
    %c6_173 = arith.constant 6 : index
    %c1_174 = arith.constant 1 : index
    %c0_175 = arith.constant 0 : index
    %c0_176 = arith.constant 0 : index
    %234 = vector.load %arg3[%c6_173, %c1_174, %c0_175, %c0_176] : memref<8x3x4x4xf32, #tpu.memory_space<vmem>>, vector<1x1x4x4xf32>
    %235 = vector.shape_cast %234 : vector<1x1x4x4xf32> to vector<4x4xf32>
    %c6_177 = arith.constant 6 : index
    %c2_178 = arith.constant 2 : index
    %c0_179 = arith.constant 0 : index
    %c0_180 = arith.constant 0 : index
    %236 = vector.load %arg3[%c6_177, %c2_178, %c0_179, %c0_180] : memref<8x3x4x4xf32, #tpu.memory_space<vmem>>, vector<1x1x4x4xf32>
    %237 = vector.shape_cast %236 : vector<1x1x4x4xf32> to vector<4x4xf32>
    %238 = arith.addf %231, %233 : vector<4x4xf32>
    %239 = arith.subf %231, %233 : vector<4x4xf32>
    %240 = arith.addf %235, %237 : vector<4x4xf32>
    %241 = arith.subf %235, %237 : vector<4x4xf32>
    %242 = arith.addf %238, %240 : vector<4x4xf32>
    %cst_181 = arith.constant 5.000000e-01 : f32
    %243 = vector.broadcast %cst_181 : f32 to vector<4x4xf32>
    %244 = arith.mulf %243, %242 : vector<4x4xf32>
    %245 = arith.subf %238, %240 : vector<4x4xf32>
    %cst_182 = arith.constant 5.000000e-01 : f32
    %246 = vector.broadcast %cst_182 : f32 to vector<4x4xf32>
    %247 = arith.mulf %246, %245 : vector<4x4xf32>
    %248 = arith.addf %239, %241 : vector<4x4xf32>
    %cst_183 = arith.constant 5.000000e-01 : f32
    %249 = vector.broadcast %cst_183 : f32 to vector<4x4xf32>
    %250 = arith.mulf %249, %248 : vector<4x4xf32>
    %251 = arith.subf %239, %241 : vector<4x4xf32>
    %cst_184 = arith.constant 5.000000e-01 : f32
    %252 = vector.broadcast %cst_184 : f32 to vector<4x4xf32>
    %253 = arith.mulf %252, %251 : vector<4x4xf32>
    %cst_185 = arith.constant dense<0.000000e+00> : vector<4x8xf32>
    %254 = tpu.matmul %244, %6, %cst_185 {dimension_numbers = #tpu.dot_dimension_numbers<[1], [0], [0], [1], [0, 0, 1, 1], [], []>} : vector<4x4xf32>, vector<4x8xf32>, vector<4x8xf32> -> vector<4x8xf32>
    %cst_186 = arith.constant dense<0.000000e+00> : vector<4x8xf32>
    %255 = tpu.matmul %247, %13, %cst_186 {dimension_numbers = #tpu.dot_dimension_numbers<[1], [0], [0], [1], [0, 0, 1, 1], [], []>} : vector<4x4xf32>, vector<4x8xf32>, vector<4x8xf32> -> vector<4x8xf32>
    %256 = arith.addf %254, %255 : vector<4x8xf32>
    %cst_187 = arith.constant dense<0.000000e+00> : vector<4x8xf32>
    %257 = tpu.matmul %250, %6, %cst_187 {dimension_numbers = #tpu.dot_dimension_numbers<[1], [0], [0], [1], [0, 0, 1, 1], [], []>} : vector<4x4xf32>, vector<4x8xf32>, vector<4x8xf32> -> vector<4x8xf32>
    %cst_188 = arith.constant dense<0.000000e+00> : vector<4x8xf32>
    %258 = tpu.matmul %253, %13, %cst_188 {dimension_numbers = #tpu.dot_dimension_numbers<[1], [0], [0], [1], [0, 0, 1, 1], [], []>} : vector<4x4xf32>, vector<4x8xf32>, vector<4x8xf32> -> vector<4x8xf32>
    %259 = arith.addf %257, %258 : vector<4x8xf32>
    %c6_189 = arith.constant 6 : index
    %c0_190 = arith.constant 0 : index
    %c0_191 = arith.constant 0 : index
    %260 = vector.load %arg4[%c6_189, %c0_190, %c0_191] : memref<8x4x16xf32, #tpu.memory_space<vmem>>, vector<1x4x8xf32>
    %261 = vector.shape_cast %260 : vector<1x4x8xf32> to vector<4x8xf32>
    %262 = vector.shape_cast %256 : vector<4x8xf32> to vector<1x4x8xf32>
    tpu.vector_store %arg4[%c6_189, %c0_190, %c0_191], %262 {strides = array<i32>} : memref<8x4x16xf32, #tpu.memory_space<vmem>>, vector<1x4x8xf32>,
    %c6_192 = arith.constant 6 : index
    %c0_193 = arith.constant 0 : index
    %c8_194 = arith.constant 8 : index
    %263 = vector.load %arg4[%c6_192, %c0_193, %c8_194] : memref<8x4x16xf32, #tpu.memory_space<vmem>>, vector<1x4x8xf32>
    %264 = vector.shape_cast %263 : vector<1x4x8xf32> to vector<4x8xf32>
    %265 = vector.shape_cast %259 : vector<4x8xf32> to vector<1x4x8xf32>
    tpu.vector_store %arg4[%c6_192, %c0_193, %c8_194], %265 {strides = array<i32>} : memref<8x4x16xf32, #tpu.memory_space<vmem>>, vector<1x4x8xf32>,
    %c7 = arith.constant 7 : index
    %c0_195 = arith.constant 0 : index
    %c0_196 = arith.constant 0 : index
    %266 = vector.load %arg2[%c7, %c0_195, %c0_196] : memref<8x4x4xf32, #tpu.memory_space<vmem>>, vector<1x4x4xf32>
    %267 = vector.shape_cast %266 : vector<1x4x4xf32> to vector<4x4xf32>
    %c7_197 = arith.constant 7 : index
    %c0_198 = arith.constant 0 : index
    %c0_199 = arith.constant 0 : index
    %c0_200 = arith.constant 0 : index
    %268 = vector.load %arg3[%c7_197, %c0_198, %c0_199, %c0_200] : memref<8x3x4x4xf32, #tpu.memory_space<vmem>>, vector<1x1x4x4xf32>
    %269 = vector.shape_cast %268 : vector<1x1x4x4xf32> to vector<4x4xf32>
    %c7_201 = arith.constant 7 : index
    %c1_202 = arith.constant 1 : index
    %c0_203 = arith.constant 0 : index
    %c0_204 = arith.constant 0 : index
    %270 = vector.load %arg3[%c7_201, %c1_202, %c0_203, %c0_204] : memref<8x3x4x4xf32, #tpu.memory_space<vmem>>, vector<1x1x4x4xf32>
    %271 = vector.shape_cast %270 : vector<1x1x4x4xf32> to vector<4x4xf32>
    %c7_205 = arith.constant 7 : index
    %c2_206 = arith.constant 2 : index
    %c0_207 = arith.constant 0 : index
    %c0_208 = arith.constant 0 : index
    %272 = vector.load %arg3[%c7_205, %c2_206, %c0_207, %c0_208] : memref<8x3x4x4xf32, #tpu.memory_space<vmem>>, vector<1x1x4x4xf32>
    %273 = vector.shape_cast %272 : vector<1x1x4x4xf32> to vector<4x4xf32>
    %274 = arith.addf %267, %269 : vector<4x4xf32>
    %275 = arith.subf %267, %269 : vector<4x4xf32>
    %276 = arith.addf %271, %273 : vector<4x4xf32>
    %277 = arith.subf %271, %273 : vector<4x4xf32>
    %278 = arith.addf %274, %276 : vector<4x4xf32>
    %cst_209 = arith.constant 5.000000e-01 : f32
    %279 = vector.broadcast %cst_209 : f32 to vector<4x4xf32>
    %280 = arith.mulf %279, %278 : vector<4x4xf32>
    %281 = arith.subf %274, %276 : vector<4x4xf32>
    %cst_210 = arith.constant 5.000000e-01 : f32
    %282 = vector.broadcast %cst_210 : f32 to vector<4x4xf32>
    %283 = arith.mulf %282, %281 : vector<4x4xf32>
    %284 = arith.addf %275, %277 : vector<4x4xf32>
    %cst_211 = arith.constant 5.000000e-01 : f32
    %285 = vector.broadcast %cst_211 : f32 to vector<4x4xf32>
    %286 = arith.mulf %285, %284 : vector<4x4xf32>
    %287 = arith.subf %275, %277 : vector<4x4xf32>
    %cst_212 = arith.constant 5.000000e-01 : f32
    %288 = vector.broadcast %cst_212 : f32 to vector<4x4xf32>
    %289 = arith.mulf %288, %287 : vector<4x4xf32>
    %cst_213 = arith.constant dense<0.000000e+00> : vector<4x8xf32>
    %290 = tpu.matmul %280, %6, %cst_213 {dimension_numbers = #tpu.dot_dimension_numbers<[1], [0], [0], [1], [0, 0, 1, 1], [], []>} : vector<4x4xf32>, vector<4x8xf32>, vector<4x8xf32> -> vector<4x8xf32>
    %cst_214 = arith.constant dense<0.000000e+00> : vector<4x8xf32>
    %291 = tpu.matmul %283, %13, %cst_214 {dimension_numbers = #tpu.dot_dimension_numbers<[1], [0], [0], [1], [0, 0, 1, 1], [], []>} : vector<4x4xf32>, vector<4x8xf32>, vector<4x8xf32> -> vector<4x8xf32>
    %292 = arith.addf %290, %291 : vector<4x8xf32>
    %cst_215 = arith.constant dense<0.000000e+00> : vector<4x8xf32>
    %293 = tpu.matmul %286, %6, %cst_215 {dimension_numbers = #tpu.dot_dimension_numbers<[1], [0], [0], [1], [0, 0, 1, 1], [], []>} : vector<4x4xf32>, vector<4x8xf32>, vector<4x8xf32> -> vector<4x8xf32>
    %cst_216 = arith.constant dense<0.000000e+00> : vector<4x8xf32>
    %294 = tpu.matmul %289, %13, %cst_216 {dimension_numbers = #tpu.dot_dimension_numbers<[1], [0], [0], [1], [0, 0, 1, 1], [], []>} : vector<4x4xf32>, vector<4x8xf32>, vector<4x8xf32> -> vector<4x8xf32>
    %295 = arith.addf %293, %294 : vector<4x8xf32>
    %c7_217 = arith.constant 7 : index
    %c0_218 = arith.constant 0 : index
    %c0_219 = arith.constant 0 : index
    %296 = vector.load %arg4[%c7_217, %c0_218, %c0_219] : memref<8x4x16xf32, #tpu.memory_space<vmem>>, vector<1x4x8xf32>
    %297 = vector.shape_cast %296 : vector<1x4x8xf32> to vector<4x8xf32>
    %298 = vector.shape_cast %292 : vector<4x8xf32> to vector<1x4x8xf32>
    tpu.vector_store %arg4[%c7_217, %c0_218, %c0_219], %298 {strides = array<i32>} : memref<8x4x16xf32, #tpu.memory_space<vmem>>, vector<1x4x8xf32>,
    %c7_220 = arith.constant 7 : index
    %c0_221 = arith.constant 0 : index
    %c8_222 = arith.constant 8 : index
    %299 = vector.load %arg4[%c7_220, %c0_221, %c8_222] : memref<8x4x16xf32, #tpu.memory_space<vmem>>, vector<1x4x8xf32>
    %300 = vector.shape_cast %299 : vector<1x4x8xf32> to vector<4x8xf32>
    %301 = vector.shape_cast %295 : vector<4x8xf32> to vector<1x4x8xf32>
    tpu.vector_store %arg4[%c7_220, %c0_221, %c8_222], %301 {strides = array<i32>} : memref<8x4x16xf32, #tpu.memory_space<vmem>>, vector<1x4x8xf32>,
    return
  }
  func.func @transform_0(%arg0: i32, %arg1: i32) -> (i32, i32, i32) {
    %c0_i32 = arith.constant 0 : i32
    %c0_i32_0 = arith.constant 0 : i32
    return %arg0, %arg1, %c0_i32 : i32, i32, i32
  }
  func.func @transform_1(%arg0: i32, %arg1: i32) -> (i32, i32, i32, i32) {
    %c0_i32 = arith.constant 0 : i32
    %c0_i32_0 = arith.constant 0 : i32
    %c0_i32_1 = arith.constant 0 : i32
    return %arg0, %c0_i32, %arg1, %c0_i32_0 : i32, i32, i32, i32
  }
  func.func @transform_2(%arg0: i32, %arg1: i32) -> (i32, i32, i32) {
    %c0_i32 = arith.constant 0 : i32
    %c0_i32_0 = arith.constant 0 : i32
    return %arg0, %arg1, %c0_i32 : i32, i32, i32
  }
}

</mosaic_0001>

<llo_original>
// kernel: _haar_sfb2d_level.1
$region0: #{_haar_sfb2d_level.1}
  #allocation0 [shape = 'u32[]', space=smem, size = 0x4, offset = 0x4, fixed_abs, tag = 'smem constant byte address 0x4 - core index']
  #allocation1 [shape = 'u32[144,128]{1,0:T(1,128)}', space=vmem, size = 0x12000, scoped, tag = 'internal scratch']
  %s0 = inlined_call_operand.hbm [shape: f32[8,4,4], index: 0, kind: input, shape index: {}]
  %s1 = inlined_call_operand.hbm [shape: f32[8,3,4,4], index: 1, kind: input, shape index: {}]
  %s2 = inlined_call_operand.vmem [shape: f32[8,4,16], index: 2, kind: output, shape index: {}]
  %s3 = sld [smem:[#allocation0]]
  $region26: #{_haar_sfb2d_level.1} parent=0
    _
  %s5 = ssub.s32 1, %s3
  %s6 = scalar_select 0, %s5, %s3
  $region1: #{_haar_sfb2d_level.1} parent=0
    #allocation2 [shape = 'u8[16384]{0}', space=vmem, size = 0x4000, scoped, tag = 'input window, operand 0, single buffered']
    #allocation3 [shape = 's32[1]{0}', space=sflag, size = 0x4, scoped, tag = 'scoped memory for _haar_sfb2d_level.1']
    #allocation4 [shape = 'u8[49152]{0}', space=vmem, size = 0xc000, scoped, tag = 'input window, operand 1, single buffered']
    #allocation5 [shape = 's32[1]{0}', space=sflag, size = 0x4, scoped, tag = 'scoped memory for _haar_sfb2d_level.1']
    %7 = vsyncpa [#allocation3], 0
    %8 = vsyncpa [#allocation5], 0
    // Predicated region
    $region2: #{_haar_sfb2d_level.1} parent=1 // pred_check
      _
    $region3: #{_haar_sfb2d_level.1} parent=1 // pred_check_branch
      %10 = sbr.rel (0) target = $region5
    $region4: #{_haar_sfb2d_level.1} parent=1 // pred_region
      %s12 = ssub.s32 512, 512
      %13 = vsyncadd [#allocation3], %s12
      %s14 = sshll.u32 [#allocation2], 4
      %s15 = int_to_ptr.vmem [resolvable:$true] %s14
      %20 = dma.hbm_to_vmem [thread:$0]  %s0, 512, %s15, [#allocation3], 64, 64, 4
    $region5: #{_haar_sfb2d_level.1} parent=1 // pred_fallthru
      _
    // Predicated region
    $region6: #{_haar_sfb2d_level.1} parent=1 // pred_check
      _
    $region7: #{_haar_sfb2d_level.1} parent=1 // pred_check_branch
      %22 = sbr.rel (0) target = $region9
    $region8: #{_haar_sfb2d_level.1} parent=1 // pred_region
      %s24 = ssub.s32 1536, 1536
      %25 = vsyncadd [#allocation5], %s24
      %s26 = sshll.u32 [#allocation4], 4
      %s27 = int_to_ptr.vmem [resolvable:$true] %s26
      %32 = dma.hbm_to_vmem [thread:$0]  %s1, 1536, %s27, [#allocation5], 64, 64, 4
    $region9: #{_haar_sfb2d_level.1} parent=1 // pred_fallthru
      _
    // Predicated region
    $region10: #{_haar_sfb2d_level.1} parent=1 // pred_check
      _
    $region11: #{_haar_sfb2d_level.1} parent=1 // pred_check_branch
      %34 = sbr.rel (0) target = $region13
    $region12: #{_haar_sfb2d_level.1} parent=1 // pred_region
      %35 = dma.done [#allocation3], 512
    $region13: #{_haar_sfb2d_level.1} parent=1 // pred_fallthru
      _
    // Predicated region
    $region14: #{_haar_sfb2d_level.1} parent=1 // pred_check
      _
    $region15: #{_haar_sfb2d_level.1} parent=1 // pred_check_branch
      %37 = sbr.rel (0) target = $region17
    $region16: #{_haar_sfb2d_level.1} parent=1 // pred_region
      %38 = dma.done [#allocation5], 1536
    $region17: #{_haar_sfb2d_level.1} parent=1 // pred_fallthru
      _
    %v39 = vlaneseq
    %v40 = vshrl.u32 %v39, 7
    %v41 = vlaneseq
    %v42 = vand.u32 %v41, 127
    %v43 = vmul.u32 %v40, 2
    %vm44 = vcmp.eq.s32.totalorder %v42, %v43
    %v45 = vsel %vm44, 1, 0
    %v46 = vcvt.s32.f32 %v45
    %v47 = vadd.s32 %v43, 1
    %vm48 = vcmp.eq.s32.totalorder %v42, %v47
    %v49 = vsel %vm48, 1, 0
    %v50 = vcvt.s32.f32 %v49
    %v51 = vld [vmem:[#allocation2] sm:$0xf]
    %v52 = vld [vmem:[#allocation4] sm:$0xf]
    %s53 = scalar_lea.vmem [#allocation4], 4
    %v54 = vld [vmem:[%s53] sm:$0xf]
    %s55 = scalar_lea.vmem [#allocation4], 8
    %v56 = vld [vmem:[%s55] sm:$0xf]
    %v57 = vadd.f32 %v51, %v52
    %v58 = vsub.f32 %v51, %v52
    %v59 = vadd.f32 %v54, %v56
    %v60 = vsub.f32 %v54, %v56
    %v61 = vadd.f32 %v57, %v59
    %v62 = vmul.f32 %v61, 0.5
    %v63 = vsub.f32 %v57, %v59
    %v64 = vmul.f32 %v63, 0.5
    %v65 = vadd.f32 %v58, %v60
    %v66 = vmul.f32 %v65, 0.5
    %v67 = vsub.f32 %v58, %v60
    %v68 = vmul.f32 %v67, 0.5
    %vm69 = vcmask 31744
    %v71 = vsel %vm69, %v64, 0
    %vm73 = vcmask 1043456
    %v75 = vsel %vm73, %v50, 0
    %77 = vmatprep.subr.mxu0 0.0
    %78 = vmatpush1.msra.mxu0 %v75
    %79 = vmatprep.subr.mxu0 0.0
    %80 = vmatpush1.msra.mxu0 0.0
    %81 = vmatprep.subr.mxu0 0.0
    %82 = vmatpush1.msra.mxu0 0.0
    %83 = vmatprep.subr.mxu0 0.0
    %84 = vmatpush1.msra.mxu0 0.0
    %85 = vmatprep.subr.mxu0 0.0
    %86 = vmatpush1.msra.mxu0 0.0
    %87 = vmatprep.subr.mxu0 0.0
    %88 = vmatpush1.msra.mxu0 0.0
    %89 = vmatprep.subr.mxu0 0.0
    %90 = vmatpush1.msra.mxu0 0.0
    %91 = vmatprep.subr.mxu0 0.0
    %92 = vmatpush1.msra.mxu0 0.0
    %93 = vmatprep.subr.mxu0 0.0
    %94 = vmatpush1.msra.mxu0 0.0
    %95 = vmatprep.subr.mxu0 0.0
    %96 = vmatpush1.msra.mxu0 0.0
    %97 = vmatprep.subr.mxu0 0.0
    %98 = vmatpush1.msra.mxu0 0.0
    %99 = vmatprep.subr.mxu0 0.0
    %100 = vmatpush1.msra.mxu0 0.0
    %101 = vmatprep.subr.mxu0 0.0
    %102 = vmatpush1.msra.mxu0 0.0
    %103 = vmatprep.subr.mxu0 0.0
    %104 = vmatpush1.msra.mxu0 0.0
    %105 = vmatprep.subr.mxu0 0.0
    %106 = vmatpush1.msra.mxu0 0.0
    %107 = vmatprep.subr.mxu0 0.0
    %108 = vmatpush1.msra.mxu0 0.0
    %109 = vmatprep.subr.mxu0 0.0
    %110 = vmatpush1.msra.mxu0 0.0
    %111 = vmatprep.subr.mxu0 0.0
    %112 = vmatpush1.msra.mxu0 0.0
    %113 = vmatprep.subr.mxu0 0.0
    %114 = vmatpush1.msra.mxu0 0.0
    %115 = vmatprep.subr.mxu0 0.0
    %116 = vmatpush1.msra.mxu0 0.0
    %117 = vmatprep.subr.mxu0 0.0
    %118 = vmatpush1.msra.mxu0 0.0
    %119 = vmatprep.subr.mxu0 0.0
    %120 = vmatpush1.msra.mxu0 0.0
    %121 = vmatprep.subr.mxu0 0.0
    %122 = vmatpush1.msra.mxu0 0.0
    %123 = vmatprep.subr.mxu0 0.0
    %124 = vmatpush1.msra.mxu0 0.0
    %125 = vmatprep.subr.mxu0 0.0
    %126 = vmatpush1.msra.mxu0 0.0
    %127 = vmatprep.subr.mxu0 0.0
    %128 = vmatpush1.msra.mxu0 0.0
    %129 = vmatprep.subr.mxu0 0.0
    %130 = vmatpush1.msra.mxu0 0.0
    %131 = vmatprep.subr.mxu0 0.0
    %132 = vmatpush1.msra.mxu0 0.0
    %133 = vmatprep.subr.mxu0 0.0
    %134 = vmatpush1.msra.mxu0 0.0
    %135 = vmatprep.subr.mxu0 0.0
    %136 = vmatpush1.msra.mxu0 0.0
    %137 = vmatprep.subr.mxu0 0.0
    %138 = vmatpush1.msra.mxu0 0.0
    %139 = vmatprep.subr.mxu0 0.0
    %140 = vmatpush1.msra.mxu0 0.0
    %141 = vmatprep.mubr.f32.mxu0 0.0
    %142 = vmatmul.mubr.f32.gmra.mrb[0].mxu0 %v71
    %v143 = vpop.f32.mrb[0].mxu0
    %v144 = vadd.f32 0.0, %v143
    %v145 = vpop.f32.mrb[0].mxu0
    %146 = vdwg.mxu0
    %v148 = vsel %vm69, %v62, 0
    %v151 = vsel %vm73, %v46, 0
    %153 = vmatprep.subr.mxu0 0.0
    %154 = vmatpush1.msra.mxu0 %v151
    %155 = vmatprep.subr.mxu0 0.0
    %156 = vmatpush1.msra.mxu0 0.0
    %157 = vmatprep.subr.mxu0 0.0
    %158 = vmatpush1.msra.mxu0 0.0
    %159 = vmatprep.subr.mxu0 0.0
    %160 = vmatpush1.msra.mxu0 0.0
    %161 = vmatprep.subr.mxu0 0.0
    %162 = vmatpush1.msra.mxu0 0.0
    %163 = vmatprep.subr.mxu0 0.0
    %164 = vmatpush1.msra.mxu0 0.0
    %165 = vmatprep.subr.mxu0 0.0
    %166 = vmatpush1.msra.mxu0 0.0
    %167 = vmatprep.subr.mxu0 0.0
    %168 = vmatpush1.msra.mxu0 0.0
    %169 = vmatprep.subr.mxu0 0.0
    %170 = vmatpush1.msra.mxu0 0.0
    %171 = vmatprep.subr.mxu0 0.0
    %172 = vmatpush1.msra.mxu0 0.0
    %173 = vmatprep.subr.mxu0 0.0
    %174 = vmatpush1.msra.mxu0 0.0
    %175 = vmatprep.subr.mxu0 0.0
    %176 = vmatpush1.msra.mxu0 0.0
    %177 = vmatprep.subr.mxu0 0.0
    %178 = vmatpush1.msra.mxu0 0.0
    %179 = vmatprep.subr.mxu0 0.0
    %180 = vmatpush1.msra.mxu0 0.0
    %181 = vmatprep.subr.mxu0 0.0
    %182 = vmatpush1.msra.mxu0 0.0
    %183 = vmatprep.subr.mxu0 0.0
    %184 = vmatpush1.msra.mxu0 0.0
    %185 = vmatprep.subr.mxu0 0.0
    %186 = vmatpush1.msra.mxu0 0.0
    %187 = vmatprep.subr.mxu0 0.0
    %188 = vmatpush1.msra.mxu0 0.0
    %189 = vmatprep.subr.mxu0 0.0
    %190 = vmatpush1.msra.mxu0 0.0
    %191 = vmatprep.subr.mxu0 0.0
    %192 = vmatpush1.msra.mxu0 0.0
    %193 = vmatprep.subr.mxu0 0.0
    %194 = vmatpush1.msra.mxu0 0.0
    %195 = vmatprep.subr.mxu0 0.0
    %196 = vmatpush1.msra.mxu0 0.0
    %197 = vmatprep.subr.mxu0 0.0
    %198 = vmatpush1.msra.mxu0 0.0
    %199 = vmatprep.subr.mxu0 0.0
    %200 = vmatpush1.msra.mxu0 0.0
    %201 = vmatprep.subr.mxu0 0.0
    %202 = vmatpush1.msra.mxu0 0.0
    %203 = vmatprep.subr.mxu0 0.0
    %204 = vmatpush1.msra.mxu0 0.0
    %205 = vmatprep.subr.mxu0 0.0
    %206 = vmatpush1.msra.mxu0 0.0
    %207 = vmatprep.subr.mxu0 0.0
    %208 = vmatpush1.msra.mxu0 0.0
    %209 = vmatprep.subr.mxu0 0.0
    %210 = vmatpush1.msra.mxu0 0.0
    %211 = vmatprep.subr.mxu0 0.0
    %212 = vmatpush1.msra.mxu0 0.0
    %213 = vmatprep.subr.mxu0 0.0
    %214 = vmatpush1.msra.mxu0 0.0
    %215 = vmatprep.subr.mxu0 0.0
    %216 = vmatpush1.msra.mxu0 0.0
    %217 = vmatprep.mubr.f32.mxu0 0.0
    %218 = vmatmul.mubr.f32.gmra.mrb[0].mxu0 %v148
    %v219 = vpop.f32.mrb[0].mxu0
    %v220 = vadd.f32 %v144, %v219
    %v221 = vpop.f32.mrb[0].mxu0
    %222 = vdwg.mxu0
    %v224 = vsel %vm69, %v68, 0
    %226 = vmatprep.subr.mxu0 0.0
    %227 = vmatpush1.msra.mxu0 %v75
    %228 = vmatprep.subr.mxu0 0.0
    %229 = vmatpush1.msra.mxu0 0.0
    %230 = vmatprep.subr.mxu0 0.0
    %231 = vmatpush1.msra.mxu0 0.0
    %232 = vmatprep.subr.mxu0 0.0
    %233 = vmatpush1.msra.mxu0 0.0
    %234 = vmatprep.subr.mxu0 0.0
    %235 = vmatpush1.msra.mxu0 0.0
    %236 = vmatprep.subr.mxu0 0.0
    %237 = vmatpush1.msra.mxu0 0.0
    %238 = vmatprep.subr.mxu0 0.0
    %239 = vmatpush1.msra.mxu0 0.0
    %240 = vmatprep.subr.mxu0 0.0
    %241 = vmatpush1.msra.mxu0 0.0
    %242 = vmatprep.subr.mxu0 0.0
    %243 = vmatpush1.msra.mxu0 0.0
    %244 = vmatprep.subr.mxu0 0.0
    %245 = vmatpush1.msra.mxu0 0.0
    %246 = vmatprep.subr.mxu0 0.0
    %247 = vmatpush1.msra.mxu0 0.0
    %248 = vmatprep.subr.mxu0 0.0
    %249 = vmatpush1.msra.mxu0 0.0
    %250 = vmatprep.subr.mxu0 0.0
    %251 = vmatpush1.msra.mxu0 0.0
    %252 = vmatprep.subr.mxu0 0.0
    %253 = vmatpush1.msra.mxu0 0.0
    %254 = vmatprep.subr.mxu0 0.0
    %255 = vmatpush1.msra.mxu0 0.0
    %256 = vmatprep.subr.mxu0 0.0
    %257 = vmatpush1.msra.mxu0 0.0
    %258 = vmatprep.subr.mxu0 0.0
    %259 = vmatpush1.msra.mxu0 0.0
    %260 = vmatprep.subr.mxu0 0.0
    %261 = vmatpush1.msra.mxu0 0.0
    %262 = vmatprep.subr.mxu0 0.0
    %263 = vmatpush1.msra.mxu0 0.0
    %264 = vmatprep.subr.mxu0 0.0
    %265 = vmatpush1.msra.mxu0 0.0
    %266 = vmatprep.subr.mxu0 0.0
    %267 = vmatpush1.msra.mxu0 0.0
    %268 = vmatprep.subr.mxu0 0.0
    %269 = vmatpush1.msra.mxu0 0.0
    %270 = vmatprep.subr.mxu0 0.0
    %271 = vmatpush1.msra.mxu0 0.0
    %272 = vmatprep.subr.mxu0 0.0
    %273 = vmatpush1.msra.mxu0 0.0
    %274 = vmatprep.subr.mxu0 0.0
    %275 = vmatpush1.msra.mxu0 0.0
    %276 = vmatprep.subr.mxu0 0.0
    %277 = vmatpush1.msra.mxu0 0.0
    %278 = vmatprep.subr.mxu0 0.0
    %279 = vmatpush1.msra.mxu0 0.0
    %280 = vmatprep.subr.mxu0 0.0
    %281 = vmatpush1.msra.mxu0 0.0
    %282 = vmatprep.subr.mxu0 0.0
    %283 = vmatpush1.msra.mxu0 0.0
    %284 = vmatprep.subr.mxu0 0.0
    %285 = vmatpush1.msra.mxu0 0.0
    %286 = vmatprep.subr.mxu0 0.0
    %287 = vmatpush1.msra.mxu0 0.0
    %288 = vmatprep.subr.mxu0 0.0
    %289 = vmatpush1.msra.mxu0 0.0
    %290 = vmatprep.mubr.f32.mxu0 0.0
    %291 = vmatmul.mubr.f32.gmra.mrb[0].mxu0 %v224
    %v292 = vpop.f32.mrb[0].mxu0
    %v293 = vadd.f32 0.0, %v292
    %v294 = vpop.f32.mrb[0].mxu0
    %295 = vdwg.mxu0
    %v297 = vsel %vm69, %v66, 0
    %299 = vmatprep.subr.mxu0 0.0
    %300 = vmatpush1.msra.mxu0 %v151
    %301 = vmatprep.subr.mxu0 0.0
    %302 = vmatpush1.msra.mxu0 0.0
    %303 = vmatprep.subr.mxu0 0.0
    %304 = vmatpush1.msra.mxu0 0.0
    %305 = vmatprep.subr.mxu0 0.0
    %306 = vmatpush1.msra.mxu0 0.0
    %307 = vmatprep.subr.mxu0 0.0
    %308 = vmatpush1.msra.mxu0 0.0
    %309 = vmatprep.subr.mxu0 0.0
    %310 = vmatpush1.msra.mxu0 0.0
    %311 = vmatprep.subr.mxu0 0.0
    %312 = vmatpush1.msra.mxu0 0.0
    %313 = vmatprep.subr.mxu0 0.0
    %314 = vmatpush1.msra.mxu0 0.0
    %315 = vmatprep.subr.mxu0 0.0
    %316 = vmatpush1.msra.mxu0 0.0
    %317 = vmatprep.subr.mxu0 0.0
    %318 = vmatpush1.msra.mxu0 0.0
    %319 = vmatprep.subr.mxu0 0.0
    %320 = vmatpush1.msra.mxu0 0.0
    %321 = vmatprep.subr.mxu0 0.0
    %322 = vmatpush1.msra.mxu0 0.0
    %323 = vmatprep.subr.mxu0 0.0
    %324 = vmatpush1.msra.mxu0 0.0
    %325 = vmatprep.subr.mxu0 0.0
    %326 = vmatpush1.msra.mxu0 0.0
    %327 = vmatprep.subr.mxu0 0.0
    %328 = vmatpush1.msra.mxu0 0.0
    %329 = vmatprep.subr.mxu0 0.0
    %330 = vmatpush1.msra.mxu0 0.0
    %331 = vmatprep.subr.mxu0 0.0
    %332 = vmatpush1.msra.mxu0 0.0
    %333 = vmatprep.subr.mxu0 0.0
    %334 = vmatpush1.msra.mxu0 0.0
    %335 = vmatprep.subr.mxu0 0.0
    %336 = vmatpush1.msra.mxu0 0.0
    %337 = vmatprep.subr.mxu0 0.0
    %338 = vmatpush1.msra.mxu0 0.0
    %339 = vmatprep.subr.mxu0 0.0
    %340 = vmatpush1.msra.mxu0 0.0
    %341 = vmatprep.subr.mxu0 0.0
    %342 = vmatpush1.msra.mxu0 0.0
    %343 = vmatprep.subr.mxu0 0.0
    %344 = vmatpush1.msra.mxu0 0.0
    %345 = vmatprep.subr.mxu0 0.0
    %346 = vmatpush1.msra.mxu0 0.0
    %347 = vmatprep.subr.mxu0 0.0
    %348 = vmatpush1.msra.mxu0 0.0
    %349 = vmatprep.subr.mxu0 0.0
    %350 = vmatpush1.msra.mxu0 0.0
    %351 = vmatprep.subr.mxu0 0.0
    %352 = vmatpush1.msra.mxu0 0.0
    %353 = vmatprep.subr.mxu0 0.0
    %354 = vmatpush1.msra.mxu0 0.0
    %355 = vmatprep.subr.mxu0 0.0
    %356 = vmatpush1.msra.mxu0 0.0
    %357 = vmatprep.subr.mxu0 0.0
    %358 = vmatpush1.msra.mxu0 0.0
    %359 = vmatprep.subr.mxu0 0.0
    %360 = vmatpush1.msra.mxu0 0.0
    %361 = vmatprep.subr.mxu0 0.0
    %362 = vmatpush1.msra.mxu0 0.0
    %363 = vmatprep.mubr.f32.mxu0 0.0
    %364 = vmatmul.mubr.f32.gmra.mrb[0].mxu0 %v297
    %v365 = vpop.f32.mrb[0].mxu0
    %v366 = vadd.f32 %v293, %v365
    %v367 = vpop.f32.mrb[0].mxu0
    %368 = vdwg.mxu0
    %vm369 = vcmask 60416
    %370 = vst.msk [vmem:[%s2] sm:$0xf] %vm369, %v220
    %372 = vrot.lane.b32.xlu0 %v366, 8
    %v373 = vpop.permute.xlu0 %372
    %vm375 = vcmask 126016
    %376 = vst.msk [vmem:[%s2] sm:$0xf] %vm375, %v373
    %s377 = scalar_lea.vmem [#allocation2], 4
    %v378 = vld [vmem:[%s377] sm:$0xf]
    %s379 = scalar_lea.vmem [#allocation4], 12
    %v380 = vld [vmem:[%s379] sm:$0xf]
    %s381 = scalar_lea.vmem [#allocation4], 16
    %v382 = vld [vmem:[%s381] sm:$0xf]
    %s383 = scalar_lea.vmem [#allocation4], 20
    %v384 = vld [vmem:[%s383] sm:$0xf]
    %v385 = vadd.f32 %v378, %v380
    %v386 = vsub.f32 %v378, %v380
    %v387 = vadd.f32 %v382, %v384
    %v388 = vsub.f32 %v382, %v384
    %v389 = vadd.f32 %v385, %v387
    %v390 = vmul.f32 %v389, 0.5
    %v391 = vsub.f32 %v385, %v387
    %v392 = vmul.f32 %v391, 0.5
    %v393 = vadd.f32 %v386, %v388
    %v394 = vmul.f32 %v393, 0.5
    %v395 = vsub.f32 %v386, %v388
    %v396 = vmul.f32 %v395, 0.5
    %v398 = vsel %vm69, %v392, 0
    %400 = vmatprep.subr.mxu0 0.0
    %401 = vmatpush1.msra.mxu0 %v75
    %402 = vmatprep.subr.mxu0 0.0
    %403 = vmatpush1.msra.mxu0 0.0
    %404 = vmatprep.subr.mxu0 0.0
    %405 = vmatpush1.msra.mxu0 0.0
    %406 = vmatprep.subr.mxu0 0.0
    %407 = vmatpush1.msra.mxu0 0.0
    %408 = vmatprep.subr.mxu0 0.0
    %409 = vmatpush1.msra.mxu0 0.0
    %410 = vmatprep.subr.mxu0 0.0
    %411 = vmatpush1.msra.mxu0 0.0
    %412 = vmatprep.subr.mxu0 0.0
    %413 = vmatpush1.msra.mxu0 0.0
    %414 = vmatprep.subr.mxu0 0.0
    %415 = vmatpush1.msra.mxu0 0.0
    %416 = vmatprep.subr.mxu0 0.0
    %417 = vmatpush1.msra.mxu0 0.0
    %418 = vmatprep.subr.mxu0 0.0
    %419 = vmatpush1.msra.mxu0 0.0
    %420 = vmatprep.subr.mxu0 0.0
    %421 = vmatpush1.msra.mxu0 0.0
    %422 = vmatprep.subr.mxu0 0.0
    %423 = vmatpush1.msra.mxu0 0.0
    %424 = vmatprep.subr.mxu0 0.0
    %425 = vmatpush1.msra.mxu0 0.0
    %426 = vmatprep.subr.mxu0 0.0
    %427 = vmatpush1.msra.mxu0 0.0
    %428 = vmatprep.subr.mxu0 0.0
    %429 = vmatpush1.msra.mxu0 0.0
    %430 = vmatprep.subr.mxu0 0.0
    %431 = vmatpush1.msra.mxu0 0.0
    %432 = vmatprep.subr.mxu0 0.0
    %433 = vmatpush1.msra.mxu0 0.0
    %434 = vmatprep.subr.mxu0 0.0
    %435 = vmatpush1.msra.mxu0 0.0
    %436 = vmatprep.subr.mxu0 0.0
    %437 = vmatpush1.msra.mxu0 0.0
    %438 = vmatprep.subr.mxu0 0.0
    %439 = vmatpush1.msra.mxu0 0.0
    %440 = vmatprep.subr.mxu0 0.0
    %441 = vmatpush1.msra.mxu0 0.0
    %442 = vmatprep.subr.mxu0 0.0
    %443 = vmatpush1.msra.mxu0 0.0
    %444 = vmatprep.subr.mxu0 0.0
    %445 = vmatpush1.msra.mxu0 0.0
    %446 = vmatprep.subr.mxu0 0.0
    %447 = vmatpush1.msra.mxu0 0.0
    %448 = vmatprep.subr.mxu0 0.0
    %449 = vmatpush1.msra.mxu0 0.0
    %450 = vmatprep.subr.mxu0 0.0
    %451 = vmatpush1.msra.mxu0 0.0
    %452 = vmatprep.subr.mxu0 0.0
    %453 = vmatpush1.msra.mxu0 0.0
    %454 = vmatprep.subr.mxu0 0.0
    %455 = vmatpush1.msra.mxu0 0.0
    %456 = vmatprep.subr.mxu0 0.0
    %457 = vmatpush1.msra.mxu0 0.0
    %458 = vmatprep.subr.mxu0 0.0
    %459 = vmatpush1.msra.mxu0 0.0
    %460 = vmatprep.subr.mxu0 0.0
    %461 = vmatpush1.msra.mxu0 0.0
    %462 = vmatprep.subr.mxu0 0.0
    %463 = vmatpush1.msra.mxu0 0.0
    %464 = vmatprep.mubr.f32.mxu0 0.0
    %465 = vmatmul.mubr.f32.gmra.mrb[0].mxu0 %v398
    %v466 = vpop.f32.mrb[0].mxu0
    %v467 = vadd.f32 0.0, %v466
    %v468 = vpop.f32.mrb[0].mxu0
    %469 = vdwg.mxu0
    %v471 = vsel %vm69, %v390, 0
    %473 = vmatprep.subr.mxu0 0.0
    %474 = vmatpush1.msra.mxu0 %v151
    %475 = vmatprep.subr.mxu0 0.0
    %476 = vmatpush1.msra.mxu0 0.0
    %477 = vmatprep.subr.mxu0 0.0
    %478 = vmatpush1.msra.mxu0 0.0
    %479 = vmatprep.subr.mxu0 0.0
    %480 = vmatpush1.msra.mxu0 0.0
    %481 = vmatprep.subr.mxu0 0.0
    %482 = vmatpush1.msra.mxu0 0.0
    %483 = vmatprep.subr.mxu0 0.0
    %484 = vmatpush1.msra.mxu0 0.0
    %485 = vmatprep.subr.mxu0 0.0
    %486 = vmatpush1.msra.mxu0 0.0
    %487 = vmatprep.subr.mxu0 0.0
    %488 = vmatpush1.msra.mxu0 0.0
    %489 = vmatprep.subr.mxu0 0.0
    %490 = vmatpush1.msra.mxu0 0.0
    %491 = vmatprep.subr.mxu0 0.0
    %492 = vmatpush1.msra.mxu0 0.0
    %493 = vmatprep.subr.mxu0 0.0
    %494 = vmatpush1.msra.mxu0 0.0
    %495 = vmatprep.subr.mxu0 0.0
    %496 = vmatpush1.msra.mxu0 0.0
    %497 = vmatprep.subr.mxu0 0.0
    %498 = vmatpush1.msra.mxu0 0.0
    %499 = vmatprep.subr.mxu0 0.0
    %500 = vmatpush1.msra.mxu0 0.0
    %501 = vmatprep.subr.mxu0 0.0
    %502 = vmatpush1.msra.mxu0 0.0
    %503 = vmatprep.subr.mxu0 0.0
    %504 = vmatpush1.msra.mxu0 0.0
    %505 = vmatprep.subr.mxu0 0.0
    %506 = vmatpush1.msra.mxu0 0.0
    %507 = vmatprep.subr.mxu0 0.0
    %508 = vmatpush1.msra.mxu0 0.0
    %509 = vmatprep.subr.mxu0 0.0
    %510 = vmatpush1.msra.mxu0 0.0
    %511 = vmatprep.subr.mxu0 0.0
    %512 = vmatpush1.msra.mxu0 0.0
    %513 = vmatprep.subr.mxu0 0.0
    %514 = vmatpush1.msra.mxu0 0.0
    %515 = vmatprep.subr.mxu0 0.0
    %516 = vmatpush1.msra.mxu0 0.0
    %517 = vmatprep.subr.mxu0 0.0
    %518 = vmatpush1.msra.mxu0 0.0
    %519 = vmatprep.subr.mxu0 0.0
    %520 = vmatpush1.msra.mxu0 0.0
    %521 = vmatprep.subr.mxu0 0.0
    %522 = vmatpush1.msra.mxu0 0.0
    %523 = vmatprep.subr.mxu0 0.0
    %524 = vmatpush1.msra.mxu0 0.0
    %525 = vmatprep.subr.mxu0 0.0
    %526 = vmatpush1.msra.mxu0 0.0
    %527 = vmatprep.subr.mxu0 0.0
    %528 = vmatpush1.msra.mxu0 0.0
    %529 = vmatprep.subr.mxu0 0.0
    %530 = vmatpush1.msra.mxu0 0.0
    %531 = vmatprep.subr.mxu0 0.0
    %532 = vmatpush1.msra.mxu0 0.0
    %533 = vmatprep.subr.mxu0 0.0
    %534 = vmatpush1.msra.mxu0 0.0
    %535 = vmatprep.subr.mxu0 0.0
    %536 = vmatpush1.msra.mxu0 0.0
    %537 = vmatprep.mubr.f32.mxu0 0.0
    %538 = vmatmul.mubr.f32.gmra.mrb[0].mxu0 %v471
    %v539 = vpop.f32.mrb[0].mxu0
    %v540 = vadd.f32 %v467, %v539
    %v541 = vpop.f32.mrb[0].mxu0
    %542 = vdwg.mxu0
    %v544 = vsel %vm69, %v396, 0
    %546 = vmatprep.subr.mxu0 0.0
    %547 = vmatpush1.msra.mxu0 %v75
    %548 = vmatprep.subr.mxu0 0.0
    %549 = vmatpush1.msra.mxu0 0.0
    %550 = vmatprep.subr.mxu0 0.0
    %551 = vmatpush1.msra.mxu0 0.0
    %552 = vmatprep.subr.mxu0 0.0
    %553 = vmatpush1.msra.mxu0 0.0
    %554 = vmatprep.subr.mxu0 0.0
    %555 = vmatpush1.msra.mxu0 0.0
    %556 = vmatprep.subr.mxu0 0.0
    %557 = vmatpush1.msra.mxu0 0.0
    %558 = vmatprep.subr.mxu0 0.0
    %559 = vmatpush1.msra.mxu0 0.0
    %560 = vmatprep.subr.mxu0 0.0
    %561 = vmatpush1.msra.mxu0 0.0
    %562 = vmatprep.subr.mxu0 0.0
    %563 = vmatpush1.msra.mxu0 0.0
    %564 = vmatprep.subr.mxu0 0.0
    %565 = vmatpush1.msra.mxu0 0.0
    %566 = vmatprep.subr.mxu0 0.0
    %567 = vmatpush1.msra.mxu0 0.0
    %568 = vmatprep.subr.mxu0 0.0
    %569 = vmatpush1.msra.mxu0 0.0
    %570 = vmatprep.subr.mxu0 0.0
    %571 = vmatpush1.msra.mxu0 0.0
    %572 = vmatprep.subr.mxu0 0.0
    %573 = vmatpush1.msra.mxu0 0.0
    %574 = vmatprep.subr.mxu0 0.0
    %575 = vmatpush1.msra.mxu0 0.0
    %576 = vmatprep.subr.mxu0 0.0
    %577 = vmatpush1.msra.mxu0 0.0
    %578 = vmatprep.subr.mxu0 0.0
    %579 = vmatpush1.msra.mxu0 0.0
    %580 = vmatprep.subr.mxu0 0.0
    %581 = vmatpush1.msra.mxu0 0.0
    %582 = vmatprep.subr.mxu0 0.0
    %583 = vmatpush1.msra.mxu0 0.0
    %584 = vmatprep.subr.mxu0 0.0
    %585 = vmatpush1.msra.mxu0 0.0
    %586 = vmatprep.subr.mxu0 0.0
    %587 = vmatpush1.msra.mxu0 0.0
    %588 = vmatprep.subr.mxu0 0.0
    %589 = vmatpush1.msra.mxu0 0.0
    %590 = vmatprep.subr.mxu0 0.0
    %591 = vmatpush1.msra.mxu0 0.0
    %592 = vmatprep.subr.mxu0 0.0
    %593 = vmatpush1.msra.mxu0 0.0
    %594 = vmatprep.subr.mxu0 0.0
    %595 = vmatpush1.msra.mxu0 0.0
    %596 = vmatprep.subr.mxu0 0.0
    %597 = vmatpush1.msra.mxu0 0.0
    %598 = vmatprep.subr.mxu0 0.0
    %599 = vmatpush1.msra.mxu0 0.0
    %600 = vmatprep.subr.mxu0 0.0
    %601 = vmatpush1.msra.mxu0 0.0
    %602 = vmatprep.subr.mxu0 0.0
    %603 = vmatpush1.msra.mxu0 0.0
    %604 = vmatprep.subr.mxu0 0.0
    %605 = vmatpush1.msra.mxu0 0.0
    %606 = vmatprep.subr.mxu0 0.0
    %607 = vmatpush1.msra.mxu0 0.0
    %608 = vmatprep.subr.mxu0 0.0
    %609 = vmatpush1.msra.mxu0 0.0
    %610 = vmatprep.mubr.f32.mxu0 0.0
    %611 = vmatmul.mubr.f32.gmra.mrb[0].mxu0 %v544
    %v612 = vpop.f32.mrb[0].mxu0
    %v613 = vadd.f32 0.0, %v612
    %v614 = vpop.f32.mrb[0].mxu0
    %615 = vdwg.mxu0
    %v617 = vsel %vm69, %v394, 0
    %619 = vmatprep.subr.mxu0 0.0
    %620 = vmatpush1.msra.mxu0 %v151
    %621 = vmatprep.subr.mxu0 0.0
    %622 = vmatpush1.msra.mxu0 0.0
    %623 = vmatprep.subr.mxu0 0.0
    %624 = vmatpush1.msra.mxu0 0.0
    %625 = vmatprep.subr.mxu0 0.0
    %626 = vmatpush1.msra.mxu0 0.0
    %627 = vmatprep.subr.mxu0 0.0
    %628 = vmatpush1.msra.mxu0 0.0
    %629 = vmatprep.subr.mxu0 0.0
    %630 = vmatpush1.msra.mxu0 0.0
    %631 = vmatprep.subr.mxu0 0.0
    %632 = vmatpush1.msra.mxu0 0.0
    %633 = vmatprep.subr.mxu0 0.0
    %634 = vmatpush1.msra.mxu0 0.0
    %635 = vmatprep.subr.mxu0 0.0
    %636 = vmatpush1.msra.mxu0 0.0
    %637 = vmatprep.subr.mxu0 0.0
    %638 = vmatpush1.msra.mxu0 0.0
    %639 = vmatprep.subr.mxu0 0.0
    %640 = vmatpush1.msra.mxu0 0.0
    %641 = vmatprep.subr.mxu0 0.0
    %642 = vmatpush1.msra.mxu0 0.0
    %643 = vmatprep.subr.mxu0 0.0
    %644 = vmatpush1.msra.mxu0 0.0
    %645 = vmatprep.subr.mxu0 0.0
    %646 = vmatpush1.msra.mxu0 0.0
    %647 = vmatprep.subr.mxu0 0.0
    %648 = vmatpush1.msra.mxu0 0.0
    %649 = vmatprep.subr.mxu0 0.0
    %650 = vmatpush1.msra.mxu0 0.0
    %651 = vmatprep.subr.mxu0 0.0
    %652 = vmatpush1.msra.mxu0 0.0
    %653 = vmatprep.subr.mxu0 0.0
    %654 = vmatpush1.msra.mxu0 0.0
    %655 = vmatprep.subr.mxu0 0.0
    %656 = vmatpush1.msra.mxu0 0.0
    %657 = vmatprep.subr.mxu0 0.0
    %658 = vmatpush1.msra.mxu0 0.0
    %659 = vmatprep.subr.mxu0 0.0
    %660 = vmatpush1.msra.mxu0 0.0
    %661 = vmatprep.subr.mxu0 0.0
    %662 = vmatpush1.msra.mxu0 0.0
    %663 = vmatprep.subr.mxu0 0.0
    %664 = vmatpush1.msra.mxu0 0.0
    %665 = vmatprep.subr.mxu0 0.0
    %666 = vmatpush1.msra.mxu0 0.0
    %667 = vmatprep.subr.mxu0 0.0
    %668 = vmatpush1.msra.mxu0 0.0
    %669 = vmatprep.subr.mxu0 0.0
    %670 = vmatpush1.msra.mxu0 0.0
    %671 = vmatprep.subr.mxu0 0.0
    %672 = vmatpush1.msra.mxu0 0.0
    %673 = vmatprep.subr.mxu0 0.0
    %674 = vmatpush1.msra.mxu0 0.0
    %675 = vmatprep.subr.mxu0 0.0
    %676 = vmatpush1.msra.mxu0 0.0
    %677 = vmatprep.subr.mxu0 0.0
    %678 = vmatpush1.msra.mxu0 0.0
    %679 = vmatprep.subr.mxu0 0.0
    %680 = vmatpush1.msra.mxu0 0.0
    %681 = vmatprep.subr.mxu0 0.0
    %682 = vmatpush1.msra.mxu0 0.0
    %683 = vmatprep.mubr.f32.mxu0 0.0
    %684 = vmatmul.mubr.f32.gmra.mrb[0].mxu0 %v617
    %v685 = vpop.f32.mrb[0].mxu0
    %v686 = vadd.f32 %v613, %v685
    %v687 = vpop.f32.mrb[0].mxu0
    %688 = vdwg.mxu0
    %s689 = scalar_lea.vmem %s2, 4
    %690 = vst.msk [vmem:[%s689] sm:$0xf] %vm369, %v540
    %692 = vrot.lane.b32.xlu0 %v686, 8
    %v693 = vpop.permute.xlu0 %692
    %695 = vst.msk [vmem:[%s689] sm:$0xf] %vm375, %v693
    %s696 = scalar_lea.vmem [#allocation2], 8
    %v697 = vld [vmem:[%s696] sm:$0xf]
    %s698 = scalar_lea.vmem [#allocation4], 24
    %v699 = vld [vmem:[%s698] sm:$0xf]
    %s700 = scalar_lea.vmem [#allocation4], 28
    %v701 = vld [vmem:[%s700] sm:$0xf]
    %s702 = scalar_lea.vmem [#allocation4], 32
    %v703 = vld [vmem:[%s702] sm:$0xf]
    %v704 = vadd.f32 %v697, %v699
    %v705 = vsub.f32 %v697, %v699
    %v706 = vadd.f32 %v701, %v703
    %v707 = vsub.f32 %v701, %v703
    %v708 = vadd.f32 %v704, %v706
    %v709 = vmul.f32 %v708, 0.5
    %v710 = vsub.f32 %v704, %v706
    %v711 = vmul.f32 %v710, 0.5
    %v712 = vadd.f32 %v705, %v707
    %v713 = vmul.f32 %v712, 0.5
    %v714 = vsub.f32 %v705, %v707
    %v715 = vmul.f32 %v714, 0.5
    %v717 = vsel %vm69, %v711, 0
    %719 = vmatprep.subr.mxu0 0.0
    %720 = vmatpush1.msra.mxu0 %v75
    %721 = vmatprep.subr.mxu0 0.0
    %722 = vmatpush1.msra.mxu0 0.0
    %723 = vmatprep.subr.mxu0 0.0
    %724 = vmatpush1.msra.mxu0 0.0
    %725 = vmatprep.subr.mxu0 0.0
    %726 = vmatpush1.msra.mxu0 0.0
    %727 = vmatprep.subr.mxu0 0.0
    %728 = vmatpush1.msra.mxu0 0.0
    %729 = vmatprep.subr.mxu0 0.0
    %730 = vmatpush1.msra.mxu0 0.0
    %731 = vmatprep.subr.mxu0 0.0
    %732 = vmatpush1.msra.mxu0 0.0
    %733 = vmatprep.subr.mxu0 0.0
    %734 = vmatpush1.msra.mxu0 0.0
    %735 = vmatprep.subr.mxu0 0.0
    %736 = vmatpush1.msra.mxu0 0.0
    %737 = vmatprep.subr.mxu0 0.0
    %738 = vmatpush1.msra.mxu0 0.0
    %739 = vmatprep.subr.mxu0 0.0
    %740 = vmatpush1.msra.mxu0 0.0
    %741 = vmatprep.subr.mxu0 0.0
    %742 = vmatpush1.msra.mxu0 0.0
    %743 = vmatprep.subr.mxu0 0.0
    %744 = vmatpush1.msra.mxu0 0.0
    %745 = vmatprep.subr.mxu0 0.0
    %746 = vmatpush1.msra.mxu0 0.0
    %747 = vmatprep.subr.mxu0 0.0
    %748 = vmatpush1.msra.mxu0 0.0
    %749 = vmatprep.subr.mxu0 0.0
    %750 = vmatpush1.msra.mxu0 0.0
    %751 = vmatprep.subr.mxu0 0.0
    %752 = vmatpush1.msra.mxu0 0.0
    %753 = vmatprep.subr.mxu0 0.0
    %754 = vmatpush1.msra.mxu0 0.0
    %755 = vmatprep.subr.mxu0 0.0
    %756 = vmatpush1.msra.mxu0 0.0
    %757 = vmatprep.subr.mxu0 0.0
    %758 = vmatpush1.msra.mxu0 0.0
    %759 = vmatprep.subr.mxu0 0.0
    %760 = vmatpush1.msra.mxu0 0.0
    %761 = vmatprep.subr.mxu0 0.0
    %762 = vmatpush1.msra.mxu0 0.0
    %763 = vmatprep.subr.mxu0 0.0
    %764 = vmatpush1.msra.mxu0 0.0
    %765 = vmatprep.subr.mxu0 0.0
    %766 = vmatpush1.msra.mxu0 0.0
    %767 = vmatprep.subr.mxu0 0.0
    %768 = vmatpush1.msra.mxu0 0.0
    %769 = vmatprep.subr.mxu0 0.0
    %770 = vmatpush1.msra.mxu0 0.0
    %771 = vmatprep.subr.mxu0 0.0
    %772 = vmatpush1.msra.mxu0 0.0
    %773 = vmatprep.subr.mxu0 0.0
    %774 = vmatpush1.msra.mxu0 0.0
    %775 = vmatprep.subr.mxu0 0.0
    %776 = vmatpush1.msra.mxu0 0.0
    %777 = vmatprep.subr.mxu0 0.0
    %778 = vmatpush1.msra.mxu0 0.0
    %779 = vmatprep.subr.mxu0 0.0
    %780 = vmatpush1.msra.mxu0 0.0
    %781 = vmatprep.subr.mxu0 0.0
    %782 = vmatpush1.msra.mxu0 0.0
    %783 = vmatprep.mubr.f32.mxu0 0.0
    %784 = vmatmul.mubr.f32.gmra.mrb[0].mxu0 %v717
    %v785 = vpop.f32.mrb[0].mxu0
    %v786 = vadd.f32 0.0, %v785
    %v787 = vpop.f32.mrb[0].mxu0
    %788 = vdwg.mxu0
    %v790 = vsel %vm69, %v709, 0
    %792 = vmatprep.subr.mxu0 0.0
    %793 = vmatpush1.msra.mxu0 %v151
    %794 = vmatprep.subr.mxu0 0.0
    %795 = vmatpush1.msra.mxu0 0.0
    %796 = vmatprep.subr.mxu0 0.0
    %797 = vmatpush1.msra.mxu0 0.0
    %798 = vmatprep.subr.mxu0 0.0
    %799 = vmatpush1.msra.mxu0 0.0
    %800 = vmatprep.subr.mxu0 0.0
    %801 = vmatpush1.msra.mxu0 0.0
    %802 = vmatprep.subr.mxu0 0.0
    %803 = vmatpush1.msra.mxu0 0.0
    %804 = vmatprep.subr.mxu0 0.0
    %805 = vmatpush1.msra.mxu0 0.0
    %806 = vmatprep.subr.mxu0 0.0
    %807 = vmatpush1.msra.mxu0 0.0
    %808 = vmatprep.subr.mxu0 0.0
    %809 = vmatpush1.msra.mxu0 0.0
    %810 = vmatprep.subr.mxu0 0.0
    %811 = vmatpush1.msra.mxu0 0.0
    %812 = vmatprep.subr.mxu0 0.0
    %813 = vmatpush1.msra.mxu0 0.0
    %814 = vmatprep.subr.mxu0 0.0
    %815 = vmatpush1.msra.mxu0 0.0
    %816 = vmatprep.subr.mxu0 0.0
    %817 = vmatpush1.msra.mxu0 0.0
    %818 = vmatprep.subr.mxu0 0.0
    %819 = vmatpush1.msra.mxu0 0.0
    %820 = vmatprep.subr.mxu0 0.0
    %821 = vmatpush1.msra.mxu0 0.0
    %822 = vmatprep.subr.mxu0 0.0
    %823 = vmatpush1.msra.mxu0 0.0
    %824 = vmatprep.subr.mxu0 0.0
    %825 = vmatpush1.msra.mxu0 0.0
    %826 = vmatprep.subr.mxu0 0.0
    %827 = vmatpush1.msra.mxu0 0.0
    %828 = vmatprep.subr.mxu0 0.0
    %829 = vmatpush1.msra.mxu0 0.0
    %830 = vmatprep.subr.mxu0 0.0
    %831 = vmatpush1.msra.mxu0 0.0
    %832 = vmatprep.subr.mxu0 0.0
    %833 = vmatpush1.msra.mxu0 0.0
    %834 = vmatprep.subr.mxu0 0.0
    %835 = vmatpush1.msra.mxu0 0.0
    %836 = vmatprep.subr.mxu0 0.0
    %837 = vmatpush1.msra.mxu0 0.0
    %838 = vmatprep.subr.mxu0 0.0
    %839 = vmatpush1.msra.mxu0 0.0
    %840 = vmatprep.subr.mxu0 0.0
    %841 = vmatpush1.msra.mxu0 0.0
    %842 = vmatprep.subr.mxu0 0.0
    %843 = vmatpush1.msra.mxu0 0.0
    %844 = vmatprep.subr.mxu0 0.0
    %845 = vmatpush1.msra.mxu0 0.0
    %846 = vmatprep.subr.mxu0 0.0
    %847 = vmatpush1.msra.mxu0 0.0
    %848 = vmatprep.subr.mxu0 0.0
    %849 = vmatpush1.msra.mxu0 0.0
    %850 = vmatprep.subr.mxu0 0.0
    %851 = vmatpush1.msra.mxu0 0.0
    %852 = vmatprep.subr.mxu0 0.0
    %853 = vmatpush1.msra.mxu0 0.0
    %854 = vmatprep.subr.mxu0 0.0
    %855 = vmatpush1.msra.mxu0 0.0
    %856 = vmatprep.mubr.f32.mxu0 0.0
    %857 = vmatmul.mubr.f32.gmra.mrb[0].mxu0 %v790
    %v858 = vpop.f32.mrb[0].mxu0
    %v859 = vadd.f32 %v786, %v858
    %v860 = vpop.f32.mrb[0].mxu0
    %861 = vdwg.mxu0
    %v863 = vsel %vm69, %v715, 0
    %865 = vmatprep.subr.mxu0 0.0
    %866 = vmatpush1.msra.mxu0 %v75
    %867 = vmatprep.subr.mxu0 0.0
    %868 = vmatpush1.msra.mxu0 0.0
    %869 = vmatprep.subr.mxu0 0.0
    %870 = vmatpush1.msra.mxu0 0.0
    %871 = vmatprep.subr.mxu0 0.0
    %872 = vmatpush1.msra.mxu0 0.0
    %873 = vmatprep.subr.mxu0 0.0
    %874 = vmatpush1.msra.mxu0 0.0
    %875 = vmatprep.subr.mxu0 0.0
    %876 = vmatpush1.msra.mxu0 0.0
    %877 = vmatprep.subr.mxu0 0.0
    %878 = vmatpush1.msra.mxu0 0.0
    %879 = vmatprep.subr.mxu0 0.0
    %880 = vmatpush1.msra.mxu0 0.0
    %881 = vmatprep.subr.mxu0 0.0
    %882 = vmatpush1.msra.mxu0 0.0
    %883 = vmatprep.subr.mxu0 0.0
    %884 = vmatpush1.msra.mxu0 0.0
    %885 = vmatprep.subr.mxu0 0.0
    %886 = vmatpush1.msra.mxu0 0.0
    %887 = vmatprep.subr.mxu0 0.0
    %888 = vmatpush1.msra.mxu0 0.0
    %889 = vmatprep.subr.mxu0 0.0
    %890 = vmatpush1.msra.mxu0 0.0
    %891 = vmatprep.subr.mxu0 0.0
    %892 = vmatpush1.msra.mxu0 0.0
    %893 = vmatprep.subr.mxu0 0.0
    %894 = vmatpush1.msra.mxu0 0.0
    %895 = vmatprep.subr.mxu0 0.0
    %896 = vmatpush1.msra.mxu0 0.0
    %897 = vmatprep.subr.mxu0 0.0
    %898 = vmatpush1.msra.mxu0 0.0
    %899 = vmatprep.subr.mxu0 0.0
    %900 = vmatpush1.msra.mxu0 0.0
    %901 = vmatprep.subr.mxu0 0.0
    %902 = vmatpush1.msra.mxu0 0.0
    %903 = vmatprep.subr.mxu0 0.0
    %904 = vmatpush1.msra.mxu0 0.0
    %905 = vmatprep.subr.mxu0 0.0
    %906 = vmatpush1.msra.mxu0 0.0
    %907 = vmatprep.subr.mxu0 0.0
    %908 = vmatpush1.msra.mxu0 0.0
    %909 = vmatprep.subr.mxu0 0.0
    %910 = vmatpush1.msra.mxu0 0.0
    %911 = vmatprep.subr.mxu0 0.0
    %912 = vmatpush1.msra.mxu0 0.0
    %913 = vmatprep.subr.mxu0 0.0
    %914 = vmatpush1.msra.mxu0 0.0
    %915 = vmatprep.subr.mxu0 0.0
    %916 = vmatpush1.msra.mxu0 0.0
    %917 = vmatprep.subr.mxu0 0.0
    %918 = vmatpush1.msra.mxu0 0.0
    %919 = vmatprep.subr.mxu0 0.0
    %920 = vmatpush1.msra.mxu0 0.0
    %921 = vmatprep.subr.mxu0 0.0
    %922 = vmatpush1.msra.mxu0 0.0
    %923 = vmatprep.subr.mxu0 0.0
    %924 = vmatpush1.msra.mxu0 0.0
    %925 = vmatprep.subr.mxu0 0.0
    %926 = vmatpush1.msra.mxu0 0.0
    %927 = vmatprep.subr.mxu0 0.0
    %928 = vmatpush1.msra.mxu0 0.0
    %929 = vmatprep.mubr.f32.mxu0 0.0
    %930 = vmatmul.mubr.f32.gmra.mrb[0].mxu0 %v863
    %v931 = vpop.f32.mrb[0].mxu0
    %v932 = vadd.f32 0.0, %v931
    %v933 = vpop.f32.mrb[0].mxu0
    %934 = vdwg.mxu0
    %v936 = vsel %vm69, %v713, 0
    %938 = vmatprep.subr.mxu0 0.0
    %939 = vmatpush1.msra.mxu0 %v151
    %940 = vmatprep.subr.mxu0 0.0
    %941 = vmatpush1.msra.mxu0 0.0
    %942 = vmatprep.subr.mxu0 0.0
    %943 = vmatpush1.msra.mxu0 0.0
    %944 = vmatprep.subr.mxu0 0.0
    %945 = vmatpush1.msra.mxu0 0.0
    %946 = vmatprep.subr.mxu0 0.0
    %947 = vmatpush1.msra.mxu0 0.0
    %948 = vmatprep.subr.mxu0 0.0
    %949 = vmatpush1.msra.mxu0 0.0
    %950 = vmatprep.subr.mxu0 0.0
    %951 = vmatpush1.msra.mxu0 0.0
    %952 = vmatprep.subr.mxu0 0.0
    %953 = vmatpush1.msra.mxu0 0.0
    %954 = vmatprep.subr.mxu0 0.0
    %955 = vmatpush1.msra.mxu0 0.0
    %956 = vmatprep.subr.mxu0 0.0
    %957 = vmatpush1.msra.mxu0 0.0
    %958 = vmatprep.subr.mxu0 0.0
    %959 = vmatpush1.msra.mxu0 0.0
    %960 = vmatprep.subr.mxu0 0.0
    %961 = vmatpush1.msra.mxu0 0.0
    %962 = vmatprep.subr.mxu0 0.0
    %963 = vmatpush1.msra.mxu0 0.0
    %964 = vmatprep.subr.mxu0 0.0
    %965 = vmatpush1.msra.mxu0 0.0
    %966 = vmatprep.subr.mxu0 0.0
    %967 = vmatpush1.msra.mxu0 0.0
    %968 = vmatprep.subr.mxu0 0.0
    %969 = vmatpush1.msra.mxu0 0.0
    %970 = vmatprep.subr.mxu0 0.0
    %971 = vmatpush1.msra.mxu0 0.0
    %972 = vmatprep.subr.mxu0 0.0
    %973 = vmatpush1.msra.mxu0 0.0
    %974 = vmatprep.subr.mxu0 0.0
    %975 = vmatpush1.msra.mxu0 0.0
    %976 = vmatprep.subr.mxu0 0.0
    %977 = vmatpush1.msra.mxu0 0.0
    %978 = vmatprep.subr.mxu0 0.0
    %979 = vmatpush1.msra.mxu0 0.0
    %980 = vmatprep.subr.mxu0 0.0
    %981 = vmatpush1.msra.mxu0 0.0
    %982 = vmatprep.subr.mxu0 0.0
    %983 = vmatpush1.msra.mxu0 0.0
    %984 = vmatprep.subr.mxu0 0.0
    %985 = vmatpush1.msra.mxu0 0.0
    %986 = vmatprep.subr.mxu0 0.0
    %987 = vmatpush1.msra.mxu0 0.0
    %988 = vmatprep.subr.mxu0 0.0
    %989 = vmatpush1.msra.mxu0 0.0
    %990 = vmatprep.subr.mxu0 0.0
    %991 = vmatpush1.msra.mxu0 0.0
    %992 = vmatprep.subr.mxu0 0.0
    %993 = vmatpush1.msra.mxu0 0.0
    %994 = vmatprep.subr.mxu0 0.0
    %995 = vmatpush1.msra.mxu0 0.0
    %996 = vmatprep.subr.mxu0 0.0
    %997 = vmatpush1.msra.mxu0 0.0
    %998 = vmatprep.subr.mxu0 0.0
    %999 = vmatpush1.msra.mxu0 0.0
    %1000 = vmatprep.subr.mxu0 0.0
    %1001 = vmatpush1.msra.mxu0 0.0
    %1002 = vmatprep.mubr.f32.mxu0 0.0
    %1003 = vmatmul.mubr.f32.gmra.mrb[0].mxu0 %v936
    %v1004 = vpop.f32.mrb[0].mxu0
    %v1005 = vadd.f32 %v932, %v1004
    %v1006 = vpop.f32.mrb[0].mxu0
    %1007 = vdwg.mxu0
    %s1008 = scalar_lea.vmem %s2, 8
    %1009 = vst.msk [vmem:[%s1008] sm:$0xf] %vm369, %v859
    %1011 = vrot.lane.b32.xlu0 %v1005, 8
    %v1012 = vpop.permute.xlu0 %1011
    %1014 = vst.msk [vmem:[%s1008] sm:$0xf] %vm375, %v1012
    %s1015 = scalar_lea.vmem [#allocation2], 12
    %v1016 = vld [vmem:[%s1015] sm:$0xf]
    %s1017 = scalar_lea.vmem [#allocation4], 36
    %v1018 = vld [vmem:[%s1017] sm:$0xf]
    %s1019 = scalar_lea.vmem [#allocation4], 40
    %v1020 = vld [vmem:[%s1019] sm:$0xf]
    %s1021 = scalar_lea.vmem [#allocation4], 44
    %v1022 = vld [vmem:[%s1021] sm:$0xf]
    %v1023 = vadd.f32 %v1016, %v1018
    %v1024 = vsub.f32 %v1016, %v1018
    %v1025 = vadd.f32 %v1020, %v1022
    %v1026 = vsub.f32 %v1020, %v1022
    %v1027 = vadd.f32 %v1023, %v1025
    %v1028 = vmul.f32 %v1027, 0.5
    %v1029 = vsub.f32 %v1023, %v1025
    %v1030 = vmul.f32 %v1029, 0.5
    %v1031 = vadd.f32 %v1024, %v1026
    %v1032 = vmul.f32 %v1031, 0.5
    %v1033 = vsub.f32 %v1024, %v1026
    %v1034 = vmul.f32 %v1033, 0.5
    %v1036 = vsel %vm69, %v1030, 0
    %1038 = vmatprep.subr.mxu0 0.0
    %1039 = vmatpush1.msra.mxu0 %v75
    %1040 = vmatprep.subr.mxu0 0.0
    %1041 = vmatpush1.msra.mxu0 0.0
    %1042 = vmatprep.subr.mxu0 0.0
    %1043 = vmatpush1.msra.mxu0 0.0
    %1044 = vmatprep.subr.mxu0 0.0
    %1045 = vmatpush1.msra.mxu0 0.0
    %1046 = vmatprep.subr.mxu0 0.0
    %1047 = vmatpush1.msra.mxu0 0.0
    %1048 = vmatprep.subr.mxu0 0.0
    %1049 = vmatpush1.msra.mxu0 0.0
    %1050 = vmatprep.subr.mxu0 0.0
    %1051 = vmatpush1.msra.mxu0 0.0
    %1052 = vmatprep.subr.mxu0 0.0
    %1053 = vmatpush1.msra.mxu0 0.0
    %1054 = vmatprep.subr.mxu0 0.0
    %1055 = vmatpush1.msra.mxu0 0.0
    %1056 = vmatprep.subr.mxu0 0.0
    %1057 = vmatpush1.msra.mxu0 0.0
    %1058 = vmatprep.subr.mxu0 0.0
    %1059 = vmatpush1.msra.mxu0 0.0
    %1060 = vmatprep.subr.mxu0 0.0
    %1061 = vmatpush1.msra.mxu0 0.0
    %1062 = vmatprep.subr.mxu0 0.0
    %1063 = vmatpush1.msra.mxu0 0.0
    %1064 = vmatprep.subr.mxu0 0.0
    %1065 = vmatpush1.msra.mxu0 0.0
    %1066 = vmatprep.subr.mxu0 0.0
    %1067 = vmatpush1.msra.mxu0 0.0
    %1068 = vmatprep.subr.mxu0 0.0
    %1069 = vmatpush1.msra.mxu0 0.0
    %1070 = vmatprep.subr.mxu0 0.0
    %1071 = vmatpush1.msra.mxu0 0.0
    %1072 = vmatprep.subr.mxu0 0.0
    %1073 = vmatpush1.msra.mxu0 0.0
    %1074 = vmatprep.subr.mxu0 0.0
    %1075 = vmatpush1.msra.mxu0 0.0
    %1076 = vmatprep.subr.mxu0 0.0
    %1077 = vmatpush1.msra.mxu0 0.0
    %1078 = vmatprep.subr.mxu0 0.0
    %1079 = vmatpush1.msra.mxu0 0.0
    %1080 = vmatprep.subr.mxu0 0.0
    %1081 = vmatpush1.msra.mxu0 0.0
    %1082 = vmatprep.subr.mxu0 0.0
    %1083 = vmatpush1.msra.mxu0 0.0
    %1084 = vmatprep.subr.mxu0 0.0
    %1085 = vmatpush1.msra.mxu0 0.0
    %1086 = vmatprep.subr.mxu0 0.0
    %1087 = vmatpush1.msra.mxu0 0.0
    %1088 = vmatprep.subr.mxu0 0.0
    %1089 = vmatpush1.msra.mxu0 0.0
    %1090 = vmatprep.subr.mxu0 0.0
    %1091 = vmatpush1.msra.mxu0 0.0
    %1092 = vmatprep.subr.mxu0 0.0
    %1093 = vmatpush1.msra.mxu0 0.0
    %1094 = vmatprep.subr.mxu0 0.0
    %1095 = vmatpush1.msra.mxu0 0.0
    %1096 = vmatprep.subr.mxu0 0.0
    %1097 = vmatpush1.msra.mxu0 0.0
    %1098 = vmatprep.subr.mxu0 0.0
    %1099 = vmatpush1.msra.mxu0 0.0
    %1100 = vmatprep.subr.mxu0 0.0
    %1101 = vmatpush1.msra.mxu0 0.0
    %1102 = vmatprep.mubr.f32.mxu0 0.0
    %1103 = vmatmul.mubr.f32.gmra.mrb[0].mxu0 %v1036
    %v1104 = vpop.f32.mrb[0].mxu0
    %v1105 = vadd.f32 0.0, %v1104
    %v1106 = vpop.f32.mrb[0].mxu0
    %1107 = vdwg.mxu0
    %v1109 = vsel %vm69, %v1028, 0
    %1111 = vmatprep.subr.mxu0 0.0
    %1112 = vmatpush1.msra.mxu0 %v151
    %1113 = vmatprep.subr.mxu0 0.0
    %1114 = vmatpush1.msra.mxu0 0.0
    %1115 = vmatprep.subr.mxu0 0.0
    %1116 = vmatpush1.msra.mxu0 0.0
    %1117 = vmatprep.subr.mxu0 0.0
    %1118 = vmatpush1.msra.mxu0 0.0
    %1119 = vmatprep.subr.mxu0 0.0
    %1120 = vmatpush1.msra.mxu0 0.0
    %1121 = vmatprep.subr.mxu0 0.0
    %1122 = vmatpush1.msra.mxu0 0.0
    %1123 = vmatprep.subr.mxu0 0.0
    %1124 = vmatpush1.msra.mxu0 0.0
    %1125 = vmatprep.subr.mxu0 0.0
    %1126 = vmatpush1.msra.mxu0 0.0
    %1127 = vmatprep.subr.mxu0 0.0
    %1128 = vmatpush1.msra.mxu0 0.0
    %1129 = vmatprep.subr.mxu0 0.0
    %1130 = vmatpush1.msra.mxu0 0.0
    %1131 = vmatprep.subr.mxu0 0.0
    %1132 = vmatpush1.msra.mxu0 0.0
    %1133 = vmatprep.subr.mxu0 0.0
    %1134 = vmatpush1.msra.mxu0 0.0
    %1135 = vmatprep.subr.mxu0 0.0
    %1136 = vmatpush1.msra.mxu0 0.0
    %1137 = vmatprep.subr.mxu0 0.0
    %1138 = vmatpush1.msra.mxu0 0.0
    %1139 = vmatprep.subr.mxu0 0.0
    %1140 = vmatpush1.msra.mxu0 0.0
    %1141 = vmatprep.subr.mxu0 0.0
    %1142 = vmatpush1.msra.mxu0 0.0
    %1143 = vmatprep.subr.mxu0 0.0
    %1144 = vmatpush1.msra.mxu0 0.0
    %1145 = vmatprep.subr.mxu0 0.0
    %1146 = vmatpush1.msra.mxu0 0.0
    %1147 = vmatprep.subr.mxu0 0.0
    %1148 = vmatpush1.msra.mxu0 0.0
    %1149 = vmatprep.subr.mxu0 0.0
    %1150 = vmatpush1.msra.mxu0 0.0
    %1151 = vmatprep.subr.mxu0 0.0
    %1152 = vmatpush1.msra.mxu0 0.0
    %1153 = vmatprep.subr.mxu0 0.0
    %1154 = vmatpush1.msra.mxu0 0.0
    %1155 = vmatprep.subr.mxu0 0.0
    %1156 = vmatpush1.msra.mxu0 0.0
    %1157 = vmatprep.subr.mxu0 0.0
    %1158 = vmatpush1.msra.mxu0 0.0
    %1159 = vmatprep.subr.mxu0 0.0
    %1160 = vmatpush1.msra.mxu0 0.0
    %1161 = vmatprep.subr.mxu0 0.0
    %1162 = vmatpush1.msra.mxu0 0.0
    %1163 = vmatprep.subr.mxu0 0.0
    %1164 = vmatpush1.msra.mxu0 0.0
    %1165 = vmatprep.subr.mxu0 0.0
    %1166 = vmatpush1.msra.mxu0 0.0
    %1167 = vmatprep.subr.mxu0 0.0
    %1168 = vmatpush1.msra.mxu0 0.0
    %1169 = vmatprep.subr.mxu0 0.0
    %1170 = vmatpush1.msra.mxu0 0.0
    %1171 = vmatprep.subr.mxu0 0.0
    %1172 = vmatpush1.msra.mxu0 0.0
    %1173 = vmatprep.subr.mxu0 0.0
    %1174 = vmatpush1.msra.mxu0 0.0
    %1175 = vmatprep.mubr.f32.mxu0 0.0
    %1176 = vmatmul.mubr.f32.gmra.mrb[0].mxu0 %v1109
    %v1177 = vpop.f32.mrb[0].mxu0
    %v1178 = vadd.f32 %v1105, %v1177
    %v1179 = vpop.f32.mrb[0].mxu0
    %1180 = vdwg.mxu0
    %v1182 = vsel %vm69, %v1034, 0
    %1184 = vmatprep.subr.mxu0 0.0
    %1185 = vmatpush1.msra.mxu0 %v75
    %1186 = vmatprep.subr.mxu0 0.0
    %1187 = vmatpush1.msra.mxu0 0.0
    %1188 = vmatprep.subr.mxu0 0.0
    %1189 = vmatpush1.msra.mxu0 0.0
    %1190 = vmatprep.subr.mxu0 0.0
    %1191 = vmatpush1.msra.mxu0 0.0
    %1192 = vmatprep.subr.mxu0 0.0
    %1193 = vmatpush1.msra.mxu0 0.0
    %1194 = vmatprep.subr.mxu0 0.0
    %1195 = vmatpush1.msra.mxu0 0.0
    %1196 = vmatprep.subr.mxu0 0.0
    %1197 = vmatpush1.msra.mxu0 0.0
    %1198 = vmatprep.subr.mxu0 0.0
    %1199 = vmatpush1.msra.mxu0 0.0
    %1200 = vmatprep.subr.mxu0 0.0
    %1201 = vmatpush1.msra.mxu0 0.0
    %1202 = vmatprep.subr.mxu0 0.0
    %1203 = vmatpush1.msra.mxu0 0.0
    %1204 = vmatprep.subr.mxu0 0.0
    %1205 = vmatpush1.msra.mxu0 0.0
    %1206 = vmatprep.subr.mxu0 0.0
    %1207 = vmatpush1.msra.mxu0 0.0
    %1208 = vmatprep.subr.mxu0 0.0
    %1209 = vmatpush1.msra.mxu0 0.0
    %1210 = vmatprep.subr.mxu0 0.0
    %1211 = vmatpush1.msra.mxu0 0.0
    %1212 = vmatprep.subr.mxu0 0.0
    %1213 = vmatpush1.msra.mxu0 0.0
    %1214 = vmatprep.subr.mxu0 0.0
    %1215 = vmatpush1.msra.mxu0 0.0
    %1216 = vmatprep.subr.mxu0 0.0
    %1217 = vmatpush1.msra.mxu0 0.0
    %1218 = vmatprep.subr.mxu0 0.0
    %1219 = vmatpush1.msra.mxu0 0.0
    %1220 = vmatprep.subr.mxu0 0.0
    %1221 = vmatpush1.msra.mxu0 0.0
    %1222 = vmatprep.subr.mxu0 0.0
    %1223 = vmatpush1.msra.mxu0 0.0
    %1224 = vmatprep.subr.mxu0 0.0
    %1225 = vmatpush1.msra.mxu0 0.0
    %1226 = vmatprep.subr.mxu0 0.0
    %1227 = vmatpush1.msra.mxu0 0.0
    %1228 = vmatprep.subr.mxu0 0.0
    %1229 = vmatpush1.msra.mxu0 0.0
    %1230 = vmatprep.subr.mxu0 0.0
    %1231 = vmatpush1.msra.mxu0 0.0
    %1232 = vmatprep.subr.mxu0 0.0
    %1233 = vmatpush1.msra.mxu0 0.0
    %1234 = vmatprep.subr.mxu0 0.0
    %1235 = vmatpush1.msra.mxu0 0.0
    %1236 = vmatprep.subr.mxu0 0.0
    %1237 = vmatpush1.msra.mxu0 0.0
    %1238 = vmatprep.subr.mxu0 0.0
    %1239 = vmatpush1.msra.mxu0 0.0
    %1240 = vmatprep.subr.mxu0 0.0
    %1241 = vmatpush1.msra.mxu0 0.0
    %1242 = vmatprep.subr.mxu0 0.0
    %1243 = vmatpush1.msra.mxu0 0.0
    %1244 = vmatprep.subr.mxu0 0.0
    %1245 = vmatpush1.msra.mxu0 0.0
    %1246 = vmatprep.subr.mxu0 0.0
    %1247 = vmatpush1.msra.mxu0 0.0
    %1248 = vmatprep.mubr.f32.mxu0 0.0
    %1249 = vmatmul.mubr.f32.gmra.mrb[0].mxu0 %v1182
    %v1250 = vpop.f32.mrb[0].mxu0
    %v1251 = vadd.f32 0.0, %v1250
    %v1252 = vpop.f32.mrb[0].mxu0
    %1253 = vdwg.mxu0
    %v1255 = vsel %vm69, %v1032, 0
    %1257 = vmatprep.subr.mxu0 0.0
    %1258 = vmatpush1.msra.mxu0 %v151
    %1259 = vmatprep.subr.mxu0 0.0
    %1260 = vmatpush1.msra.mxu0 0.0
    %1261 = vmatprep.subr.mxu0 0.0
    %1262 = vmatpush1.msra.mxu0 0.0
    %1263 = vmatprep.subr.mxu0 0.0
    %1264 = vmatpush1.msra.mxu0 0.0
    %1265 = vmatprep.subr.mxu0 0.0
    %1266 = vmatpush1.msra.mxu0 0.0
    %1267 = vmatprep.subr.mxu0 0.0
    %1268 = vmatpush1.msra.mxu0 0.0
    %1269 = vmatprep.subr.mxu0 0.0
    %1270 = vmatpush1.msra.mxu0 0.0
    %1271 = vmatprep.subr.mxu0 0.0
    %1272 = vmatpush1.msra.mxu0 0.0
    %1273 = vmatprep.subr.mxu0 0.0
    %1274 = vmatpush1.msra.mxu0 0.0
    %1275 = vmatprep.subr.mxu0 0.0
    %1276 = vmatpush1.msra.mxu0 0.0
    %1277 = vmatprep.subr.mxu0 0.0
    %1278 = vmatpush1.msra.mxu0 0.0
    %1279 = vmatprep.subr.mxu0 0.0
    %1280 = vmatpush1.msra.mxu0 0.0
    %1281 = vmatprep.subr.mxu0 0.0
    %1282 = vmatpush1.msra.mxu0 0.0
    %1283 = vmatprep.subr.mxu0 0.0
    %1284 = vmatpush1.msra.mxu0 0.0
    %1285 = vmatprep.subr.mxu0 0.0
    %1286 = vmatpush1.msra.mxu0 0.0
    %1287 = vmatprep.subr.mxu0 0.0
    %1288 = vmatpush1.msra.mxu0 0.0
    %1289 = vmatprep.subr.mxu0 0.0
    %1290 = vmatpush1.msra.mxu0 0.0
    %1291 = vmatprep.subr.mxu0 0.0
    %1292 = vmatpush1.msra.mxu0 0.0
    %1293 = vmatprep.subr.mxu0 0.0
    %1294 = vmatpush1.msra.mxu0 0.0
    %1295 = vmatprep.subr.mxu0 0.0
    %1296 = vmatpush1.msra.mxu0 0.0
    %1297 = vmatprep.subr.mxu0 0.0
    %1298 = vmatpush1.msra.mxu0 0.0
    %1299 = vmatprep.subr.mxu0 0.0
    %1300 = vmatpush1.msra.mxu0 0.0
    %1301 = vmatprep.subr.mxu0 0.0
    %1302 = vmatpush1.msra.mxu0 0.0
    %1303 = vmatprep.subr.mxu0 0.0
    %1304 = vmatpush1.msra.mxu0 0.0
    %1305 = vmatprep.subr.mxu0 0.0
    %1306 = vmatpush1.msra.mxu0 0.0
    %1307 = vmatprep.subr.mxu0 0.0
    %1308 = vmatpush1.msra.mxu0 0.0
    %1309 = vmatprep.subr.mxu0 0.0
    %1310 = vmatpush1.msra.mxu0 0.0
    %1311 = vmatprep.subr.mxu0 0.0
    %1312 = vmatpush1.msra.mxu0 0.0
    %1313 = vmatprep.subr.mxu0 0.0
    %1314 = vmatpush1.msra.mxu0 0.0
    %1315 = vmatprep.subr.mxu0 0.0
    %1316 = vmatpush1.msra.mxu0 0.0
    %1317 = vmatprep.subr.mxu0 0.0
    %1318 = vmatpush1.msra.mxu0 0.0
    %1319 = vmatprep.subr.mxu0 0.0
    %1320 = vmatpush1.msra.mxu0 0.0
    %1321 = vmatprep.mubr.f32.mxu0 0.0
    %1322 = vmatmul.mubr.f32.gmra.mrb[0].mxu0 %v1255
    %v1323 = vpop.f32.mrb[0].mxu0
    %v1324 = vadd.f32 %v1251, %v1323
    %v1325 = vpop.f32.mrb[0].mxu0
    %1326 = vdwg.mxu0
    %s1327 = scalar_lea.vmem %s2, 12
    %1328 = vst.msk [vmem:[%s1327] sm:$0xf] %vm369, %v1178
    %1330 = vrot.lane.b32.xlu0 %v1324, 8
    %v1331 = vpop.permute.xlu0 %1330
    %1333 = vst.msk [vmem:[%s1327] sm:$0xf] %vm375, %v1331
    %s1334 = scalar_lea.vmem [#allocation2], 16
    %v1335 = vld [vmem:[%s1334] sm:$0xf]
    %s1336 = scalar_lea.vmem [#allocation4], 48
    %v1337 = vld [vmem:[%s1336] sm:$0xf]
    %s1338 = scalar_lea.vmem [#allocation4], 52
    %v1339 = vld [vmem:[%s1338] sm:$0xf]
    %s1340 = scalar_lea.vmem [#allocation4], 56
    %v1341 = vld [vmem:[%s1340] sm:$0xf]
    %v1342 = vadd.f32 %v1335, %v1337
    %v1343 = vsub.f32 %v1335, %v1337
    %v1344 = vadd.f32 %v1339, %v1341
    %v1345 = vsub.f32 %v1339, %v1341
    %v1346 = vadd.f32 %v1342, %v1344
    %v1347 = vmul.f32 %v1346, 0.5
    %v1348 = vsub.f32 %v1342, %v1344
    %v1349 = vmul.f32 %v1348, 0.5
    %v1350 = vadd.f32 %v1343, %v1345
    %v1351 = vmul.f32 %v1350, 0.5
    %v1352 = vsub.f32 %v1343, %v1345
    %v1353 = vmul.f32 %v1352, 0.5
    %v1355 = vsel %vm69, %v1349, 0
    %1357 = vmatprep.subr.mxu0 0.0
    %1358 = vmatpush1.msra.mxu0 %v75
    %1359 = vmatprep.subr.mxu0 0.0
    %1360 = vmatpush1.msra.mxu0 0.0
    %1361 = vmatprep.subr.mxu0 0.0
    %1362 = vmatpush1.msra.mxu0 0.0
    %1363 = vmatprep.subr.mxu0 0.0
    %1364 = vmatpush1.msra.mxu0 0.0
    %1365 = vmatprep.subr.mxu0 0.0
    %1366 = vmatpush1.msra.mxu0 0.0
    %1367 = vmatprep.subr.mxu0 0.0
    %1368 = vmatpush1.msra.mxu0 0.0
    %1369 = vmatprep.subr.mxu0 0.0
    %1370 = vmatpush1.msra.mxu0 0.0
    %1371 = vmatprep.subr.mxu0 0.0
    %1372 = vmatpush1.msra.mxu0 0.0
    %1373 = vmatprep.subr.mxu0 0.0
    %1374 = vmatpush1.msra.mxu0 0.0
    %1375 = vmatprep.subr.mxu0 0.0
    %1376 = vmatpush1.msra.mxu0 0.0
    %1377 = vmatprep.subr.mxu0 0.0
    %1378 = vmatpush1.msra.mxu0 0.0
    %1379 = vmatprep.subr.mxu0 0.0
    %1380 = vmatpush1.msra.mxu0 0.0
    %1381 = vmatprep.subr.mxu0 0.0
    %1382 = vmatpush1.msra.mxu0 0.0
    %1383 = vmatprep.subr.mxu0 0.0
    %1384 = vmatpush1.msra.mxu0 0.0
    %1385 = vmatprep.subr.mxu0 0.0
    %1386 = vmatpush1.msra.mxu0 0.0
    %1387 = vmatprep.subr.mxu0 0.0
    %1388 = vmatpush1.msra.mxu0 0.0
    %1389 = vmatprep.subr.mxu0 0.0
    %1390 = vmatpush1.msra.mxu0 0.0
    %1391 = vmatprep.subr.mxu0 0.0
    %1392 = vmatpush1.msra.mxu0 0.0
    %1393 = vmatprep.subr.mxu0 0.0
    %1394 = vmatpush1.msra.mxu0 0.0
    %1395 = vmatprep.subr.mxu0 0.0
    %1396 = vmatpush1.msra.mxu0 0.0
    %1397 = vmatprep.subr.mxu0 0.0
    %1398 = vmatpush1.msra.mxu0 0.0
    %1399 = vmatprep.subr.mxu0 0.0
    %1400 = vmatpush1.msra.mxu0 0.0
    %1401 = vmatprep.subr.mxu0 0.0
    %1402 = vmatpush1.msra.mxu0 0.0
    %1403 = vmatprep.subr.mxu0 0.0
    %1404 = vmatpush1.msra.mxu0 0.0
    %1405 = vmatprep.subr.mxu0 0.0
    %1406 = vmatpush1.msra.mxu0 0.0
    %1407 = vmatprep.subr.mxu0 0.0
    %1408 = vmatpush1.msra.mxu0 0.0
    %1409 = vmatprep.subr.mxu0 0.0
    %1410 = vmatpush1.msra.mxu0 0.0
    %1411 = vmatprep.subr.mxu0 0.0
    %1412 = vmatpush1.msra.mxu0 0.0
    %1413 = vmatprep.subr.mxu0 0.0
    %1414 = vmatpush1.msra.mxu0 0.0
    %1415 = vmatprep.subr.mxu0 0.0
    %1416 = vmatpush1.msra.mxu0 0.0
    %1417 = vmatprep.subr.mxu0 0.0
    %1418 = vmatpush1.msra.mxu0 0.0
    %1419 = vmatprep.subr.mxu0 0.0
    %1420 = vmatpush1.msra.mxu0 0.0
    %1421 = vmatprep.mubr.f32.mxu0 0.0
    %1422 = vmatmul.mubr.f32.gmra.mrb[0].mxu0 %v1355
    %v1423 = vpop.f32.mrb[0].mxu0
    %v1424 = vadd.f32 0.0, %v1423
    %v1425 = vpop.f32.mrb[0].mxu0
    %1426 = vdwg.mxu0
    %v1428 = vsel %vm69, %v1347, 0
    %1430 = vmatprep.subr.mxu0 0.0
    %1431 = vmatpush1.msra.mxu0 %v151
    %1432 = vmatprep.subr.mxu0 0.0
    %1433 = vmatpush1.msra.mxu0 0.0
    %1434 = vmatprep.subr.mxu0 0.0
    %1435 = vmatpush1.msra.mxu0 0.0
    %1436 = vmatprep.subr.mxu0 0.0
    %1437 = vmatpush1.msra.mxu0 0.0
    %1438 = vmatprep.subr.mxu0 0.0
    %1439 = vmatpush1.msra.mxu0 0.0
    %1440 = vmatprep.subr.mxu0 0.0
    %1441 = vmatpush1.msra.mxu0 0.0
    %1442 = vmatprep.subr.mxu0 0.0
    %1443 = vmatpush1.msra.mxu0 0.0
    %1444 = vmatprep.subr.mxu0 0.0
    %1445 = vmatpush1.msra.mxu0 0.0
    %1446 = vmatprep.subr.mxu0 0.0
    %1447 = vmatpush1.msra.mxu0 0.0
    %1448 = vmatprep.subr.mxu0 0.0
    %1449 = vmatpush1.msra.mxu0 0.0
    %1450 = vmatprep.subr.mxu0 0.0
    %1451 = vmatpush1.msra.mxu0 0.0
    %1452 = vmatprep.subr.mxu0 0.0
    %1453 = vmatpush1.msra.mxu0 0.0
    %1454 = vmatprep.subr.mxu0 0.0
    %1455 = vmatpush1.msra.mxu0 0.0
    %1456 = vmatprep.subr.mxu0 0.0
    %1457 = vmatpush1.msra.mxu0 0.0
    %1458 = vmatprep.subr.mxu0 0.0
    %1459 = vmatpush1.msra.mxu0 0.0
    %1460 = vmatprep.subr.mxu0 0.0
    %1461 = vmatpush1.msra.mxu0 0.0
    %1462 = vmatprep.subr.mxu0 0.0
    %1463 = vmatpush1.msra.mxu0 0.0
    %1464 = vmatprep.subr.mxu0 0.0
    %1465 = vmatpush1.msra.mxu0 0.0
    %1466 = vmatprep.subr.mxu0 0.0
    %1467 = vmatpush1.msra.mxu0 0.0
    %1468 = vmatprep.subr.mxu0 0.0
    %1469 = vmatpush1.msra.mxu0 0.0
    %1470 = vmatprep.subr.mxu0 0.0
    %1471 = vmatpush1.msra.mxu0 0.0
    %1472 = vmatprep.subr.mxu0 0.0
    %1473 = vmatpush1.msra.mxu0 0.0
    %1474 = vmatprep.subr.mxu0 0.0
    %1475 = vmatpush1.msra.mxu0 0.0
    %1476 = vmatprep.subr.mxu0 0.0
    %1477 = vmatpush1.msra.mxu0 0.0
    %1478 = vmatprep.subr.mxu0 0.0
    %1479 = vmatpush1.msra.mxu0 0.0
    %1480 = vmatprep.subr.mxu0 0.0
    %1481 = vmatpush1.msra.mxu0 0.0
    %1482 = vmatprep.subr.mxu0 0.0
    %1483 = vmatpush1.msra.mxu0 0.0
    %1484 = vmatprep.subr.mxu0 0.0
    %1485 = vmatpush1.msra.mxu0 0.0
    %1486 = vmatprep.subr.mxu0 0.0
    %1487 = vmatpush1.msra.mxu0 0.0
    %1488 = vmatprep.subr.mxu0 0.0
    %1489 = vmatpush1.msra.mxu0 0.0
    %1490 = vmatprep.subr.mxu0 0.0
    %1491 = vmatpush1.msra.mxu0 0.0
    %1492 = vmatprep.subr.mxu0 0.0
    %1493 = vmatpush1.msra.mxu0 0.0
    %1494 = vmatprep.mubr.f32.mxu0 0.0
    %1495 = vmatmul.mubr.f32.gmra.mrb[0].mxu0 %v1428
    %v1496 = vpop.f32.mrb[0].mxu0
    %v1497 = vadd.f32 %v1424, %v1496
    %v1498 = vpop.f32.mrb[0].mxu0
    %1499 = vdwg.mxu0
    %v1501 = vsel %vm69, %v1353, 0
    %1503 = vmatprep.subr.mxu0 0.0
    %1504 = vmatpush1.msra.mxu0 %v75
    %1505 = vmatprep.subr.mxu0 0.0
    %1506 = vmatpush1.msra.mxu0 0.0
    %1507 = vmatprep.subr.mxu0 0.0
    %1508 = vmatpush1.msra.mxu0 0.0
    %1509 = vmatprep.subr.mxu0 0.0
    %1510 = vmatpush1.msra.mxu0 0.0
    %1511 = vmatprep.subr.mxu0 0.0
    %1512 = vmatpush1.msra.mxu0 0.0
    %1513 = vmatprep.subr.mxu0 0.0
    %1514 = vmatpush1.msra.mxu0 0.0
    %1515 = vmatprep.subr.mxu0 0.0
    %1516 = vmatpush1.msra.mxu0 0.0
    %1517 = vmatprep.subr.mxu0 0.0
    %1518 = vmatpush1.msra.mxu0 0.0
    %1519 = vmatprep.subr.mxu0 0.0
    %1520 = vmatpush1.msra.mxu0 0.0
    %1521 = vmatprep.subr.mxu0 0.0
    %1522 = vmatpush1.msra.mxu0 0.0
    %1523 = vmatprep.subr.mxu0 0.0
    %1524 = vmatpush1.msra.mxu0 0.0
    %1525 = vmatprep.subr.mxu0 0.0
    %1526 = vmatpush1.msra.mxu0 0.0
    %1527 = vmatprep.subr.mxu0 0.0
    %1528 = vmatpush1.msra.mxu0 0.0
    %1529 = vmatprep.subr.mxu0 0.0
    %1530 = vmatpush1.msra.mxu0 0.0
    %1531 = vmatprep.subr.mxu0 0.0
    %1532 = vmatpush1.msra.mxu0 0.0
    %1533 = vmatprep.subr.mxu0 0.0
    %1534 = vmatpush1.msra.mxu0 0.0
    %1535 = vmatprep.subr.mxu0 0.0
    %1536 = vmatpush1.msra.mxu0 0.0
    %1537 = vmatprep.subr.mxu0 0.0
    %1538 = vmatpush1.msra.mxu0 0.0
    %1539 = vmatprep.subr.mxu0 0.0
    %1540 = vmatpush1.msra.mxu0 0.0
    %1541 = vmatprep.subr.mxu0 0.0
    %1542 = vmatpush1.msra.mxu0 0.0
    %1543 = vmatprep.subr.mxu0 0.0
    %1544 = vmatpush1.msra.mxu0 0.0
    %1545 = vmatprep.subr.mxu0 0.0
    %1546 = vmatpush1.msra.mxu0 0.0
    %1547 = vmatprep.subr.mxu0 0.0
    %1548 = vmatpush1.msra.mxu0 0.0
    %1549 = vmatprep.subr.mxu0 0.0
    %1550 = vmatpush1.msra.mxu0 0.0
    %1551 = vmatprep.subr.mxu0 0.0
    %1552 = vmatpush1.msra.mxu0 0.0
    %1553 = vmatprep.subr.mxu0 0.0
    %1554 = vmatpush1.msra.mxu0 0.0
    %1555 = vmatprep.subr.mxu0 0.0
    %1556 = vmatpush1.msra.mxu0 0.0
    %1557 = vmatprep.subr.mxu0 0.0
    %1558 = vmatpush1.msra.mxu0 0.0
    %1559 = vmatprep.subr.mxu0 0.0
    %1560 = vmatpush1.msra.mxu0 0.0
    %1561 = vmatprep.subr.mxu0 0.0
    %1562 = vmatpush1.msra.mxu0 0.0
    %1563 = vmatprep.subr.mxu0 0.0
    %1564 = vmatpush1.msra.mxu0 0.0
    %1565 = vmatprep.subr.mxu0 0.0
    %1566 = vmatpush1.msra.mxu0 0.0
    %1567 = vmatprep.mubr.f32.mxu0 0.0
    %1568 = vmatmul.mubr.f32.gmra.mrb[0].mxu0 %v1501
    %v1569 = vpop.f32.mrb[0].mxu0
    %v1570 = vadd.f32 0.0, %v1569
    %v1571 = vpop.f32.mrb[0].mxu0
    %1572 = vdwg.mxu0
    %v1574 = vsel %vm69, %v1351, 0
    %1576 = vmatprep.subr.mxu0 0.0
    %1577 = vmatpush1.msra.mxu0 %v151
    %1578 = vmatprep.subr.mxu0 0.0
    %1579 = vmatpush1.msra.mxu0 0.0
    %1580 = vmatprep.subr.mxu0 0.0
    %1581 = vmatpush1.msra.mxu0 0.0
    %1582 = vmatprep.subr.mxu0 0.0
    %1583 = vmatpush1.msra.mxu0 0.0
    %1584 = vmatprep.subr.mxu0 0.0
    %1585 = vmatpush1.msra.mxu0 0.0
    %1586 = vmatprep.subr.mxu0 0.0
    %1587 = vmatpush1.msra.mxu0 0.0
    %1588 = vmatprep.subr.mxu0 0.0
    %1589 = vmatpush1.msra.mxu0 0.0
    %1590 = vmatprep.subr.mxu0 0.0
    %1591 = vmatpush1.msra.mxu0 0.0
    %1592 = vmatprep.subr.mxu0 0.0
    %1593 = vmatpush1.msra.mxu0 0.0
    %1594 = vmatprep.subr.mxu0 0.0
    %1595 = vmatpush1.msra.mxu0 0.0
    %1596 = vmatprep.subr.mxu0 0.0
    %1597 = vmatpush1.msra.mxu0 0.0
    %1598 = vmatprep.subr.mxu0 0.0
    %1599 = vmatpush1.msra.mxu0 0.0
    %1600 = vmatprep.subr.mxu0 0.0
    %1601 = vmatpush1.msra.mxu0 0.0
    %1602 = vmatprep.subr.mxu0 0.0
    %1603 = vmatpush1.msra.mxu0 0.0
    %1604 = vmatprep.subr.mxu0 0.0
    %1605 = vmatpush1.msra.mxu0 0.0
    %1606 = vmatprep.subr.mxu0 0.0
    %1607 = vmatpush1.msra.mxu0 0.0
    %1608 = vmatprep.subr.mxu0 0.0
    %1609 = vmatpush1.msra.mxu0 0.0
    %1610 = vmatprep.subr.mxu0 0.0
    %1611 = vmatpush1.msra.mxu0 0.0
    %1612 = vmatprep.subr.mxu0 0.0
    %1613 = vmatpush1.msra.mxu0 0.0
    %1614 = vmatprep.subr.mxu0 0.0
    %1615 = vmatpush1.msra.mxu0 0.0
    %1616 = vmatprep.subr.mxu0 0.0
    %1617 = vmatpush1.msra.mxu0 0.0
    %1618 = vmatprep.subr.mxu0 0.0
    %1619 = vmatpush1.msra.mxu0 0.0
    %1620 = vmatprep.subr.mxu0 0.0
    %1621 = vmatpush1.msra.mxu0 0.0
    %1622 = vmatprep.subr.mxu0 0.0
    %1623 = vmatpush1.msra.mxu0 0.0
    %1624 = vmatprep.subr.mxu0 0.0
    %1625 = vmatpush1.msra.mxu0 0.0
    %1626 = vmatprep.subr.mxu0 0.0
    %1627 = vmatpush1.msra.mxu0 0.0
    %1628 = vmatprep.subr.mxu0 0.0
    %1629 = vmatpush1.msra.mxu0 0.0
    %1630 = vmatprep.subr.mxu0 0.0
    %1631 = vmatpush1.msra.mxu0 0.0
    %1632 = vmatprep.subr.mxu0 0.0
    %1633 = vmatpush1.msra.mxu0 0.0
    %1634 = vmatprep.subr.mxu0 0.0
    %1635 = vmatpush1.msra.mxu0 0.0
    %1636 = vmatprep.subr.mxu0 0.0
    %1637 = vmatpush1.msra.mxu0 0.0
    %1638 = vmatprep.subr.mxu0 0.0
    %1639 = vmatpush1.msra.mxu0 0.0
    %1640 = vmatprep.mubr.f32.mxu0 0.0
    %1641 = vmatmul.mubr.f32.gmra.mrb[0].mxu0 %v1574
    %v1642 = vpop.f32.mrb[0].mxu0
    %v1643 = vadd.f32 %v1570, %v1642
    %v1644 = vpop.f32.mrb[0].mxu0
    %1645 = vdwg.mxu0
    %s1646 = scalar_lea.vmem %s2, 16
    %1647 = vst.msk [vmem:[%s1646] sm:$0xf] %vm369, %v1497
    %1649 = vrot.lane.b32.xlu0 %v1643, 8
    %v1650 = vpop.permute.xlu0 %1649
    %1652 = vst.msk [vmem:[%s1646] sm:$0xf] %vm375, %v1650
    %s1653 = scalar_lea.vmem [#allocation2], 20
    %v1654 = vld [vmem:[%s1653] sm:$0xf]
    %s1655 = scalar_lea.vmem [#allocation4], 60
    %v1656 = vld [vmem:[%s1655] sm:$0xf]
    %s1657 = scalar_lea.vmem [#allocation4], 64
    %v1658 = vld [vmem:[%s1657] sm:$0xf]
    %s1659 = scalar_lea.vmem [#allocation4], 68
    %v1660 = vld [vmem:[%s1659] sm:$0xf]
    %v1661 = vadd.f32 %v1654, %v1656
    %v1662 = vsub.f32 %v1654, %v1656
    %v1663 = vadd.f32 %v1658, %v1660
    %v1664 = vsub.f32 %v1658, %v1660
    %v1665 = vadd.f32 %v1661, %v1663
    %v1666 = vmul.f32 %v1665, 0.5
    %v1667 = vsub.f32 %v1661, %v1663
    %v1668 = vmul.f32 %v1667, 0.5
    %v1669 = vadd.f32 %v1662, %v1664
    %v1670 = vmul.f32 %v1669, 0.5
    %v1671 = vsub.f32 %v1662, %v1664
    %v1672 = vmul.f32 %v1671, 0.5
    %v1674 = vsel %vm69, %v1668, 0
    %1676 = vmatprep.subr.mxu0 0.0
    %1677 = vmatpush1.msra.mxu0 %v75
    %1678 = vmatprep.subr.mxu0 0.0
    %1679 = vmatpush1.msra.mxu0 0.0
    %1680 = vmatprep.subr.mxu0 0.0
    %1681 = vmatpush1.msra.mxu0 0.0
    %1682 = vmatprep.subr.mxu0 0.0
    %1683 = vmatpush1.msra.mxu0 0.0
    %1684 = vmatprep.subr.mxu0 0.0
    %1685 = vmatpush1.msra.mxu0 0.0
    %1686 = vmatprep.subr.mxu0 0.0
    %1687 = vmatpush1.msra.mxu0 0.0
    %1688 = vmatprep.subr.mxu0 0.0
    %1689 = vmatpush1.msra.mxu0 0.0
    %1690 = vmatprep.subr.mxu0 0.0
    %1691 = vmatpush1.msra.mxu0 0.0
    %1692 = vmatprep.subr.mxu0 0.0
    %1693 = vmatpush1.msra.mxu0 0.0
    %1694 = vmatprep.subr.mxu0 0.0
    %1695 = vmatpush1.msra.mxu0 0.0
    %1696 = vmatprep.subr.mxu0 0.0
    %1697 = vmatpush1.msra.mxu0 0.0
    %1698 = vmatprep.subr.mxu0 0.0
    %1699 = vmatpush1.msra.mxu0 0.0
    %1700 = vmatprep.subr.mxu0 0.0
    %1701 = vmatpush1.msra.mxu0 0.0
    %1702 = vmatprep.subr.mxu0 0.0
    %1703 = vmatpush1.msra.mxu0 0.0
    %1704 = vmatprep.subr.mxu0 0.0
    %1705 = vmatpush1.msra.mxu0 0.0
    %1706 = vmatprep.subr.mxu0 0.0
    %1707 = vmatpush1.msra.mxu0 0.0
    %1708 = vmatprep.subr.mxu0 0.0
    %1709 = vmatpush1.msra.mxu0 0.0
    %1710 = vmatprep.subr.mxu0 0.0
    %1711 = vmatpush1.msra.mxu0 0.0
    %1712 = vmatprep.subr.mxu0 0.0
    %1713 = vmatpush1.msra.mxu0 0.0
    %1714 = vmatprep.subr.mxu0 0.0
    %1715 = vmatpush1.msra.mxu0 0.0
    %1716 = vmatprep.subr.mxu0 0.0
    %1717 = vmatpush1.msra.mxu0 0.0
    %1718 = vmatprep.subr.mxu0 0.0
    %1719 = vmatpush1.msra.mxu0 0.0
    %1720 = vmatprep.subr.mxu0 0.0
    %1721 = vmatpush1.msra.mxu0 0.0
    %1722 = vmatprep.subr.mxu0 0.0
    %1723 = vmatpush1.msra.mxu0 0.0
    %1724 = vmatprep.subr.mxu0 0.0
    %1725 = vmatpush1.msra.mxu0 0.0
    %1726 = vmatprep.subr.mxu0 0.0
    %1727 = vmatpush1.msra.mxu0 0.0
    %1728 = vmatprep.subr.mxu0 0.0
    %1729 = vmatpush1.msra.mxu0 0.0
    %1730 = vmatprep.subr.mxu0 0.0
    %1731 = vmatpush1.msra.mxu0 0.0
    %1732 = vmatprep.subr.mxu0 0.0
    %1733 = vmatpush1.msra.mxu0 0.0
    %1734 = vmatprep.subr.mxu0 0.0
    %1735 = vmatpush1.msra.mxu0 0.0
    %1736 = vmatprep.subr.mxu0 0.0
    %1737 = vmatpush1.msra.mxu0 0.0
    %1738 = vmatprep.subr.mxu0 0.0
    %1739 = vmatpush1.msra.mxu0 0.0
    %1740 = vmatprep.mubr.f32.mxu0 0.0
    %1741 = vmatmul.mubr.f32.gmra.mrb[0].mxu0 %v1674
    %v1742 = vpop.f32.mrb[0].mxu0
    %v1743 = vadd.f32 0.0, %v1742
    %v1744 = vpop.f32.mrb[0].mxu0
    %1745 = vdwg.mxu0
    %v1747 = vsel %vm69, %v1666, 0
    %1749 = vmatprep.subr.mxu0 0.0
    %1750 = vmatpush1.msra.mxu0 %v151
    %1751 = vmatprep.subr.mxu0 0.0
    %1752 = vmatpush1.msra.mxu0 0.0
    %1753 = vmatprep.subr.mxu0 0.0
    %1754 = vmatpush1.msra.mxu0 0.0
    %1755 = vmatprep.subr.mxu0 0.0
    %1756 = vmatpush1.msra.mxu0 0.0
    %1757 = vmatprep.subr.mxu0 0.0
    %1758 = vmatpush1.msra.mxu0 0.0
    %1759 = vmatprep.subr.mxu0 0.0
    %1760 = vmatpush1.msra.mxu0 0.0
    %1761 = vmatprep.subr.mxu0 0.0
    %1762 = vmatpush1.msra.mxu0 0.0
    %1763 = vmatprep.subr.mxu0 0.0
    %1764 = vmatpush1.msra.mxu0 0.0
    %1765 = vmatprep.subr.mxu0 0.0
    %1766 = vmatpush1.msra.mxu0 0.0
    %1767 = vmatprep.subr.mxu0 0.0
    %1768 = vmatpush1.msra.mxu0 0.0
    %1769 = vmatprep.subr.mxu0 0.0
    %1770 = vmatpush1.msra.mxu0 0.0
    %1771 = vmatprep.subr.mxu0 0.0
    %1772 = vmatpush1.msra.mxu0 0.0
    %1773 = vmatprep.subr.mxu0 0.0
    %1774 = vmatpush1.msra.mxu0 0.0
    %1775 = vmatprep.subr.mxu0 0.0
    %1776 = vmatpush1.msra.mxu0 0.0
    %1777 = vmatprep.subr.mxu0 0.0
    %1778 = vmatpush1.msra.mxu0 0.0
    %1779 = vmatprep.subr.mxu0 0.0
    %1780 = vmatpush1.msra.mxu0 0.0
    %1781 = vmatprep.subr.mxu0 0.0
    %1782 = vmatpush1.msra.mxu0 0.0
    %1783 = vmatprep.subr.mxu0 0.0
    %1784 = vmatpush1.msra.mxu0 0.0
    %1785 = vmatprep.subr.mxu0 0.0
    %1786 = vmatpush1.msra.mxu0 0.0
    %1787 = vmatprep.subr.mxu0 0.0
    %1788 = vmatpush1.msra.mxu0 0.0
    %1789 = vmatprep.subr.mxu0 0.0
    %1790 = vmatpush1.msra.mxu0 0.0
    %1791 = vmatprep.subr.mxu0 0.0
    %1792 = vmatpush1.msra.mxu0 0.0
    %1793 = vmatprep.subr.mxu0 0.0
    %1794 = vmatpush1.msra.mxu0 0.0
    %1795 = vmatprep.subr.mxu0 0.0
    %1796 = vmatpush1.msra.mxu0 0.0
    %1797 = vmatprep.subr.mxu0 0.0
    %1798 = vmatpush1.msra.mxu0 0.0
    %1799 = vmatprep.subr.mxu0 0.0
    %1800 = vmatpush1.msra.mxu0 0.0
    %1801 = vmatprep.subr.mxu0 0.0
    %1802 = vmatpush1.msra.mxu0 0.0
    %1803 = vmatprep.subr.mxu0 0.0
    %1804 = vmatpush1.msra.mxu0 0.0
    %1805 = vmatprep.subr.mxu0 0.0
    %1806 = vmatpush1.msra.mxu0 0.0
    %1807 = vmatprep.subr.mxu0 0.0
    %1808 = vmatpush1.msra.mxu0 0.0
    %1809 = vmatprep.subr.mxu0 0.0
    %1810 = vmatpush1.msra.mxu0 0.0
    %1811 = vmatprep.subr.mxu0 0.0
    %1812 = vmatpush1.msra.mxu0 0.0
    %1813 = vmatprep.mubr.f32.mxu0 0.0
    %1814 = vmatmul.mubr.f32.gmra.mrb[0].mxu0 %v1747
    %v1815 = vpop.f32.mrb[0].mxu0
    %v1816 = vadd.f32 %v1743, %v1815
    %v1817 = vpop.f32.mrb[0].mxu0
    %1818 = vdwg.mxu0
    %v1820 = vsel %vm69, %v1672, 0
    %1822 = vmatprep.subr.mxu0 0.0
    %1823 = vmatpush1.msra.mxu0 %v75
    %1824 = vmatprep.subr.mxu0 0.0
    %1825 = vmatpush1.msra.mxu0 0.0
    %1826 = vmatprep.subr.mxu0 0.0
    %1827 = vmatpush1.msra.mxu0 0.0
    %1828 = vmatprep.subr.mxu0 0.0
    %1829 = vmatpush1.msra.mxu0 0.0
    %1830 = vmatprep.subr.mxu0 0.0
    %1831 = vmatpush1.msra.mxu0 0.0
    %1832 = vmatprep.subr.mxu0 0.0
    %1833 = vmatpush1.msra.mxu0 0.0
    %1834 = vmatprep.subr.mxu0 0.0
    %1835 = vmatpush1.msra.mxu0 0.0
    %1836 = vmatprep.subr.mxu0 0.0
    %1837 = vmatpush1.msra.mxu0 0.0
    %1838 = vmatprep.subr.mxu0 0.0
    %1839 = vmatpush1.msra.mxu0 0.0
    %1840 = vmatprep.subr.mxu0 0.0
    %1841 = vmatpush1.msra.mxu0 0.0
    %1842 = vmatprep.subr.mxu0 0.0
    %1843 = vmatpush1.msra.mxu0 0.0
    %1844 = vmatprep.subr.mxu0 0.0
    %1845 = vmatpush1.msra.mxu0 0.0
    %1846 = vmatprep.subr.mxu0 0.0
    %1847 = vmatpush1.msra.mxu0 0.0
    %1848 = vmatprep.subr.mxu0 0.0
    %1849 = vmatpush1.msra.mxu0 0.0
    %1850 = vmatprep.subr.mxu0 0.0
    %1851 = vmatpush1.msra.mxu0 0.0
    %1852 = vmatprep.subr.mxu0 0.0
    %1853 = vmatpush1.msra.mxu0 0.0
    %1854 = vmatprep.subr.mxu0 0.0
    %1855 = vmatpush1.msra.mxu0 0.0
    %1856 = vmatprep.subr.mxu0 0.0
    %1857 = vmatpush1.msra.mxu0 0.0
    %1858 = vmatprep.subr.mxu0 0.0
    %1859 = vmatpush1.msra.mxu0 0.0
    %1860 = vmatprep.subr.mxu0 0.0
    %1861 = vmatpush1.msra.mxu0 0.0
    %1862 = vmatprep.subr.mxu0 0.0
    %1863 = vmatpush1.msra.mxu0 0.0
    %1864 = vmatprep.subr.mxu0 0.0
    %1865 = vmatpush1.msra.mxu0 0.0
    %1866 = vmatprep.subr.mxu0 0.0
    %1867 = vmatpush1.msra.mxu0 0.0
    %1868 = vmatprep.subr.mxu0 0.0
    %1869 = vmatpush1.msra.mxu0 0.0
    %1870 = vmatprep.subr.mxu0 0.0
    %1871 = vmatpush1.msra.mxu0 0.0
    %1872 = vmatprep.subr.mxu0 0.0
    %1873 = vmatpush1.msra.mxu0 0.0
    %1874 = vmatprep.subr.mxu0 0.0
    %1875 = vmatpush1.msra.mxu0 0.0
    %1876 = vmatprep.subr.mxu0 0.0
    %1877 = vmatpush1.msra.mxu0 0.0
    %1878 = vmatprep.subr.mxu0 0.0
    %1879 = vmatpush1.msra.mxu0 0.0
    %1880 = vmatprep.subr.mxu0 0.0
    %1881 = vmatpush1.msra.mxu0 0.0
    %1882 = vmatprep.subr.mxu0 0.0
    %1883 = vmatpush1.msra.mxu0 0.0
    %1884 = vmatprep.subr.mxu0 0.0
    %1885 = vmatpush1.msra.mxu0 0.0
    %1886 = vmatprep.mubr.f32.mxu0 0.0
    %1887 = vmatmul.mubr.f32.gmra.mrb[0].mxu0 %v1820
    %v1888 = vpop.f32.mrb[0].mxu0
    %v1889 = vadd.f32 0.0, %v1888
    %v1890 = vpop.f32.mrb[0].mxu0
    %1891 = vdwg.mxu0
    %v1893 = vsel %vm69, %v1670, 0
    %1895 = vmatprep.subr.mxu0 0.0
    %1896 = vmatpush1.msra.mxu0 %v151
    %1897 = vmatprep.subr.mxu0 0.0
    %1898 = vmatpush1.msra.mxu0 0.0
    %1899 = vmatprep.subr.mxu0 0.0
    %1900 = vmatpush1.msra.mxu0 0.0
    %1901 = vmatprep.subr.mxu0 0.0
    %1902 = vmatpush1.msra.mxu0 0.0
    %1903 = vmatprep.subr.mxu0 0.0
    %1904 = vmatpush1.msra.mxu0 0.0
    %1905 = vmatprep.subr.mxu0 0.0
    %1906 = vmatpush1.msra.mxu0 0.0
    %1907 = vmatprep.subr.mxu0 0.0
    %1908 = vmatpush1.msra.mxu0 0.0
    %1909 = vmatprep.subr.mxu0 0.0
    %1910 = vmatpush1.msra.mxu0 0.0
    %1911 = vmatprep.subr.mxu0 0.0
    %1912 = vmatpush1.msra.mxu0 0.0
    %1913 = vmatprep.subr.mxu0 0.0
    %1914 = vmatpush1.msra.mxu0 0.0
    %1915 = vmatprep.subr.mxu0 0.0
    %1916 = vmatpush1.msra.mxu0 0.0
    %1917 = vmatprep.subr.mxu0 0.0
    %1918 = vmatpush1.msra.mxu0 0.0
    %1919 = vmatprep.subr.mxu0 0.0
    %1920 = vmatpush1.msra.mxu0 0.0
    %1921 = vmatprep.subr.mxu0 0.0
    %1922 = vmatpush1.msra.mxu0 0.0
    %1923 = vmatprep.subr.mxu0 0.0
    %1924 = vmatpush1.msra.mxu0 0.0
    %1925 = vmatprep.subr.mxu0 0.0
    %1926 = vmatpush1.msra.mxu0 0.0
    %1927 = vmatprep.subr.mxu0 0.0
    %1928 = vmatpush1.msra.mxu0 0.0
    %1929 = vmatprep.subr.mxu0 0.0
    %1930 = vmatpush1.msra.mxu0 0.0
    %1931 = vmatprep.subr.mxu0 0.0
    %1932 = vmatpush1.msra.mxu0 0.0
    %1933 = vmatprep.subr.mxu0 0.0
    %1934 = vmatpush1.msra.mxu0 0.0
    %1935 = vmatprep.subr.mxu0 0.0
    %1936 = vmatpush1.msra.mxu0 0.0
    %1937 = vmatprep.subr.mxu0 0.0
    %1938 = vmatpush1.msra.mxu0 0.0
    %1939 = vmatprep.subr.mxu0 0.0
    %1940 = vmatpush1.msra.mxu0 0.0
    %1941 = vmatprep.subr.mxu0 0.0
    %1942 = vmatpush1.msra.mxu0 0.0
    %1943 = vmatprep.subr.mxu0 0.0
    %1944 = vmatpush1.msra.mxu0 0.0
    %1945 = vmatprep.subr.mxu0 0.0
    %1946 = vmatpush1.msra.mxu0 0.0
    %1947 = vmatprep.subr.mxu0 0.0
    %1948 = vmatpush1.msra.mxu0 0.0
    %1949 = vmatprep.subr.mxu0 0.0
    %1950 = vmatpush1.msra.mxu0 0.0
    %1951 = vmatprep.subr.mxu0 0.0
    %1952 = vmatpush1.msra.mxu0 0.0
    %1953 = vmatprep.subr.mxu0 0.0
    %1954 = vmatpush1.msra.mxu0 0.0
    %1955 = vmatprep.subr.mxu0 0.0
    %1956 = vmatpush1.msra.mxu0 0.0
    %1957 = vmatprep.subr.mxu0 0.0
    %1958 = vmatpush1.msra.mxu0 0.0
    %1959 = vmatprep.mubr.f32.mxu0 0.0
    %1960 = vmatmul.mubr.f32.gmra.mrb[0].mxu0 %v1893
    %v1961 = vpop.f32.mrb[0].mxu0
    %v1962 = vadd.f32 %v1889, %v1961
    %v1963 = vpop.f32.mrb[0].mxu0
    %1964 = vdwg.mxu0
    %s1965 = scalar_lea.vmem %s2, 20
    %1966 = vst.msk [vmem:[%s1965] sm:$0xf] %vm369, %v1816
    %1968 = vrot.lane.b32.xlu0 %v1962, 8
    %v1969 = vpop.permute.xlu0 %1968
    %1971 = vst.msk [vmem:[%s1965] sm:$0xf] %vm375, %v1969
    %s1972 = scalar_lea.vmem [#allocation2], 24
    %v1973 = vld [vmem:[%s1972] sm:$0xf]
    %s1974 = scalar_lea.vmem [#allocation4], 72
    %v1975 = vld [vmem:[%s1974] sm:$0xf]
    %s1976 = scalar_lea.vmem [#allocation4], 76
    %v1977 = vld [vmem:[%s1976] sm:$0xf]
    %s1978 = scalar_lea.vmem [#allocation4], 80
    %v1979 = vld [vmem:[%s1978] sm:$0xf]
    %v1980 = vadd.f32 %v1973, %v1975
    %v1981 = vsub.f32 %v1973, %v1975
    %v1982 = vadd.f32 %v1977, %v1979
    %v1983 = vsub.f32 %v1977, %v1979
    %v1984 = vadd.f32 %v1980, %v1982
    %v1985 = vmul.f32 %v1984, 0.5
    %v1986 = vsub.f32 %v1980, %v1982
    %v1987 = vmul.f32 %v1986, 0.5
    %v1988 = vadd.f32 %v1981, %v1983
    %v1989 = vmul.f32 %v1988, 0.5
    %v1990 = vsub.f32 %v1981, %v1983
    %v1991 = vmul.f32 %v1990, 0.5
    %v1993 = vsel %vm69, %v1987, 0
    %1995 = vmatprep.subr.mxu0 0.0
    %1996 = vmatpush1.msra.mxu0 %v75
    %1997 = vmatprep.subr.mxu0 0.0
    %1998 = vmatpush1.msra.mxu0 0.0
    %1999 = vmatprep.subr.mxu0 0.0
    %2000 = vmatpush1.msra.mxu0 0.0
    %2001 = vmatprep.subr.mxu0 0.0
    %2002 = vmatpush1.msra.mxu0 0.0
    %2003 = vmatprep.subr.mxu0 0.0
    %2004 = vmatpush1.msra.mxu0 0.0
    %2005 = vmatprep.subr.mxu0 0.0
    %2006 = vmatpush1.msra.mxu0 0.0
    %2007 = vmatprep.subr.mxu0 0.0
    %2008 = vmatpush1.msra.mxu0 0.0
    %2009 = vmatprep.subr.mxu0 0.0
    %2010 = vmatpush1.msra.mxu0 0.0
    %2011 = vmatprep.subr.mxu0 0.0
    %2012 = vmatpush1.msra.mxu0 0.0
    %2013 = vmatprep.subr.mxu0 0.0
    %2014 = vmatpush1.msra.mxu0 0.0
    %2015 = vmatprep.subr.mxu0 0.0
    %2016 = vmatpush1.msra.mxu0 0.0
    %2017 = vmatprep.subr.mxu0 0.0
    %2018 = vmatpush1.msra.mxu0 0.0
    %2019 = vmatprep.subr.mxu0 0.0
    %2020 = vmatpush1.msra.mxu0 0.0
    %2021 = vmatprep.subr.mxu0 0.0
    %2022 = vmatpush1.msra.mxu0 0.0
    %2023 = vmatprep.subr.mxu0 0.0
    %2024 = vmatpush1.msra.mxu0 0.0
    %2025 = vmatprep.subr.mxu0 0.0
    %2026 = vmatpush1.msra.mxu0 0.0
    %2027 = vmatprep.subr.mxu0 0.0
    %2028 = vmatpush1.msra.mxu0 0.0
    %2029 = vmatprep.subr.mxu0 0.0
    %2030 = vmatpush1.msra.mxu0 0.0
    %2031 = vmatprep.subr.mxu0 0.0
    %2032 = vmatpush1.msra.mxu0 0.0
    %2033 = vmatprep.subr.mxu0 0.0
    %2034 = vmatpush1.msra.mxu0 0.0
    %2035 = vmatprep.subr.mxu0 0.0
    %2036 = vmatpush1.msra.mxu0 0.0
    %2037 = vmatprep.subr.mxu0 0.0
    %2038 = vmatpush1.msra.mxu0 0.0
    %2039 = vmatprep.subr.mxu0 0.0
    %2040 = vmatpush1.msra.mxu0 0.0
    %2041 = vmatprep.subr.mxu0 0.0
    %2042 = vmatpush1.msra.mxu0 0.0
    %2043 = vmatprep.subr.mxu0 0.0
    %2044 = vmatpush1.msra.mxu0 0.0
    %2045 = vmatprep.subr.mxu0 0.0
    %2046 = vmatpush1.msra.mxu0 0.0
    %2047 = vmatprep.subr.mxu0 0.0
    %2048 = vmatpush1.msra.mxu0 0.0
    %2049 = vmatprep.subr.mxu0 0.0
    %2050 = vmatpush1.msra.mxu0 0.0
    %2051 = vmatprep.subr.mxu0 0.0
    %2052 = vmatpush1.msra.mxu0 0.0
    %2053 = vmatprep.subr.mxu0 0.0
    %2054 = vmatpush1.msra.mxu0 0.0
    %2055 = vmatprep.subr.mxu0 0.0
    %2056 = vmatpush1.msra.mxu0 0.0
    %2057 = vmatprep.subr.mxu0 0.0
    %2058 = vmatpush1.msra.mxu0 0.0
    %2059 = vmatprep.mubr.f32.mxu0 0.0
    %2060 = vmatmul.mubr.f32.gmra.mrb[0].mxu0 %v1993
    %v2061 = vpop.f32.mrb[0].mxu0
    %v2062 = vadd.f32 0.0, %v2061
    %v2063 = vpop.f32.mrb[0].mxu0
    %2064 = vdwg.mxu0
    %v2066 = vsel %vm69, %v1985, 0
    %2068 = vmatprep.subr.mxu0 0.0
    %2069 = vmatpush1.msra.mxu0 %v151
    %2070 = vmatprep.subr.mxu0 0.0
    %2071 = vmatpush1.msra.mxu0 0.0
    %2072 = vmatprep.subr.mxu0 0.0
    %2073 = vmatpush1.msra.mxu0 0.0
    %2074 = vmatprep.subr.mxu0 0.0
    %2075 = vmatpush1.msra.mxu0 0.0
    %2076 = vmatprep.subr.mxu0 0.0
    %2077 = vmatpush1.msra.mxu0 0.0
    %2078 = vmatprep.subr.mxu0 0.0
    %2079 = vmatpush1.msra.mxu0 0.0
    %2080 = vmatprep.subr.mxu0 0.0
    %2081 = vmatpush1.msra.mxu0 0.0
    %2082 = vmatprep.subr.mxu0 0.0
    %2083 = vmatpush1.msra.mxu0 0.0
    %2084 = vmatprep.subr.mxu0 0.0
    %2085 = vmatpush1.msra.mxu0 0.0
    %2086 = vmatprep.subr.mxu0 0.0
    %2087 = vmatpush1.msra.mxu0 0.0
    %2088 = vmatprep.subr.mxu0 0.0
    %2089 = vmatpush1.msra.mxu0 0.0
    %2090 = vmatprep.subr.mxu0 0.0
    %2091 = vmatpush1.msra.mxu0 0.0
    %2092 = vmatprep.subr.mxu0 0.0
    %2093 = vmatpush1.msra.mxu0 0.0
    %2094 = vmatprep.subr.mxu0 0.0
    %2095 = vmatpush1.msra.mxu0 0.0
    %2096 = vmatprep.subr.mxu0 0.0
    %2097 = vmatpush1.msra.mxu0 0.0
    %2098 = vmatprep.subr.mxu0 0.0
    %2099 = vmatpush1.msra.mxu0 0.0
    %2100 = vmatprep.subr.mxu0 0.0
    %2101 = vmatpush1.msra.mxu0 0.0
    %2102 = vmatprep.subr.mxu0 0.0
    %2103 = vmatpush1.msra.mxu0 0.0
    %2104 = vmatprep.subr.mxu0 0.0
    %2105 = vmatpush1.msra.mxu0 0.0
    %2106 = vmatprep.subr.mxu0 0.0
    %2107 = vmatpush1.msra.mxu0 0.0
    %2108 = vmatprep.subr.mxu0 0.0
    %2109 = vmatpush1.msra.mxu0 0.0
    %2110 = vmatprep.subr.mxu0 0.0
    %2111 = vmatpush1.msra.mxu0 0.0
    %2112 = vmatprep.subr.mxu0 0.0
    %2113 = vmatpush1.msra.mxu0 0.0
    %2114 = vmatprep.subr.mxu0 0.0
    %2115 = vmatpush1.msra.mxu0 0.0
    %2116 = vmatprep.subr.mxu0 0.0
    %2117 = vmatpush1.msra.mxu0 0.0
    %2118 = vmatprep.subr.mxu0 0.0
    %2119 = vmatpush1.msra.mxu0 0.0
    %2120 = vmatprep.subr.mxu0 0.0
    %2121 = vmatpush1.msra.mxu0 0.0
    %2122 = vmatprep.subr.mxu0 0.0
    %2123 = vmatpush1.msra.mxu0 0.0
    %2124 = vmatprep.subr.mxu0 0.0
    %2125 = vmatpush1.msra.mxu0 0.0
    %2126 = vmatprep.subr.mxu0 0.0
    %2127 = vmatpush1.msra.mxu0 0.0
    %2128 = vmatprep.subr.mxu0 0.0
    %2129 = vmatpush1.msra.mxu0 0.0
    %2130 = vmatprep.subr.mxu0 0.0
    %2131 = vmatpush1.msra.mxu0 0.0
    %2132 = vmatprep.mubr.f32.mxu0 0.0
    %2133 = vmatmul.mubr.f32.gmra.mrb[0].mxu0 %v2066
    %v2134 = vpop.f32.mrb[0].mxu0
    %v2135 = vadd.f32 %v2062, %v2134
    %v2136 = vpop.f32.mrb[0].mxu0
    %2137 = vdwg.mxu0
    %v2139 = vsel %vm69, %v1991, 0
    %2141 = vmatprep.subr.mxu0 0.0
    %2142 = vmatpush1.msra.mxu0 %v75
    %2143 = vmatprep.subr.mxu0 0.0
    %2144 = vmatpush1.msra.mxu0 0.0
    %2145 = vmatprep.subr.mxu0 0.0
    %2146 = vmatpush1.msra.mxu0 0.0
    %2147 = vmatprep.subr.mxu0 0.0
    %2148 = vmatpush1.msra.mxu0 0.0
    %2149 = vmatprep.subr.mxu0 0.0
    %2150 = vmatpush1.msra.mxu0 0.0
    %2151 = vmatprep.subr.mxu0 0.0
    %2152 = vmatpush1.msra.mxu0 0.0
    %2153 = vmatprep.subr.mxu0 0.0
    %2154 = vmatpush1.msra.mxu0 0.0
    %2155 = vmatprep.subr.mxu0 0.0
    %2156 = vmatpush1.msra.mxu0 0.0
    %2157 = vmatprep.subr.mxu0 0.0
    %2158 = vmatpush1.msra.mxu0 0.0
    %2159 = vmatprep.subr.mxu0 0.0
    %2160 = vmatpush1.msra.mxu0 0.0
    %2161 = vmatprep.subr.mxu0 0.0
    %2162 = vmatpush1.msra.mxu0 0.0
    %2163 = vmatprep.subr.mxu0 0.0
    %2164 = vmatpush1.msra.mxu0 0.0
    %2165 = vmatprep.subr.mxu0 0.0
    %2166 = vmatpush1.msra.mxu0 0.0
    %2167 = vmatprep.subr.mxu0 0.0
    %2168 = vmatpush1.msra.mxu0 0.0
    %2169 = vmatprep.subr.mxu0 0.0
    %2170 = vmatpush1.msra.mxu0 0.0
    %2171 = vmatprep.subr.mxu0 0.0
    %2172 = vmatpush1.msra.mxu0 0.0
    %2173 = vmatprep.subr.mxu0 0.0
    %2174 = vmatpush1.msra.mxu0 0.0
    %2175 = vmatprep.subr.mxu0 0.0
    %2176 = vmatpush1.msra.mxu0 0.0
    %2177 = vmatprep.subr.mxu0 0.0
    %2178 = vmatpush1.msra.mxu0 0.0
    %2179 = vmatprep.subr.mxu0 0.0
    %2180 = vmatpush1.msra.mxu0 0.0
    %2181 = vmatprep.subr.mxu0 0.0
    %2182 = vmatpush1.msra.mxu0 0.0
    %2183 = vmatprep.subr.mxu0 0.0
    %2184 = vmatpush1.msra.mxu0 0.0
    %2185 = vmatprep.subr.mxu0 0.0
    %2186 = vmatpush1.msra.mxu0 0.0
    %2187 = vmatprep.subr.mxu0 0.0
    %2188 = vmatpush1.msra.mxu0 0.0
    %2189 = vmatprep.subr.mxu0 0.0
    %2190 = vmatpush1.msra.mxu0 0.0
    %2191 = vmatprep.subr.mxu0 0.0
    %2192 = vmatpush1.msra.mxu0 0.0
    %2193 = vmatprep.subr.mxu0 0.0
    %2194 = vmatpush1.msra.mxu0 0.0
    %2195 = vmatprep.subr.mxu0 0.0
    %2196 = vmatpush1.msra.mxu0 0.0
    %2197 = vmatprep.subr.mxu0 0.0
    %2198 = vmatpush1.msra.mxu0 0.0
    %2199 = vmatprep.subr.mxu0 0.0
    %2200 = vmatpush1.msra.mxu0 0.0
    %2201 = vmatprep.subr.mxu0 0.0
    %2202 = vmatpush1.msra.mxu0 0.0
    %2203 = vmatprep.subr.mxu0 0.0
    %2204 = vmatpush1.msra.mxu0 0.0
    %2205 = vmatprep.mubr.f32.mxu0 0.0
    %2206 = vmatmul.mubr.f32.gmra.mrb[0].mxu0 %v2139
    %v2207 = vpop.f32.mrb[0].mxu0
    %v2208 = vadd.f32 0.0, %v2207
    %v2209 = vpop.f32.mrb[0].mxu0
    %2210 = vdwg.mxu0
    %v2212 = vsel %vm69, %v1989, 0
    %2214 = vmatprep.subr.mxu0 0.0
    %2215 = vmatpush1.msra.mxu0 %v151
    %2216 = vmatprep.subr.mxu0 0.0
    %2217 = vmatpush1.msra.mxu0 0.0
    %2218 = vmatprep.subr.mxu0 0.0
    %2219 = vmatpush1.msra.mxu0 0.0
    %2220 = vmatprep.subr.mxu0 0.0
    %2221 = vmatpush1.msra.mxu0 0.0
    %2222 = vmatprep.subr.mxu0 0.0
    %2223 = vmatpush1.msra.mxu0 0.0
    %2224 = vmatprep.subr.mxu0 0.0
    %2225 = vmatpush1.msra.mxu0 0.0
    %2226 = vmatprep.subr.mxu0 0.0
    %2227 = vmatpush1.msra.mxu0 0.0
    %2228 = vmatprep.subr.mxu0 0.0
    %2229 = vmatpush1.msra.mxu0 0.0
    %2230 = vmatprep.subr.mxu0 0.0
    %2231 = vmatpush1.msra.mxu0 0.0
    %2232 = vmatprep.subr.mxu0 0.0
    %2233 = vmatpush1.msra.mxu0 0.0
    %2234 = vmatprep.subr.mxu0 0.0
    %2235 = vmatpush1.msra.mxu0 0.0
    %2236 = vmatprep.subr.mxu0 0.0
    %2237 = vmatpush1.msra.mxu0 0.0
    %2238 = vmatprep.subr.mxu0 0.0
    %2239 = vmatpush1.msra.mxu0 0.0
    %2240 = vmatprep.subr.mxu0 0.0
    %2241 = vmatpush1.msra.mxu0 0.0
    %2242 = vmatprep.subr.mxu0 0.0
    %2243 = vmatpush1.msra.mxu0 0.0
    %2244 = vmatprep.subr.mxu0 0.0
    %2245 = vmatpush1.msra.mxu0 0.0
    %2246 = vmatprep.subr.mxu0 0.0
    %2247 = vmatpush1.msra.mxu0 0.0
    %2248 = vmatprep.subr.mxu0 0.0
    %2249 = vmatpush1.msra.mxu0 0.0
    %2250 = vmatprep.subr.mxu0 0.0
    %2251 = vmatpush1.msra.mxu0 0.0
    %2252 = vmatprep.subr.mxu0 0.0
    %2253 = vmatpush1.msra.mxu0 0.0
    %2254 = vmatprep.subr.mxu0 0.0
    %2255 = vmatpush1.msra.mxu0 0.0
    %2256 = vmatprep.subr.mxu0 0.0
    %2257 = vmatpush1.msra.mxu0 0.0
    %2258 = vmatprep.subr.mxu0 0.0
    %2259 = vmatpush1.msra.mxu0 0.0
    %2260 = vmatprep.subr.mxu0 0.0
    %2261 = vmatpush1.msra.mxu0 0.0
    %2262 = vmatprep.subr.mxu0 0.0
    %2263 = vmatpush1.msra.mxu0 0.0
    %2264 = vmatprep.subr.mxu0 0.0
    %2265 = vmatpush1.msra.mxu0 0.0
    %2266 = vmatprep.subr.mxu0 0.0
    %2267 = vmatpush1.msra.mxu0 0.0
    %2268 = vmatprep.subr.mxu0 0.0
    %2269 = vmatpush1.msra.mxu0 0.0
    %2270 = vmatprep.subr.mxu0 0.0
    %2271 = vmatpush1.msra.mxu0 0.0
    %2272 = vmatprep.subr.mxu0 0.0
    %2273 = vmatpush1.msra.mxu0 0.0
    %2274 = vmatprep.subr.mxu0 0.0
    %2275 = vmatpush1.msra.mxu0 0.0
    %2276 = vmatprep.subr.mxu0 0.0
    %2277 = vmatpush1.msra.mxu0 0.0
    %2278 = vmatprep.mubr.f32.mxu0 0.0
    %2279 = vmatmul.mubr.f32.gmra.mrb[0].mxu0 %v2212
    %v2280 = vpop.f32.mrb[0].mxu0
    %v2281 = vadd.f32 %v2208, %v2280
    %v2282 = vpop.f32.mrb[0].mxu0
    %2283 = vdwg.mxu0
    %s2284 = scalar_lea.vmem %s2, 24
    %2285 = vst.msk [vmem:[%s2284] sm:$0xf] %vm369, %v2135
    %2287 = vrot.lane.b32.xlu0 %v2281, 8
    %v2288 = vpop.permute.xlu0 %2287
    %2290 = vst.msk [vmem:[%s2284] sm:$0xf] %vm375, %v2288
    %s2291 = scalar_lea.vmem [#allocation2], 28
    %v2292 = vld [vmem:[%s2291] sm:$0xf]
    %s2293 = scalar_lea.vmem [#allocation4], 84
    %v2294 = vld [vmem:[%s2293] sm:$0xf]
    %s2295 = scalar_lea.vmem [#allocation4], 88
    %v2296 = vld [vmem:[%s2295] sm:$0xf]
    %s2297 = scalar_lea.vmem [#allocation4], 92
    %v2298 = vld [vmem:[%s2297] sm:$0xf]
    %v2299 = vadd.f32 %v2292, %v2294
    %v2300 = vsub.f32 %v2292, %v2294
    %v2301 = vadd.f32 %v2296, %v2298
    %v2302 = vsub.f32 %v2296, %v2298
    %v2303 = vadd.f32 %v2299, %v2301
    %v2304 = vmul.f32 %v2303, 0.5
    %v2305 = vsub.f32 %v2299, %v2301
    %v2306 = vmul.f32 %v2305, 0.5
    %v2307 = vadd.f32 %v2300, %v2302
    %v2308 = vmul.f32 %v2307, 0.5
    %v2309 = vsub.f32 %v2300, %v2302
    %v2310 = vmul.f32 %v2309, 0.5
    %v2312 = vsel %vm69, %v2306, 0
    %2314 = vmatprep.subr.mxu0 0.0
    %2315 = vmatpush1.msra.mxu0 %v75
    %2316 = vmatprep.subr.mxu0 0.0
    %2317 = vmatpush1.msra.mxu0 0.0
    %2318 = vmatprep.subr.mxu0 0.0
    %2319 = vmatpush1.msra.mxu0 0.0
    %2320 = vmatprep.subr.mxu0 0.0
    %2321 = vmatpush1.msra.mxu0 0.0
    %2322 = vmatprep.subr.mxu0 0.0
    %2323 = vmatpush1.msra.mxu0 0.0
    %2324 = vmatprep.subr.mxu0 0.0
    %2325 = vmatpush1.msra.mxu0 0.0
    %2326 = vmatprep.subr.mxu0 0.0
    %2327 = vmatpush1.msra.mxu0 0.0
    %2328 = vmatprep.subr.mxu0 0.0
    %2329 = vmatpush1.msra.mxu0 0.0
    %2330 = vmatprep.subr.mxu0 0.0
    %2331 = vmatpush1.msra.mxu0 0.0
    %2332 = vmatprep.subr.mxu0 0.0
    %2333 = vmatpush1.msra.mxu0 0.0
    %2334 = vmatprep.subr.mxu0 0.0
    %2335 = vmatpush1.msra.mxu0 0.0
    %2336 = vmatprep.subr.mxu0 0.0
    %2337 = vmatpush1.msra.mxu0 0.0
    %2338 = vmatprep.subr.mxu0 0.0
    %2339 = vmatpush1.msra.mxu0 0.0
    %2340 = vmatprep.subr.mxu0 0.0
    %2341 = vmatpush1.msra.mxu0 0.0
    %2342 = vmatprep.subr.mxu0 0.0
    %2343 = vmatpush1.msra.mxu0 0.0
    %2344 = vmatprep.subr.mxu0 0.0
    %2345 = vmatpush1.msra.mxu0 0.0
    %2346 = vmatprep.subr.mxu0 0.0
    %2347 = vmatpush1.msra.mxu0 0.0
    %2348 = vmatprep.subr.mxu0 0.0
    %2349 = vmatpush1.msra.mxu0 0.0
    %2350 = vmatprep.subr.mxu0 0.0
    %2351 = vmatpush1.msra.mxu0 0.0
    %2352 = vmatprep.subr.mxu0 0.0
    %2353 = vmatpush1.msra.mxu0 0.0
    %2354 = vmatprep.subr.mxu0 0.0
    %2355 = vmatpush1.msra.mxu0 0.0
    %2356 = vmatprep.subr.mxu0 0.0
    %2357 = vmatpush1.msra.mxu0 0.0
    %2358 = vmatprep.subr.mxu0 0.0
    %2359 = vmatpush1.msra.mxu0 0.0
    %2360 = vmatprep.subr.mxu0 0.0
    %2361 = vmatpush1.msra.mxu0 0.0
    %2362 = vmatprep.subr.mxu0 0.0
    %2363 = vmatpush1.msra.mxu0 0.0
    %2364 = vmatprep.subr.mxu0 0.0
    %2365 = vmatpush1.msra.mxu0 0.0
    %2366 = vmatprep.subr.mxu0 0.0
    %2367 = vmatpush1.msra.mxu0 0.0
    %2368 = vmatprep.subr.mxu0 0.0
    %2369 = vmatpush1.msra.mxu0 0.0
    %2370 = vmatprep.subr.mxu0 0.0
    %2371 = vmatpush1.msra.mxu0 0.0
    %2372 = vmatprep.subr.mxu0 0.0
    %2373 = vmatpush1.msra.mxu0 0.0
    %2374 = vmatprep.subr.mxu0 0.0
    %2375 = vmatpush1.msra.mxu0 0.0
    %2376 = vmatprep.subr.mxu0 0.0
    %2377 = vmatpush1.msra.mxu0 0.0
    %2378 = vmatprep.mubr.f32.mxu0 0.0
    %2379 = vmatmul.mubr.f32.gmra.mrb[0].mxu0 %v2312
    %v2380 = vpop.f32.mrb[0].mxu0
    %v2381 = vadd.f32 0.0, %v2380
    %v2382 = vpop.f32.mrb[0].mxu0
    %2383 = vdwg.mxu0
    %v2385 = vsel %vm69, %v2304, 0
    %2387 = vmatprep.subr.mxu0 0.0
    %2388 = vmatpush1.msra.mxu0 %v151
    %2389 = vmatprep.subr.mxu0 0.0
    %2390 = vmatpush1.msra.mxu0 0.0
    %2391 = vmatprep.subr.mxu0 0.0
    %2392 = vmatpush1.msra.mxu0 0.0
    %2393 = vmatprep.subr.mxu0 0.0
    %2394 = vmatpush1.msra.mxu0 0.0
    %2395 = vmatprep.subr.mxu0 0.0
    %2396 = vmatpush1.msra.mxu0 0.0
    %2397 = vmatprep.subr.mxu0 0.0
    %2398 = vmatpush1.msra.mxu0 0.0
    %2399 = vmatprep.subr.mxu0 0.0
    %2400 = vmatpush1.msra.mxu0 0.0
    %2401 = vmatprep.subr.mxu0 0.0
    %2402 = vmatpush1.msra.mxu0 0.0
    %2403 = vmatprep.subr.mxu0 0.0
    %2404 = vmatpush1.msra.mxu0 0.0
    %2405 = vmatprep.subr.mxu0 0.0
    %2406 = vmatpush1.msra.mxu0 0.0
    %2407 = vmatprep.subr.mxu0 0.0
    %2408 = vmatpush1.msra.mxu0 0.0
    %2409 = vmatprep.subr.mxu0 0.0
    %2410 = vmatpush1.msra.mxu0 0.0
    %2411 = vmatprep.subr.mxu0 0.0
    %2412 = vmatpush1.msra.mxu0 0.0
    %2413 = vmatprep.subr.mxu0 0.0
    %2414 = vmatpush1.msra.mxu0 0.0
    %2415 = vmatprep.subr.mxu0 0.0
    %2416 = vmatpush1.msra.mxu0 0.0
    %2417 = vmatprep.subr.mxu0 0.0
    %2418 = vmatpush1.msra.mxu0 0.0
    %2419 = vmatprep.subr.mxu0 0.0
    %2420 = vmatpush1.msra.mxu0 0.0
    %2421 = vmatprep.subr.mxu0 0.0
    %2422 = vmatpush1.msra.mxu0 0.0
    %2423 = vmatprep.subr.mxu0 0.0
    %2424 = vmatpush1.msra.mxu0 0.0
    %2425 = vmatprep.subr.mxu0 0.0
    %2426 = vmatpush1.msra.mxu0 0.0
    %2427 = vmatprep.subr.mxu0 0.0
    %2428 = vmatpush1.msra.mxu0 0.0
    %2429 = vmatprep.subr.mxu0 0.0
    %2430 = vmatpush1.msra.mxu0 0.0
    %2431 = vmatprep.subr.mxu0 0.0
    %2432 = vmatpush1.msra.mxu0 0.0
    %2433 = vmatprep.subr.mxu0 0.0
    %2434 = vmatpush1.msra.mxu0 0.0
    %2435 = vmatprep.subr.mxu0 0.0
    %2436 = vmatpush1.msra.mxu0 0.0
    %2437 = vmatprep.subr.mxu0 0.0
    %2438 = vmatpush1.msra.mxu0 0.0
    %2439 = vmatprep.subr.mxu0 0.0
    %2440 = vmatpush1.msra.mxu0 0.0
    %2441 = vmatprep.subr.mxu0 0.0
    %2442 = vmatpush1.msra.mxu0 0.0
    %2443 = vmatprep.subr.mxu0 0.0
    %2444 = vmatpush1.msra.mxu0 0.0
    %2445 = vmatprep.subr.mxu0 0.0
    %2446 = vmatpush1.msra.mxu0 0.0
    %2447 = vmatprep.subr.mxu0 0.0
    %2448 = vmatpush1.msra.mxu0 0.0
    %2449 = vmatprep.subr.mxu0 0.0
    %2450 = vmatpush1.msra.mxu0 0.0
    %2451 = vmatprep.mubr.f32.mxu0 0.0
    %2452 = vmatmul.mubr.f32.gmra.mrb[0].mxu0 %v2385
    %v2453 = vpop.f32.mrb[0].mxu0
    %v2454 = vadd.f32 %v2381, %v2453
    %v2455 = vpop.f32.mrb[0].mxu0
    %2456 = vdwg.mxu0
    %v2458 = vsel %vm69, %v2310, 0
    %2460 = vmatprep.subr.mxu0 0.0
    %2461 = vmatpush1.msra.mxu0 %v75
    %2462 = vmatprep.subr.mxu0 0.0
    %2463 = vmatpush1.msra.mxu0 0.0
    %2464 = vmatprep.subr.mxu0 0.0
    %2465 = vmatpush1.msra.mxu0 0.0
    %2466 = vmatprep.subr.mxu0 0.0
    %2467 = vmatpush1.msra.mxu0 0.0
    %2468 = vmatprep.subr.mxu0 0.0
    %2469 = vmatpush1.msra.mxu0 0.0
    %2470 = vmatprep.subr.mxu0 0.0
    %2471 = vmatpush1.msra.mxu0 0.0
    %2472 = vmatprep.subr.mxu0 0.0
    %2473 = vmatpush1.msra.mxu0 0.0
    %2474 = vmatprep.subr.mxu0 0.0
    %2475 = vmatpush1.msra.mxu0 0.0
    %2476 = vmatprep.subr.mxu0 0.0
    %2477 = vmatpush1.msra.mxu0 0.0
    %2478 = vmatprep.subr.mxu0 0.0
    %2479 = vmatpush1.msra.mxu0 0.0
    %2480 = vmatprep.subr.mxu0 0.0
    %2481 = vmatpush1.msra.mxu0 0.0
    %2482 = vmatprep.subr.mxu0 0.0
    %2483 = vmatpush1.msra.mxu0 0.0
    %2484 = vmatprep.subr.mxu0 0.0
    %2485 = vmatpush1.msra.mxu0 0.0
    %2486 = vmatprep.subr.mxu0 0.0
    %2487 = vmatpush1.msra.mxu0 0.0
    %2488 = vmatprep.subr.mxu0 0.0
    %2489 = vmatpush1.msra.mxu0 0.0
    %2490 = vmatprep.subr.mxu0 0.0
    %2491 = vmatpush1.msra.mxu0 0.0
    %2492 = vmatprep.subr.mxu0 0.0
    %2493 = vmatpush1.msra.mxu0 0.0
    %2494 = vmatprep.subr.mxu0 0.0
    %2495 = vmatpush1.msra.mxu0 0.0
    %2496 = vmatprep.subr.mxu0 0.0
    %2497 = vmatpush1.msra.mxu0 0.0
    %2498 = vmatprep.subr.mxu0 0.0
    %2499 = vmatpush1.msra.mxu0 0.0
    %2500 = vmatprep.subr.mxu0 0.0
    %2501 = vmatpush1.msra.mxu0 0.0
    %2502 = vmatprep.subr.mxu0 0.0
    %2503 = vmatpush1.msra.mxu0 0.0
    %2504 = vmatprep.subr.mxu0 0.0
    %2505 = vmatpush1.msra.mxu0 0.0
    %2506 = vmatprep.subr.mxu0 0.0
    %2507 = vmatpush1.msra.mxu0 0.0
    %2508 = vmatprep.subr.mxu0 0.0
    %2509 = vmatpush1.msra.mxu0 0.0
    %2510 = vmatprep.subr.mxu0 0.0
    %2511 = vmatpush1.msra.mxu0 0.0
    %2512 = vmatprep.subr.mxu0 0.0
    %2513 = vmatpush1.msra.mxu0 0.0
    %2514 = vmatprep.subr.mxu0 0.0
    %2515 = vmatpush1.msra.mxu0 0.0
    %2516 = vmatprep.subr.mxu0 0.0
    %2517 = vmatpush1.msra.mxu0 0.0
    %2518 = vmatprep.subr.mxu0 0.0
    %2519 = vmatpush1.msra.mxu0 0.0
    %2520 = vmatprep.subr.mxu0 0.0
    %2521 = vmatpush1.msra.mxu0 0.0
    %2522 = vmatprep.subr.mxu0 0.0
    %2523 = vmatpush1.msra.mxu0 0.0
    %2524 = vmatprep.mubr.f32.mxu0 0.0
    %2525 = vmatmul.mubr.f32.gmra.mrb[0].mxu0 %v2458
    %v2526 = vpop.f32.mrb[0].mxu0
    %v2527 = vadd.f32 0.0, %v2526
    %v2528 = vpop.f32.mrb[0].mxu0
    %2529 = vdwg.mxu0
    %v2531 = vsel %vm69, %v2308, 0
    %2533 = vmatprep.subr.mxu0 0.0
    %2534 = vmatpush1.msra.mxu0 %v151
    %2535 = vmatprep.subr.mxu0 0.0
    %2536 = vmatpush1.msra.mxu0 0.0
    %2537 = vmatprep.subr.mxu0 0.0
    %2538 = vmatpush1.msra.mxu0 0.0
    %2539 = vmatprep.subr.mxu0 0.0
    %2540 = vmatpush1.msra.mxu0 0.0
    %2541 = vmatprep.subr.mxu0 0.0
    %2542 = vmatpush1.msra.mxu0 0.0
    %2543 = vmatprep.subr.mxu0 0.0
    %2544 = vmatpush1.msra.mxu0 0.0
    %2545 = vmatprep.subr.mxu0 0.0
    %2546 = vmatpush1.msra.mxu0 0.0
    %2547 = vmatprep.subr.mxu0 0.0
    %2548 = vmatpush1.msra.mxu0 0.0
    %2549 = vmatprep.subr.mxu0 0.0
    %2550 = vmatpush1.msra.mxu0 0.0
    %2551 = vmatprep.subr.mxu0 0.0
    %2552 = vmatpush1.msra.mxu0 0.0
    %2553 = vmatprep.subr.mxu0 0.0
    %2554 = vmatpush1.msra.mxu0 0.0
    %2555 = vmatprep.subr.mxu0 0.0
    %2556 = vmatpush1.msra.mxu0 0.0
    %2557 = vmatprep.subr.mxu0 0.0
    %2558 = vmatpush1.msra.mxu0 0.0
    %2559 = vmatprep.subr.mxu0 0.0
    %2560 = vmatpush1.msra.mxu0 0.0
    %2561 = vmatprep.subr.mxu0 0.0
    %2562 = vmatpush1.msra.mxu0 0.0
    %2563 = vmatprep.subr.mxu0 0.0
    %2564 = vmatpush1.msra.mxu0 0.0
    %2565 = vmatprep.subr.mxu0 0.0
    %2566 = vmatpush1.msra.mxu0 0.0
    %2567 = vmatprep.subr.mxu0 0.0
    %2568 = vmatpush1.msra.mxu0 0.0
    %2569 = vmatprep.subr.mxu0 0.0
    %2570 = vmatpush1.msra.mxu0 0.0
    %2571 = vmatprep.subr.mxu0 0.0
    %2572 = vmatpush1.msra.mxu0 0.0
    %2573 = vmatprep.subr.mxu0 0.0
    %2574 = vmatpush1.msra.mxu0 0.0
    %2575 = vmatprep.subr.mxu0 0.0
    %2576 = vmatpush1.msra.mxu0 0.0
    %2577 = vmatprep.subr.mxu0 0.0
    %2578 = vmatpush1.msra.mxu0 0.0
    %2579 = vmatprep.subr.mxu0 0.0
    %2580 = vmatpush1.msra.mxu0 0.0
    %2581 = vmatprep.subr.mxu0 0.0
    %2582 = vmatpush1.msra.mxu0 0.0
    %2583 = vmatprep.subr.mxu0 0.0
    %2584 = vmatpush1.msra.mxu0 0.0
    %2585 = vmatprep.subr.mxu0 0.0
    %2586 = vmatpush1.msra.mxu0 0.0
    %2587 = vmatprep.subr.mxu0 0.0
    %2588 = vmatpush1.msra.mxu0 0.0
    %2589 = vmatprep.subr.mxu0 0.0
    %2590 = vmatpush1.msra.mxu0 0.0
    %2591 = vmatprep.subr.mxu0 0.0
    %2592 = vmatpush1.msra.mxu0 0.0
    %2593 = vmatprep.subr.mxu0 0.0
    %2594 = vmatpush1.msra.mxu0 0.0
    %2595 = vmatprep.subr.mxu0 0.0
    %2596 = vmatpush1.msra.mxu0 0.0
    %2597 = vmatprep.mubr.f32.mxu0 0.0
    %2598 = vmatmul.mubr.f32.gmra.mrb[0].mxu0 %v2531
    %v2599 = vpop.f32.mrb[0].mxu0
    %v2600 = vadd.f32 %v2527, %v2599
    %v2601 = vpop.f32.mrb[0].mxu0
    %2602 = vdwg.mxu0
    %s2603 = scalar_lea.vmem %s2, 28
    %2604 = vst.msk [vmem:[%s2603] sm:$0xf] %vm369, %v2454
    %2606 = vrot.lane.b32.xlu0 %v2600, 8
    %v2607 = vpop.permute.xlu0 %2606
    %2609 = vst.msk [vmem:[%s2603] sm:$0xf] %vm375, %v2607
    // Predicated region
    $region18: #{_haar_sfb2d_level.1} parent=1 // pred_check
      _
    $region19: #{_haar_sfb2d_level.1} parent=1 // pred_check_branch
      %2611 = sbr.rel (0) target = $region21
    $region20: #{_haar_sfb2d_level.1} parent=1 // pred_region
      _
    $region21: #{_haar_sfb2d_level.1} parent=1 // pred_fallthru
      _
    // Predicated region
    $region22: #{_haar_sfb2d_level.1} parent=1 // pred_check
      _
    $region23: #{_haar_sfb2d_level.1} parent=1 // pred_check_branch
      %2613 = sbr.rel (0) target = $region25
    $region24: #{_haar_sfb2d_level.1} parent=1 // pred_region
      _
    $region25: #{_haar_sfb2d_level.1} parent=1 // pred_fallthru
      _
    %2614 = vsyncpa [#allocation3], 1
    %2615 = vsyncpa [#allocation5], 1

</llo_original>
